<compile_context>
chip_gen: v7x
topology: tpu7x:2x2x1
jax: 0.10.0
libtpu: 0.0.40
codegen_flags: <defaults>
</compile_context>

<pallas_src>
import functools
import math

import jax
import jax.numpy as jnp
from jax.experimental import pallas as pl
from jax.experimental.pallas import tpu as pltpu

EPS = 1e-5          # PyTorch nn.LayerNorm default
NEG_INF = -1e30     # mask value for padded keys


def _round_up(x, m):
    return ((x + m - 1) // m) * m


def _vmem_limit_bytes():
    # Per-generation scoped-VMEM budget: half of physical VMEM, capped at 64 MiB
    # (v5e/v6e: 128 MiB phys -> 64 MiB limit; v7x: 64 MiB phys -> 32 MiB limit).
    phys = 0
    try:
        phys = int(getattr(pltpu.get_tpu_info(), "vmem_capacity_bytes", 0))
    except Exception:
        phys = 0
    if phys <= 0:
        return 32 * 1024 * 1024
    return min(phys // 2, 64 * 1024 * 1024)


_VMEM_LIMIT = _vmem_limit_bytes()
_LAYER_CP = pltpu.CompilerParams(
    dimension_semantics=("parallel",),      # batch axis -> megacore sharding
    vmem_limit_bytes=_VMEM_LIMIT,
)


def _layer_norm(x, g, b):
    mu = jnp.mean(x, axis=-1, keepdims=True)
    xc = x - mu
    var = jnp.mean(xc * xc, axis=-1, keepdims=True)
    return xc * jax.lax.rsqrt(var + EPS) * g + b


def _cspec(shape):
    # Constant (grid-invariant) block: weight/bias stays VMEM-resident.
    return pl.BlockSpec(shape, lambda i: (0,) * len(shape))


def _split_heads(x2d, heads, hd):
    # (S, H*hd) -> (H, S, hd) via static per-head lane slices + leading-axis
    # stack (no sublane movement; S stays in sublanes, hd stays in lanes).
    return jnp.stack([x2d[:, h * hd:(h + 1) * hd] for h in range(heads)], axis=0)


# ----------------------------- Pallas kernels -----------------------------

def embed_kernel(patch_ref, w_ref, base_ref, g_ref, b_ref, o_ref):
    # Fused: patch matmul (conv1, stride==kernel, no bias) + CLS/positional add
    # (pre-baked into `base`, row 0 of the padded patches is the zero CLS slot)
    # + ln_pre.  Padded rows are zeros -> LN yields the bias (harmless: padded
    # keys are masked downstream and only the CLS row is read by the head).
    tok = jnp.dot(patch_ref[0].astype(jnp.bfloat16), w_ref[...],
                  preferred_element_type=jnp.float32) + base_ref[...]
    o_ref[0] = _layer_norm(tok, g_ref[...], b_ref[...])


def encoder_layer_kernel(x_ref, ln1_g, ln1_b, wqkv_ref, bqkv_ref, wo_ref, bo_ref,
                         ln2_g, ln2_b, w1_ref, b1_ref, w2_ref, b2_ref,
                         o_ref, ctx_scr, *, heads, seq_real):
    # One full transformer block for one batch element, entirely in VMEM.
    x = x_ref[0]                                  # (S, D) f32 residual
    S, D = x.shape
    hd = D // heads
    scale = 1.0 / math.sqrt(hd)

    # ---- ln_1 + fused QKV projection: one (S,D)@(D,3D) full-K MXU matmul ----
    h = _layer_norm(x, ln1_g[...], ln1_b[...])
    qkv = jnp.dot(h.astype(jnp.bfloat16), wqkv_ref[...],
                  preferred_element_type=jnp.float32) + bqkv_ref[...]   # (S, 3D)

    # ---- multi-head self-attention, all heads batched ----
    # 1/sqrt(hd) folded into the q bf16 cast (O(S*D) instead of O(H*S^2)).
    q = _split_heads((qkv[:, :D] * scale).astype(jnp.bfloat16), heads, hd)
    k = _split_heads(qkv[:, D:2 * D].astype(jnp.bfloat16), heads, hd)
    v = _split_heads(qkv[:, 2 * D:].astype(jnp.bfloat16), heads, hd)

    s = jnp.einsum('hqd,hkd->hqk', q, k,
                   preferred_element_type=jnp.float32)         # (H, S, S)
    key_id = jax.lax.broadcasted_iota(jnp.int32, s.shape, 2)
    s = jnp.where(key_id < seq_real, s, NEG_INF)               # mask padded keys
    s = s - jnp.max(s, axis=-1, keepdims=True)
    # TODO(synk): on v6e/v7x the exp could run in bf16 on the EUP (~2x); kept
    # f32 so the same kernel is correct/fast on v5e as well.
    p = jnp.exp(s)
    inv = pl.reciprocal(jnp.sum(p, axis=-1, keepdims=True), approx=True)  # (H,S,1)
    ctx = jnp.einsum('hqk,hkd->hqd', p.astype(jnp.bfloat16), v,
                     preferred_element_type=jnp.float32) * inv  # normalize post-PV
    # merge heads lane-dense: static lane-range stores into a (S, D) scratch
    for hh in range(heads):
        ctx_scr[:, hh * hd:(hh + 1) * hd] = ctx[hh]

    # ---- output projection (single full-K matmul) + residual ----
    x1 = x + jnp.dot(ctx_scr[...].astype(jnp.bfloat16), wo_ref[...],
                     preferred_element_type=jnp.float32) + bo_ref[...]

    # ---- ln_2 + QuickGELU MLP + residual ----
    h2 = _layer_norm(x1, ln2_g[...], ln2_b[...])
    # TODO(synk): at real ViT-B scale on v7x (64 MiB VMEM) give the big weight
    # specs pipeline_mode=pl.Buffered(1) (or K-tile the MLP hidden dim with an
    # f32 accumulator) so the resident weights are not double-buffered.
    f = jnp.dot(h2.astype(jnp.bfloat16), w1_ref[...],
                preferred_element_type=jnp.float32) + b1_ref[...]
    f = f * jax.nn.sigmoid(1.702 * f)             # QuickGELU in f32
    m = jnp.dot(f.astype(jnp.bfloat16), w2_ref[...],
                preferred_element_type=jnp.float32) + b2_ref[...]
    o_ref[0] = x1 + m


def head_kernel(x_ref, g_ref, b_ref, proj_ref, o_ref):
    # ln_post on CLS tokens, then output projection (no bias).
    h = _layer_norm(x_ref[...], g_ref[...], b_ref[...])
    o_ref[...] = jnp.dot(h.astype(jnp.bfloat16), proj_ref[...],
                         preferred_element_type=jnp.float32)


# ----------------------------- wrappers -----------------------------

def pallas_embed(patches, w_bf16, base, g, b, D):
    B, S, CPP = patches.shape
    return pl.pallas_call(
        embed_kernel,
        grid=(B,),
        in_specs=[pl.BlockSpec((1, S, CPP), lambda i: (i, 0, 0)),
                  _cspec(w_bf16.shape), _cspec(base.shape),
                  _cspec(g.shape), _cspec(b.shape)],
        out_specs=pl.BlockSpec((1, S, D), lambda i: (i, 0, 0)),
        out_shape=jax.ShapeDtypeStruct((B, S, D), jnp.float32),
        compiler_params=_LAYER_CP,
    )(patches, w_bf16, base, g, b)


def pallas_encoder_layer(x, lp, heads, seq_real):
    B, S, D = x.shape
    kern = functools.partial(encoder_layer_kernel, heads=heads, seq_real=seq_real)
    row = pl.BlockSpec((1, S, D), lambda i: (i, 0, 0))
    args = (x, lp['ln1_g'], lp['ln1_b'], lp['wqkv'], lp['bqkv'], lp['wo'],
            lp['bo'], lp['ln2_g'], lp['ln2_b'], lp['w1'], lp['b1'],
            lp['w2'], lp['b2'])
    in_specs = [row] + [_cspec(a.shape) for a in args[1:]]
    # NOTE: the alias below is safe only because the x input and the output use
    # the *same* (1, S, D) row BlockSpec (each grid step reads/writes one block).
    # TODO(synk): for v7x with B < 2 (one step per TensorCore) add a q-row grid
    # axis to restore megacore/pipelining slack; unnecessary at B >= 2.
    return pl.pallas_call(
        kern,
        grid=(B,),
        in_specs=in_specs,
        out_specs=row,
        out_shape=jax.ShapeDtypeStruct((B, S, D), jnp.float32),
        scratch_shapes=[pltpu.VMEM((S, D), jnp.float32)],
        input_output_aliases={0: 0},            # residual stream updated in place
        compiler_params=_LAYER_CP,
    )(*args)


def pallas_head(x, g, b, proj):
    B, _ = x.shape
    O = proj.shape[1]
    return pl.pallas_call(
        head_kernel,
        grid=(1,),
        in_specs=[_cspec(x.shape), _cspec(g.shape),
                  _cspec(b.shape), _cspec(proj.shape)],
        out_specs=_cspec((B, O)),
        out_shape=jax.ShapeDtypeStruct((B, O), jnp.float32),
    )(x, g, b, proj)


# ----------------------------- model -----------------------------

class Config:
    image_size = 32   # small stand-in for 224
    patch_size = 8    # small stand-in for 32
    channels = 3
    width = 128       # small stand-in for 768 (lane-dense: multiple of 128)
    heads = 4         # small stand-in for 12
    layers = 2        # small stand-in for 12
    mlp = 512         # 4 * width
    out_dim = 128     # small stand-in for 512 (lane-dense)


def init_params(key, cfg):
    G = cfg.image_size // cfg.patch_size
    seq = G * G + 1
    D = cfg.width
    keys = iter(jax.random.split(key, 64))

    def nrm(shape, scale=0.02, dtype=jnp.float32):
        return (scale * jax.random.normal(next(keys), shape)).astype(dtype)

    conv_w = nrm((D, cfg.channels, cfg.patch_size, cfg.patch_size))  # (D,C,P,P)
    params = {
        # flattened / transposed conv weight kept in bf16 for the MXU
        'conv_w_flat': conv_w.reshape(D, -1).T.astype(jnp.bfloat16),  # (C*P*P, D)
        'cls': nrm((D,)),
        'pos': nrm((seq, D)),
        'ln_pre_g': jnp.ones((1, D), jnp.float32),
        'ln_pre_b': jnp.zeros((1, D), jnp.float32),
        'ln_post_g': jnp.ones((1, D), jnp.float32),
        'ln_post_b': jnp.zeros((1, D), jnp.float32),
        'proj': nrm((D, cfg.out_dim), dtype=jnp.bfloat16),
        'layers': [],
    }
    for _ in range(cfg.layers):
        params['layers'].append({
            'ln1_g': jnp.ones((1, D), jnp.float32),
            'ln1_b': jnp.zeros((1, D), jnp.float32),
            # Fused QKV projection (x @ Wqkv).  NOTE: PyTorch MHA stores
            # in_proj_weight as (3D, D) applied as x @ W.T -> transpose when
            # loading real checkpoints.
            'wqkv': nrm((D, 3 * D), dtype=jnp.bfloat16),
            'bqkv': jnp.zeros((1, 3 * D), jnp.float32),
            'wo': nrm((D, D), dtype=jnp.bfloat16),
            'bo': jnp.zeros((1, D), jnp.float32),
            'ln2_g': jnp.ones((1, D), jnp.float32),
            'ln2_b': jnp.zeros((1, D), jnp.float32),
            'w1': nrm((D, cfg.mlp), dtype=jnp.bfloat16),
            'b1': jnp.zeros((1, cfg.mlp), jnp.float32),
            'w2': nrm((cfg.mlp, D), dtype=jnp.bfloat16),
            'b2': jnp.zeros((1, D), jnp.float32),
        })
    return params


def clip_visual_forward(x, params, cfg):
    B, C, H, W = x.shape
    P = cfg.patch_size
    G = H // P
    D = cfg.width
    S_real = G * G + 1
    # Padded sequence derived from the real length (16-row sublane granule,
    # safe for f32 and bf16 in-kernel views); padded keys are masked in-kernel.
    S = _round_up(S_real, 16)

    # conv1 (stride == kernel, no bias) as a patch matmul: extract patches in
    # (gy, gx) order to match PyTorch reshape(B, width, -1).permute(0, 2, 1).
    patches = (x.reshape(B, C, G, P, G, P)
                 .transpose(0, 2, 4, 1, 3, 5)
                 .reshape(B, G * G, C * P * P))
    # row 0 = CLS slot (zeros), rows > G*G = sequence padding (zeros)
    patches = jnp.pad(patches, ((0, 0), (1, S - 1 - G * G), (0, 0)))

    # class token + positional embedding baked into one additive base (S, D)
    base = jnp.zeros((S, D), jnp.float32)
    base = base.at[0].set(params['cls'] + params['pos'][0])
    base = base.at[1:S_real].set(params['pos'][1:])

    # fused patch-embed + cls/pos + pad + ln_pre -> f32 residual stream (B,S,D)
    xr = pallas_embed(patches, params['conv_w_flat'], base,
                      params['ln_pre_g'], params['ln_pre_b'], D)

    # transformer: one fused Pallas kernel per layer, gridded over batch,
    # residual aliased in place (only HBM traffic per layer = the residual).
    for lp in params['layers']:
        xr = pallas_encoder_layer(xr, lp, cfg.heads, S_real)

    # ln_post on the CLS token + output projection (no bias)
    cls_tok = xr[:, 0, :]
    return pallas_head(cls_tok, params['ln_post_g'], params['ln_post_b'],
                       params['proj'])


if __name__ == "__main__":
    cfg = Config()
    key = jax.random.PRNGKey(0)
    kp, kx = jax.random.split(key)
    params = init_params(kp, cfg)
    x = jax.random.normal(kx, (2, cfg.channels, cfg.image_size, cfg.image_size),
                          dtype=jnp.float32)
    fwd = jax.jit(functools.partial(clip_visual_forward, params=params, cfg=cfg))
    out = fwd(x)
    jax.block_until_ready(out)
    assert out.shape == (2, cfg.out_dim) and out.dtype == jnp.float32
    print("KERNEL_OK")
</pallas_src>

<mosaic_0001>
module attributes {stable_mosaic.version = 11 : i64} {
  func.func @embed_kernel(%arg0: i32, %arg1: memref<1x32x192xf32, #tpu.memory_space<vmem>>, %arg2: memref<192x128xbf16, #tpu.memory_space<vmem>>, %arg3: memref<32x128xf32, #tpu.memory_space<vmem>>, %arg4: memref<1x128xf32, #tpu.memory_space<vmem>>, %arg5: memref<1x128xf32, #tpu.memory_space<vmem>>, %arg6: memref<1x32x128xf32, #tpu.memory_space<vmem>>) attributes {dimension_semantics = [#tpu.dimension_semantics<parallel>], iteration_bounds = array<i64: 2>, scalar_prefetch = 0 : i64, scratch_operands = 0 : i64, tpu.core_type = #tpu.core_type<tc>, window_params = [{transform_indices = @transform_0, window_bounds = array<i64: 1, 32, 192>}, {pipeline_mode = #tpu.pipeline_mode<synchronous>, transform_indices = @transform_1, window_bounds = array<i64: 192, 128>}, {pipeline_mode = #tpu.pipeline_mode<synchronous>, transform_indices = @transform_2, window_bounds = array<i64: 32, 128>}, {pipeline_mode = #tpu.pipeline_mode<synchronous>, transform_indices = @transform_3, window_bounds = array<i64: 1, 128>}, {pipeline_mode = #tpu.pipeline_mode<synchronous>, transform_indices = @transform_4, window_bounds = array<i64: 1, 128>}, {transform_indices = @transform_5, window_bounds = array<i64: 1, 32, 128>}]} {
    %c0 = arith.constant 0 : index
    %c0_0 = arith.constant 0 : index
    %c0_1 = arith.constant 0 : index
    %0 = vector.load %arg1[%c0, %c0_0, %c0_1] : memref<1x32x192xf32, #tpu.memory_space<vmem>>, vector<1x32x192xf32>
    %1 = vector.shape_cast %0 : vector<1x32x192xf32> to vector<32x192xf32>
    %2 = arith.truncf %1 : vector<32x192xf32> to vector<32x192xbf16>
    %c0_2 = arith.constant 0 : index
    %c0_3 = arith.constant 0 : index
    %3 = vector.load %arg2[%c0_2, %c0_3] : memref<192x128xbf16, #tpu.memory_space<vmem>>, vector<192x128xbf16>
    %cst = arith.constant dense<0.000000e+00> : vector<32x128xf32>
    %4 = tpu.matmul %2, %3, %cst {dimension_numbers = #tpu.dot_dimension_numbers<[1], [0], [0], [1], [0, 0, 1, 1], [], []>} : vector<32x192xbf16>, vector<192x128xbf16>, vector<32x128xf32> -> vector<32x128xf32>
    %c0_4 = arith.constant 0 : index
    %c0_5 = arith.constant 0 : index
    %5 = vector.load %arg3[%c0_4, %c0_5] : memref<32x128xf32, #tpu.memory_space<vmem>>, vector<32x128xf32>
    %6 = arith.addf %4, %5 : vector<32x128xf32>
    %c0_6 = arith.constant 0 : index
    %c0_7 = arith.constant 0 : index
    %7 = vector.load %arg4[%c0_6, %c0_7] : memref<1x128xf32, #tpu.memory_space<vmem>>, vector<1x128xf32>
    %c0_8 = arith.constant 0 : index
    %c0_9 = arith.constant 0 : index
    %8 = vector.load %arg5[%c0_8, %c0_9] : memref<1x128xf32, #tpu.memory_space<vmem>>, vector<1x128xf32>
    %cst_10 = arith.constant dense<0.000000e+00> : vector<32xf32>
    %9 = vector.multi_reduction <add>, %6, %cst_10 [1] : vector<32x128xf32> to vector<32xf32>
    %10 = vector.shape_cast %9 : vector<32xf32> to vector<32x1xf32>
    %cst_11 = arith.constant 1.280000e+02 : f32
    %11 = vector.broadcast %cst_11 : f32 to vector<32x1xf32>
    %12 = arith.divf %10, %11 : vector<32x1xf32>
    %13 = vector.broadcast %12 : vector<32x1xf32> to vector<32x128xf32>
    %14 = arith.subf %6, %13 : vector<32x128xf32>
    %15 = arith.mulf %14, %14 : vector<32x128xf32>
    %cst_12 = arith.constant dense<0.000000e+00> : vector<32xf32>
    %16 = vector.multi_reduction <add>, %15, %cst_12 [1] : vector<32x128xf32> to vector<32xf32>
    %17 = vector.shape_cast %16 : vector<32xf32> to vector<32x1xf32>
    %cst_13 = arith.constant 1.280000e+02 : f32
    %18 = vector.broadcast %cst_13 : f32 to vector<32x1xf32>
    %19 = arith.divf %17, %18 : vector<32x1xf32>
    %cst_14 = arith.constant 9.99999974E-6 : f32
    %20 = vector.broadcast %cst_14 : f32 to vector<32x1xf32>
    %21 = arith.addf %19, %20 : vector<32x1xf32>
    %22 = math.rsqrt %21 : vector<32x1xf32>
    %23 = vector.broadcast %22 : vector<32x1xf32> to vector<32x128xf32>
    %24 = arith.mulf %14, %23 : vector<32x128xf32>
    %25 = vector.broadcast %7 : vector<1x128xf32> to vector<32x128xf32>
    %26 = arith.mulf %24, %25 : vector<32x128xf32>
    %27 = vector.broadcast %8 : vector<1x128xf32> to vector<32x128xf32>
    %28 = arith.addf %26, %27 : vector<32x128xf32>
    %c0_15 = arith.constant 0 : index
    %c0_16 = arith.constant 0 : index
    %c0_17 = arith.constant 0 : index
    %29 = vector.load %arg6[%c0_15, %c0_16, %c0_17] : memref<1x32x128xf32, #tpu.memory_space<vmem>>, vector<1x32x128xf32>
    %30 = vector.shape_cast %29 : vector<1x32x128xf32> to vector<32x128xf32>
    %31 = vector.shape_cast %28 : vector<32x128xf32> to vector<1x32x128xf32>
    tpu.vector_store %arg6[%c0_15, %c0_16, %c0_17], %31 {strides = array<i32>} : memref<1x32x128xf32, #tpu.memory_space<vmem>>, vector<1x32x128xf32>,
    return
  }
  func.func @transform_0(%arg0: i32) -> (i32, i32, i32) {
    %c0_i32 = arith.constant 0 : i32
    %c0_i32_0 = arith.constant 0 : i32
    %c0_i32_1 = arith.constant 0 : i32
    return %arg0, %c0_i32, %c0_i32_0 : i32, i32, i32
  }
  func.func @transform_1(%arg0: i32) -> (i32, i32) {
    %c0_i32 = arith.constant 0 : i32
    %c0_i32_0 = arith.constant 0 : i32
    %c0_i32_1 = arith.constant 0 : i32
    return %c0_i32, %c0_i32_0 : i32, i32
  }
  func.func @transform_2(%arg0: i32) -> (i32, i32) {
    %c0_i32 = arith.constant 0 : i32
    %c0_i32_0 = arith.constant 0 : i32
    %c0_i32_1 = arith.constant 0 : i32
    return %c0_i32, %c0_i32_0 : i32, i32
  }
  func.func @transform_3(%arg0: i32) -> (i32, i32) {
    %c0_i32 = arith.constant 0 : i32
    %c0_i32_0 = arith.constant 0 : i32
    %c0_i32_1 = arith.constant 0 : i32
    return %c0_i32, %c0_i32_0 : i32, i32
  }
  func.func @transform_4(%arg0: i32) -> (i32, i32) {
    %c0_i32 = arith.constant 0 : i32
    %c0_i32_0 = arith.constant 0 : i32
    %c0_i32_1 = arith.constant 0 : i32
    return %c0_i32, %c0_i32_0 : i32, i32
  }
  func.func @transform_5(%arg0: i32) -> (i32, i32, i32) {
    %c0_i32 = arith.constant 0 : i32
    %c0_i32_0 = arith.constant 0 : i32
    %c0_i32_1 = arith.constant 0 : i32
    return %arg0, %c0_i32, %c0_i32_0 : i32, i32, i32
  }
}

module attributes {stable_mosaic.version = 11 : i64} {
  func.func @encoder_layer_kernel(%arg0: i32, %arg1: memref<1x32x128xf32, #tpu.memory_space<vmem>>, %arg2: memref<1x128xf32, #tpu.memory_space<vmem>>, %arg3: memref<1x128xf32, #tpu.memory_space<vmem>>, %arg4: memref<128x384xbf16, #tpu.memory_space<vmem>>, %arg5: memref<1x384xf32, #tpu.memory_space<vmem>>, %arg6: memref<128x128xbf16, #tpu.memory_space<vmem>>, %arg7: memref<1x128xf32, #tpu.memory_space<vmem>>, %arg8: memref<1x128xf32, #tpu.memory_space<vmem>>, %arg9: memref<1x128xf32, #tpu.memory_space<vmem>>, %arg10: memref<128x512xbf16, #tpu.memory_space<vmem>>, %arg11: memref<1x512xf32, #tpu.memory_space<vmem>>, %arg12: memref<512x128xbf16, #tpu.memory_space<vmem>>, %arg13: memref<1x128xf32, #tpu.memory_space<vmem>>, %arg14: memref<1x32x128xf32, #tpu.memory_space<vmem>>, %arg15: memref<32x128xf32, #tpu.memory_space<vmem>>) attributes {dimension_semantics = [#tpu.dimension_semantics<parallel>], iteration_bounds = array<i64: 2>, scalar_prefetch = 0 : i64, scratch_operands = 1 : i64, tpu.core_type = #tpu.core_type<tc>, window_params = [{transform_indices = @transform_0, window_bounds = array<i64: 1, 32, 128>}, {pipeline_mode = #tpu.pipeline_mode<synchronous>, transform_indices = @transform_1, window_bounds = array<i64: 1, 128>}, {pipeline_mode = #tpu.pipeline_mode<synchronous>, transform_indices = @transform_2, window_bounds = array<i64: 1, 128>}, {pipeline_mode = #tpu.pipeline_mode<synchronous>, transform_indices = @transform_3, window_bounds = array<i64: 128, 384>}, {pipeline_mode = #tpu.pipeline_mode<synchronous>, transform_indices = @transform_4, window_bounds = array<i64: 1, 384>}, {pipeline_mode = #tpu.pipeline_mode<synchronous>, transform_indices = @transform_5, window_bounds = array<i64: 128, 128>}, {pipeline_mode = #tpu.pipeline_mode<synchronous>, transform_indices = @transform_6, window_bounds = array<i64: 1, 128>}, {pipeline_mode = #tpu.pipeline_mode<synchronous>, transform_indices = @transform_7, window_bounds = array<i64: 1, 128>}, {pipeline_mode = #tpu.pipeline_mode<synchronous>, transform_indices = @transform_8, window_bounds = array<i64: 1, 128>}, {pipeline_mode = #tpu.pipeline_mode<synchronous>, transform_indices = @transform_9, window_bounds = array<i64: 128, 512>}, {pipeline_mode = #tpu.pipeline_mode<synchronous>, transform_indices = @transform_10, window_bounds = array<i64: 1, 512>}, {pipeline_mode = #tpu.pipeline_mode<synchronous>, transform_indices = @transform_11, window_bounds = array<i64: 512, 128>}, {pipeline_mode = #tpu.pipeline_mode<synchronous>, transform_indices = @transform_12, window_bounds = array<i64: 1, 128>}, {transform_indices = @transform_13, window_bounds = array<i64: 1, 32, 128>}]} {
    %c0 = arith.constant 0 : index
    %c0_0 = arith.constant 0 : index
    %c0_1 = arith.constant 0 : index
    %0 = vector.load %arg1[%c0, %c0_0, %c0_1] : memref<1x32x128xf32, #tpu.memory_space<vmem>>, vector<1x32x128xf32>
    %1 = vector.shape_cast %0 : vector<1x32x128xf32> to vector<32x128xf32>
    %c0_2 = arith.constant 0 : index
    %c0_3 = arith.constant 0 : index
    %2 = vector.load %arg2[%c0_2, %c0_3] : memref<1x128xf32, #tpu.memory_space<vmem>>, vector<1x128xf32>
    %c0_4 = arith.constant 0 : index
    %c0_5 = arith.constant 0 : index
    %3 = vector.load %arg3[%c0_4, %c0_5] : memref<1x128xf32, #tpu.memory_space<vmem>>, vector<1x128xf32>
    %cst = arith.constant dense<0.000000e+00> : vector<32xf32>
    %4 = vector.multi_reduction <add>, %1, %cst [1] : vector<32x128xf32> to vector<32xf32>
    %5 = vector.shape_cast %4 : vector<32xf32> to vector<32x1xf32>
    %cst_6 = arith.constant 1.280000e+02 : f32
    %6 = vector.broadcast %cst_6 : f32 to vector<32x1xf32>
    %7 = arith.divf %5, %6 : vector<32x1xf32>
    %8 = vector.broadcast %7 : vector<32x1xf32> to vector<32x128xf32>
    %9 = arith.subf %1, %8 : vector<32x128xf32>
    %10 = arith.mulf %9, %9 : vector<32x128xf32>
    %cst_7 = arith.constant dense<0.000000e+00> : vector<32xf32>
    %11 = vector.multi_reduction <add>, %10, %cst_7 [1] : vector<32x128xf32> to vector<32xf32>
    %12 = vector.shape_cast %11 : vector<32xf32> to vector<32x1xf32>
    %cst_8 = arith.constant 1.280000e+02 : f32
    %13 = vector.broadcast %cst_8 : f32 to vector<32x1xf32>
    %14 = arith.divf %12, %13 : vector<32x1xf32>
    %cst_9 = arith.constant 9.99999974E-6 : f32
    %15 = vector.broadcast %cst_9 : f32 to vector<32x1xf32>
    %16 = arith.addf %14, %15 : vector<32x1xf32>
    %17 = math.rsqrt %16 : vector<32x1xf32>
    %18 = vector.broadcast %17 : vector<32x1xf32> to vector<32x128xf32>
    %19 = arith.mulf %9, %18 : vector<32x128xf32>
    %20 = vector.broadcast %2 : vector<1x128xf32> to vector<32x128xf32>
    %21 = arith.mulf %19, %20 : vector<32x128xf32>
    %22 = vector.broadcast %3 : vector<1x128xf32> to vector<32x128xf32>
    %23 = arith.addf %21, %22 : vector<32x128xf32>
    %24 = arith.truncf %23 : vector<32x128xf32> to vector<32x128xbf16>
    %c0_10 = arith.constant 0 : index
    %c0_11 = arith.constant 0 : index
    %25 = vector.load %arg4[%c0_10, %c0_11] : memref<128x384xbf16, #tpu.memory_space<vmem>>, vector<128x384xbf16>
    %cst_12 = arith.constant dense<0.000000e+00> : vector<32x384xf32>
    %26 = tpu.matmul %24, %25, %cst_12 {dimension_numbers = #tpu.dot_dimension_numbers<[1], [0], [0], [1], [0, 0, 1, 1], [], []>} : vector<32x128xbf16>, vector<128x384xbf16>, vector<32x384xf32> -> vector<32x384xf32>
    %c0_13 = arith.constant 0 : index
    %c0_14 = arith.constant 0 : index
    %27 = vector.load %arg5[%c0_13, %c0_14] : memref<1x384xf32, #tpu.memory_space<vmem>>, vector<1x384xf32>
    %28 = vector.broadcast %27 : vector<1x384xf32> to vector<32x384xf32>
    %29 = arith.addf %26, %28 : vector<32x384xf32>
    %30 = vector.extract_strided_slice %29 {offsets = [0, 0], sizes = [32, 128], strides = [1, 1]} : vector<32x384xf32> to vector<32x128xf32>
    %cst_15 = arith.constant 0.176776692 : f32
    %31 = vector.broadcast %cst_15 : f32 to vector<32x128xf32>
    %32 = arith.mulf %30, %31 : vector<32x128xf32>
    %33 = arith.truncf %32 : vector<32x128xf32> to vector<32x128xbf16>
    %34 = vector.extract_strided_slice %33 {offsets = [0, 0], sizes = [32, 32], strides = [1, 1]} : vector<32x128xbf16> to vector<32x32xbf16>
    %35 = vector.extract_strided_slice %33 {offsets = [0, 32], sizes = [32, 32], strides = [1, 1]} : vector<32x128xbf16> to vector<32x32xbf16>
    %36 = vector.extract_strided_slice %33 {offsets = [0, 64], sizes = [32, 32], strides = [1, 1]} : vector<32x128xbf16> to vector<32x32xbf16>
    %37 = vector.extract_strided_slice %33 {offsets = [0, 96], sizes = [32, 32], strides = [1, 1]} : vector<32x128xbf16> to vector<32x32xbf16>
    %38 = vector.shape_cast %34 : vector<32x32xbf16> to vector<1x32x32xbf16>
    %39 = vector.shape_cast %35 : vector<32x32xbf16> to vector<1x32x32xbf16>
    %40 = vector.shape_cast %36 : vector<32x32xbf16> to vector<1x32x32xbf16>
    %41 = vector.shape_cast %37 : vector<32x32xbf16> to vector<1x32x32xbf16>
    %42 = tpu.concatenate %38, %39, %40, %41 in 0 : vector<1x32x32xbf16>, vector<1x32x32xbf16>, vector<1x32x32xbf16>, vector<1x32x32xbf16> -> vector<4x32x32xbf16>
    %43 = vector.extract_strided_slice %29 {offsets = [0, 128], sizes = [32, 128], strides = [1, 1]} : vector<32x384xf32> to vector<32x128xf32>
    %44 = arith.truncf %43 : vector<32x128xf32> to vector<32x128xbf16>
    %45 = vector.extract_strided_slice %44 {offsets = [0, 0], sizes = [32, 32], strides = [1, 1]} : vector<32x128xbf16> to vector<32x32xbf16>
    %46 = vector.extract_strided_slice %44 {offsets = [0, 32], sizes = [32, 32], strides = [1, 1]} : vector<32x128xbf16> to vector<32x32xbf16>
    %47 = vector.extract_strided_slice %44 {offsets = [0, 64], sizes = [32, 32], strides = [1, 1]} : vector<32x128xbf16> to vector<32x32xbf16>
    %48 = vector.extract_strided_slice %44 {offsets = [0, 96], sizes = [32, 32], strides = [1, 1]} : vector<32x128xbf16> to vector<32x32xbf16>
    %49 = vector.shape_cast %45 : vector<32x32xbf16> to vector<1x32x32xbf16>
    %50 = vector.shape_cast %46 : vector<32x32xbf16> to vector<1x32x32xbf16>
    %51 = vector.shape_cast %47 : vector<32x32xbf16> to vector<1x32x32xbf16>
    %52 = vector.shape_cast %48 : vector<32x32xbf16> to vector<1x32x32xbf16>
    %53 = tpu.concatenate %49, %50, %51, %52 in 0 : vector<1x32x32xbf16>, vector<1x32x32xbf16>, vector<1x32x32xbf16>, vector<1x32x32xbf16> -> vector<4x32x32xbf16>
    %54 = vector.extract_strided_slice %29 {offsets = [0, 256], sizes = [32, 128], strides = [1, 1]} : vector<32x384xf32> to vector<32x128xf32>
    %55 = arith.truncf %54 : vector<32x128xf32> to vector<32x128xbf16>
    %56 = vector.extract_strided_slice %55 {offsets = [0, 0], sizes = [32, 32], strides = [1, 1]} : vector<32x128xbf16> to vector<32x32xbf16>
    %57 = vector.extract_strided_slice %55 {offsets = [0, 32], sizes = [32, 32], strides = [1, 1]} : vector<32x128xbf16> to vector<32x32xbf16>
    %58 = vector.extract_strided_slice %55 {offsets = [0, 64], sizes = [32, 32], strides = [1, 1]} : vector<32x128xbf16> to vector<32x32xbf16>
    %59 = vector.extract_strided_slice %55 {offsets = [0, 96], sizes = [32, 32], strides = [1, 1]} : vector<32x128xbf16> to vector<32x32xbf16>
    %60 = vector.shape_cast %56 : vector<32x32xbf16> to vector<1x32x32xbf16>
    %61 = vector.shape_cast %57 : vector<32x32xbf16> to vector<1x32x32xbf16>
    %62 = vector.shape_cast %58 : vector<32x32xbf16> to vector<1x32x32xbf16>
    %63 = vector.shape_cast %59 : vector<32x32xbf16> to vector<1x32x32xbf16>
    %64 = tpu.concatenate %60, %61, %62, %63 in 0 : vector<1x32x32xbf16>, vector<1x32x32xbf16>, vector<1x32x32xbf16>, vector<1x32x32xbf16> -> vector<4x32x32xbf16>
    "tpu.trace_start"() <{level = 10 : i32, message = "hqd,hkd->hqk"}> : () -> ()
    %cst_16 = arith.constant dense<0.000000e+00> : vector<4x32x32xf32>
    %65 = tpu.matmul %42, %53, %cst_16 {dimension_numbers = #tpu.dot_dimension_numbers<[2], [2], [1], [1], [0, 0, 0, 1, 1, 1], [0], [0]>} : vector<4x32x32xbf16>, vector<4x32x32xbf16>, vector<4x32x32xf32> -> vector<4x32x32xf32>
    "tpu.trace_stop"() : () -> ()
    %66 = tpu.iota {dimensions = array<i32: 2>} : vector<4x32x32xi32>
    %c17_i32 = arith.constant 17 : i32
    %67 = vector.broadcast %c17_i32 : i32 to vector<4x32x32xi32>
    %68 = arith.cmpi slt, %66, %67 : vector<4x32x32xi32>
    %cst_17 = arith.constant -1.000000e+30 : f32
    %69 = vector.broadcast %cst_17 : f32 to vector<4x32x32xf32>
    %70 = arith.select %68, %65, %69 : vector<4x32x32xi1>, vector<4x32x32xf32>
    %cst_18 = arith.constant dense<0xFF800000> : vector<4x32xf32>
    %71 = vector.multi_reduction <maximumf>, %70, %cst_18 [2] : vector<4x32x32xf32> to vector<4x32xf32>
    %72 = vector.shape_cast %71 : vector<4x32xf32> to vector<4x32x1xf32>
    %73 = vector.broadcast %72 : vector<4x32x1xf32> to vector<4x32x32xf32>
    %74 = arith.subf %70, %73 : vector<4x32x32xf32>
    %75 = math.exp %74 : vector<4x32x32xf32>
    %cst_19 = arith.constant dense<0.000000e+00> : vector<4x32xf32>
    %76 = vector.multi_reduction <add>, %75, %cst_19 [2] : vector<4x32x32xf32> to vector<4x32xf32>
    %77 = vector.shape_cast %76 : vector<4x32xf32> to vector<4x32x1xf32>
    %78 = tpu.reciprocal %77 {approx = true} : vector<4x32x1xf32> -> vector<4x32x1xf32>
    %79 = arith.truncf %75 : vector<4x32x32xf32> to vector<4x32x32xbf16>
    "tpu.trace_start"() <{level = 10 : i32, message = "hqk,hkd->hqd"}> : () -> ()
    %cst_20 = arith.constant dense<0.000000e+00> : vector<4x32x32xf32>
    %80 = tpu.matmul %79, %64, %cst_20 {dimension_numbers = #tpu.dot_dimension_numbers<[2], [1], [1], [2], [0, 0, 0, 1, 1, 2], [0], [0]>} : vector<4x32x32xbf16>, vector<4x32x32xbf16>, vector<4x32x32xf32> -> vector<4x32x32xf32>
    "tpu.trace_stop"() : () -> ()
    %81 = vector.broadcast %78 : vector<4x32x1xf32> to vector<4x32x32xf32>
    %82 = arith.mulf %80, %81 : vector<4x32x32xf32>
    %83 = vector.extract_strided_slice %82 {offsets = [0, 0, 0], sizes = [1, 32, 32], strides = [1, 1, 1]} : vector<4x32x32xf32> to vector<1x32x32xf32>
    %84 = vector.shape_cast %83 : vector<1x32x32xf32> to vector<32x32xf32>
    %c0_21 = arith.constant 0 : index
    %c0_22 = arith.constant 0 : index
    %85 = vector.load %arg15[%c0_21, %c0_22] : memref<32x128xf32, #tpu.memory_space<vmem>>, vector<32x32xf32>
    tpu.vector_store %arg15[%c0_21, %c0_22], %84 {strides = array<i32>} : memref<32x128xf32, #tpu.memory_space<vmem>>, vector<32x32xf32>,
    %86 = vector.extract_strided_slice %82 {offsets = [1, 0, 0], sizes = [1, 32, 32], strides = [1, 1, 1]} : vector<4x32x32xf32> to vector<1x32x32xf32>
    %87 = vector.shape_cast %86 : vector<1x32x32xf32> to vector<32x32xf32>
    %c0_23 = arith.constant 0 : index
    %c32 = arith.constant 32 : index
    %88 = vector.load %arg15[%c0_23, %c32] : memref<32x128xf32, #tpu.memory_space<vmem>>, vector<32x32xf32>
    tpu.vector_store %arg15[%c0_23, %c32], %87 {strides = array<i32>} : memref<32x128xf32, #tpu.memory_space<vmem>>, vector<32x32xf32>,
    %89 = vector.extract_strided_slice %82 {offsets = [2, 0, 0], sizes = [1, 32, 32], strides = [1, 1, 1]} : vector<4x32x32xf32> to vector<1x32x32xf32>
    %90 = vector.shape_cast %89 : vector<1x32x32xf32> to vector<32x32xf32>
    %c0_24 = arith.constant 0 : index
    %c64 = arith.constant 64 : index
    %91 = vector.load %arg15[%c0_24, %c64] : memref<32x128xf32, #tpu.memory_space<vmem>>, vector<32x32xf32>
    tpu.vector_store %arg15[%c0_24, %c64], %90 {strides = array<i32>} : memref<32x128xf32, #tpu.memory_space<vmem>>, vector<32x32xf32>,
    %92 = vector.extract_strided_slice %82 {offsets = [3, 0, 0], sizes = [1, 32, 32], strides = [1, 1, 1]} : vector<4x32x32xf32> to vector<1x32x32xf32>
    %93 = vector.shape_cast %92 : vector<1x32x32xf32> to vector<32x32xf32>
    %c0_25 = arith.constant 0 : index
    %c96 = arith.constant 96 : index
    %94 = vector.load %arg15[%c0_25, %c96] : memref<32x128xf32, #tpu.memory_space<vmem>>, vector<32x32xf32>
    tpu.vector_store %arg15[%c0_25, %c96], %93 {strides = array<i32>} : memref<32x128xf32, #tpu.memory_space<vmem>>, vector<32x32xf32>,
    %c0_26 = arith.constant 0 : index
    %c0_27 = arith.constant 0 : index
    %95 = vector.load %arg15[%c0_26, %c0_27] : memref<32x128xf32, #tpu.memory_space<vmem>>, vector<32x128xf32>
    %96 = arith.truncf %95 : vector<32x128xf32> to vector<32x128xbf16>
    %c0_28 = arith.constant 0 : index
    %c0_29 = arith.constant 0 : index
    %97 = vector.load %arg6[%c0_28, %c0_29] : memref<128x128xbf16, #tpu.memory_space<vmem>>, vector<128x128xbf16>
    %cst_30 = arith.constant dense<0.000000e+00> : vector<32x128xf32>
    %98 = tpu.matmul %96, %97, %cst_30 {dimension_numbers = #tpu.dot_dimension_numbers<[1], [0], [0], [1], [0, 0, 1, 1], [], []>} : vector<32x128xbf16>, vector<128x128xbf16>, vector<32x128xf32> -> vector<32x128xf32>
    %99 = arith.addf %1, %98 : vector<32x128xf32>
    %c0_31 = arith.constant 0 : index
    %c0_32 = arith.constant 0 : index
    %100 = vector.load %arg7[%c0_31, %c0_32] : memref<1x128xf32, #tpu.memory_space<vmem>>, vector<1x128xf32>
    %101 = vector.broadcast %100 : vector<1x128xf32> to vector<32x128xf32>
    %102 = arith.addf %99, %101 : vector<32x128xf32>
    %c0_33 = arith.constant 0 : index
    %c0_34 = arith.constant 0 : index
    %103 = vector.load %arg8[%c0_33, %c0_34] : memref<1x128xf32, #tpu.memory_space<vmem>>, vector<1x128xf32>
    %c0_35 = arith.constant 0 : index
    %c0_36 = arith.constant 0 : index
    %104 = vector.load %arg9[%c0_35, %c0_36] : memref<1x128xf32, #tpu.memory_space<vmem>>, vector<1x128xf32>
    %cst_37 = arith.constant dense<0.000000e+00> : vector<32xf32>
    %105 = vector.multi_reduction <add>, %102, %cst_37 [1] : vector<32x128xf32> to vector<32xf32>
    %106 = vector.shape_cast %105 : vector<32xf32> to vector<32x1xf32>
    %cst_38 = arith.constant 1.280000e+02 : f32
    %107 = vector.broadcast %cst_38 : f32 to vector<32x1xf32>
    %108 = arith.divf %106, %107 : vector<32x1xf32>
    %109 = vector.broadcast %108 : vector<32x1xf32> to vector<32x128xf32>
    %110 = arith.subf %102, %109 : vector<32x128xf32>
    %111 = arith.mulf %110, %110 : vector<32x128xf32>
    %cst_39 = arith.constant dense<0.000000e+00> : vector<32xf32>
    %112 = vector.multi_reduction <add>, %111, %cst_39 [1] : vector<32x128xf32> to vector<32xf32>
    %113 = vector.shape_cast %112 : vector<32xf32> to vector<32x1xf32>
    %cst_40 = arith.constant 1.280000e+02 : f32
    %114 = vector.broadcast %cst_40 : f32 to vector<32x1xf32>
    %115 = arith.divf %113, %114 : vector<32x1xf32>
    %cst_41 = arith.constant 9.99999974E-6 : f32
    %116 = vector.broadcast %cst_41 : f32 to vector<32x1xf32>
    %117 = arith.addf %115, %116 : vector<32x1xf32>
    %118 = math.rsqrt %117 : vector<32x1xf32>
    %119 = vector.broadcast %118 : vector<32x1xf32> to vector<32x128xf32>
    %120 = arith.mulf %110, %119 : vector<32x128xf32>
    %121 = vector.broadcast %103 : vector<1x128xf32> to vector<32x128xf32>
    %122 = arith.mulf %120, %121 : vector<32x128xf32>
    %123 = vector.broadcast %104 : vector<1x128xf32> to vector<32x128xf32>
    %124 = arith.addf %122, %123 : vector<32x128xf32>
    %125 = arith.truncf %124 : vector<32x128xf32> to vector<32x128xbf16>
    %c0_42 = arith.constant 0 : index
    %c0_43 = arith.constant 0 : index
    %126 = vector.load %arg10[%c0_42, %c0_43] : memref<128x512xbf16, #tpu.memory_space<vmem>>, vector<128x512xbf16>
    %cst_44 = arith.constant dense<0.000000e+00> : vector<32x512xf32>
    %127 = tpu.matmul %125, %126, %cst_44 {dimension_numbers = #tpu.dot_dimension_numbers<[1], [0], [0], [1], [0, 0, 1, 1], [], []>} : vector<32x128xbf16>, vector<128x512xbf16>, vector<32x512xf32> -> vector<32x512xf32>
    %c0_45 = arith.constant 0 : index
    %c0_46 = arith.constant 0 : index
    %128 = vector.load %arg11[%c0_45, %c0_46] : memref<1x512xf32, #tpu.memory_space<vmem>>, vector<1x512xf32>
    %129 = vector.broadcast %128 : vector<1x512xf32> to vector<32x512xf32>
    %130 = arith.addf %127, %129 : vector<32x512xf32>
    %cst_47 = arith.constant 1.702000e+00 : f32
    %131 = vector.broadcast %cst_47 : f32 to vector<32x512xf32>
    %132 = arith.mulf %131, %130 : vector<32x512xf32>
    %133 = arith.negf %132 : vector<32x512xf32>
    %134 = math.exp %133 : vector<32x512xf32>
    %cst_48 = arith.constant 1.000000e+00 : f32
    %135 = vector.broadcast %cst_48 : f32 to vector<32x512xf32>
    %136 = arith.addf %135, %134 : vector<32x512xf32>
    %137 = arith.divf %135, %136 : vector<32x512xf32>
    %138 = arith.mulf %130, %137 : vector<32x512xf32>
    %139 = arith.truncf %138 : vector<32x512xf32> to vector<32x512xbf16>
    %c0_49 = arith.constant 0 : index
    %c0_50 = arith.constant 0 : index
    %140 = vector.load %arg12[%c0_49, %c0_50] : memref<512x128xbf16, #tpu.memory_space<vmem>>, vector<512x128xbf16>
    %cst_51 = arith.constant dense<0.000000e+00> : vector<32x128xf32>
    %141 = tpu.matmul %139, %140, %cst_51 {dimension_numbers = #tpu.dot_dimension_numbers<[1], [0], [0], [1], [0, 0, 1, 1], [], []>} : vector<32x512xbf16>, vector<512x128xbf16>, vector<32x128xf32> -> vector<32x128xf32>
    %c0_52 = arith.constant 0 : index
    %c0_53 = arith.constant 0 : index
    %142 = vector.load %arg13[%c0_52, %c0_53] : memref<1x128xf32, #tpu.memory_space<vmem>>, vector<1x128xf32>
    %143 = vector.broadcast %142 : vector<1x128xf32> to vector<32x128xf32>
    %144 = arith.addf %141, %143 : vector<32x128xf32>
    %145 = arith.addf %102, %144 : vector<32x128xf32>
    %c0_54 = arith.constant 0 : index
    %c0_55 = arith.constant 0 : index
    %c0_56 = arith.constant 0 : index
    %146 = vector.load %arg14[%c0_54, %c0_55, %c0_56] : memref<1x32x128xf32, #tpu.memory_space<vmem>>, vector<1x32x128xf32>
    %147 = vector.shape_cast %146 : vector<1x32x128xf32> to vector<32x128xf32>
    %148 = vector.shape_cast %145 : vector<32x128xf32> to vector<1x32x128xf32>
    tpu.vector_store %arg14[%c0_54, %c0_55, %c0_56], %148 {strides = array<i32>} : memref<1x32x128xf32, #tpu.memory_space<vmem>>, vector<1x32x128xf32>,
    return
  }
  func.func @transform_0(%arg0: i32) -> (i32, i32, i32) {
    %c0_i32 = arith.constant 0 : i32
    %c0_i32_0 = arith.constant 0 : i32
    %c0_i32_1 = arith.constant 0 : i32
    return %arg0, %c0_i32, %c0_i32_0 : i32, i32, i32
  }
  func.func @transform_1(%arg0: i32) -> (i32, i32) {
    %c0_i32 = arith.constant 0 : i32
    %c0_i32_0 = arith.constant 0 : i32
    %c0_i32_1 = arith.constant 0 : i32
    return %c0_i32, %c0_i32_0 : i32, i32
  }
  func.func @transform_2(%arg0: i32) -> (i32, i32) {
    %c0_i32 = arith.constant 0 : i32
    %c0_i32_0 = arith.constant 0 : i32
    %c0_i32_1 = arith.constant 0 : i32
    return %c0_i32, %c0_i32_0 : i32, i32
  }
  func.func @transform_3(%arg0: i32) -> (i32, i32) {
    %c0_i32 = arith.constant 0 : i32
    %c0_i32_0 = arith.constant 0 : i32
    %c0_i32_1 = arith.constant 0 : i32
    return %c0_i32, %c0_i32_0 : i32, i32
  }
  func.func @transform_4(%arg0: i32) -> (i32, i32) {
    %c0_i32 = arith.constant 0 : i32
    %c0_i32_0 = arith.constant 0 : i32
    %c0_i32_1 = arith.constant 0 : i32
    return %c0_i32, %c0_i32_0 : i32, i32
  }
  func.func @transform_5(%arg0: i32) -> (i32, i32) {
    %c0_i32 = arith.constant 0 : i32
    %c0_i32_0 = arith.constant 0 : i32
    %c0_i32_1 = arith.constant 0 : i32
    return %c0_i32, %c0_i32_0 : i32, i32
  }
  func.func @transform_6(%arg0: i32) -> (i32, i32) {
    %c0_i32 = arith.constant 0 : i32
    %c0_i32_0 = arith.constant 0 : i32
    %c0_i32_1 = arith.constant 0 : i32
    return %c0_i32, %c0_i32_0 : i32, i32
  }
  func.func @transform_7(%arg0: i32) -> (i32, i32) {
    %c0_i32 = arith.constant 0 : i32
    %c0_i32_0 = arith.constant 0 : i32
    %c0_i32_1 = arith.constant 0 : i32
    return %c0_i32, %c0_i32_0 : i32, i32
  }
  func.func @transform_8(%arg0: i32) -> (i32, i32) {
    %c0_i32 = arith.constant 0 : i32
    %c0_i32_0 = arith.constant 0 : i32
    %c0_i32_1 = arith.constant 0 : i32
    return %c0_i32, %c0_i32_0 : i32, i32
  }
  func.func @transform_9(%arg0: i32) -> (i32, i32) {
    %c0_i32 = arith.constant 0 : i32
    %c0_i32_0 = arith.constant 0 : i32
    %c0_i32_1 = arith.constant 0 : i32
    return %c0_i32, %c0_i32_0 : i32, i32
  }
  func.func @transform_10(%arg0: i32) -> (i32, i32) {
    %c0_i32 = arith.constant 0 : i32
    %c0_i32_0 = arith.constant 0 : i32
    %c0_i32_1 = arith.constant 0 : i32
    return %c0_i32, %c0_i32_0 : i32, i32
  }
  func.func @transform_11(%arg0: i32) -> (i32, i32) {
    %c0_i32 = arith.constant 0 : i32
    %c0_i32_0 = arith.constant 0 : i32
    %c0_i32_1 = arith.constant 0 : i32
    return %c0_i32, %c0_i32_0 : i32, i32
  }
  func.func @transform_12(%arg0: i32) -> (i32, i32) {
    %c0_i32 = arith.constant 0 : i32
    %c0_i32_0 = arith.constant 0 : i32
    %c0_i32_1 = arith.constant 0 : i32
    return %c0_i32, %c0_i32_0 : i32, i32
  }
  func.func @transform_13(%arg0: i32) -> (i32, i32, i32) {
    %c0_i32 = arith.constant 0 : i32
    %c0_i32_0 = arith.constant 0 : i32
    %c0_i32_1 = arith.constant 0 : i32
    return %arg0, %c0_i32, %c0_i32_0 : i32, i32, i32
  }
}

module attributes {stable_mosaic.version = 11 : i64} {
  func.func @head_kernel(%arg0: i32, %arg1: memref<2x128xf32, #tpu.memory_space<vmem>>, %arg2: memref<1x128xf32, #tpu.memory_space<vmem>>, %arg3: memref<1x128xf32, #tpu.memory_space<vmem>>, %arg4: memref<128x128xbf16, #tpu.memory_space<vmem>>, %arg5: memref<2x128xf32, #tpu.memory_space<vmem>>) attributes {dimension_semantics = [#tpu.dimension_semantics<arbitrary>], iteration_bounds = array<i64: 1>, scalar_prefetch = 0 : i64, scratch_operands = 0 : i64, tpu.core_type = #tpu.core_type<tc>, window_params = [{pipeline_mode = #tpu.pipeline_mode<synchronous>, transform_indices = @transform_0, window_bounds = array<i64: 2, 128>}, {pipeline_mode = #tpu.pipeline_mode<synchronous>, transform_indices = @transform_1, window_bounds = array<i64: 1, 128>}, {pipeline_mode = #tpu.pipeline_mode<synchronous>, transform_indices = @transform_2, window_bounds = array<i64: 1, 128>}, {pipeline_mode = #tpu.pipeline_mode<synchronous>, transform_indices = @transform_3, window_bounds = array<i64: 128, 128>}, {pipeline_mode = #tpu.pipeline_mode<synchronous>, transform_indices = @transform_4, window_bounds = array<i64: 2, 128>}]} {
    %c0 = arith.constant 0 : index
    %c0_0 = arith.constant 0 : index
    %0 = vector.load %arg1[%c0, %c0_0] : memref<2x128xf32, #tpu.memory_space<vmem>>, vector<2x128xf32>
    %c0_1 = arith.constant 0 : index
    %c0_2 = arith.constant 0 : index
    %1 = vector.load %arg2[%c0_1, %c0_2] : memref<1x128xf32, #tpu.memory_space<vmem>>, vector<1x128xf32>
    %c0_3 = arith.constant 0 : index
    %c0_4 = arith.constant 0 : index
    %2 = vector.load %arg3[%c0_3, %c0_4] : memref<1x128xf32, #tpu.memory_space<vmem>>, vector<1x128xf32>
    %cst = arith.constant dense<0.000000e+00> : vector<2xf32>
    %3 = vector.multi_reduction <add>, %0, %cst [1] : vector<2x128xf32> to vector<2xf32>
    %4 = vector.shape_cast %3 : vector<2xf32> to vector<2x1xf32>
    %cst_5 = arith.constant 1.280000e+02 : f32
    %5 = vector.broadcast %cst_5 : f32 to vector<2x1xf32>
    %6 = arith.divf %4, %5 : vector<2x1xf32>
    %7 = vector.broadcast %6 : vector<2x1xf32> to vector<2x128xf32>
    %8 = arith.subf %0, %7 : vector<2x128xf32>
    %9 = arith.mulf %8, %8 : vector<2x128xf32>
    %cst_6 = arith.constant dense<0.000000e+00> : vector<2xf32>
    %10 = vector.multi_reduction <add>, %9, %cst_6 [1] : vector<2x128xf32> to vector<2xf32>
    %11 = vector.shape_cast %10 : vector<2xf32> to vector<2x1xf32>
    %cst_7 = arith.constant 1.280000e+02 : f32
    %12 = vector.broadcast %cst_7 : f32 to vector<2x1xf32>
    %13 = arith.divf %11, %12 : vector<2x1xf32>
    %cst_8 = arith.constant 9.99999974E-6 : f32
    %14 = vector.broadcast %cst_8 : f32 to vector<2x1xf32>
    %15 = arith.addf %13, %14 : vector<2x1xf32>
    %16 = math.rsqrt %15 : vector<2x1xf32>
    %17 = vector.broadcast %16 : vector<2x1xf32> to vector<2x128xf32>
    %18 = arith.mulf %8, %17 : vector<2x128xf32>
    %19 = vector.broadcast %1 : vector<1x128xf32> to vector<2x128xf32>
    %20 = arith.mulf %18, %19 : vector<2x128xf32>
    %21 = vector.broadcast %2 : vector<1x128xf32> to vector<2x128xf32>
    %22 = arith.addf %20, %21 : vector<2x128xf32>
    %23 = arith.truncf %22 : vector<2x128xf32> to vector<2x128xbf16>
    %c0_9 = arith.constant 0 : index
    %c0_10 = arith.constant 0 : index
    %24 = vector.load %arg4[%c0_9, %c0_10] : memref<128x128xbf16, #tpu.memory_space<vmem>>, vector<128x128xbf16>
    %cst_11 = arith.constant dense<0.000000e+00> : vector<2x128xf32>
    %25 = tpu.matmul %23, %24, %cst_11 {dimension_numbers = #tpu.dot_dimension_numbers<[1], [0], [0], [1], [0, 0, 1, 1], [], []>} : vector<2x128xbf16>, vector<128x128xbf16>, vector<2x128xf32> -> vector<2x128xf32>
    %c0_12 = arith.constant 0 : index
    %c0_13 = arith.constant 0 : index
    %26 = vector.load %arg5[%c0_12, %c0_13] : memref<2x128xf32, #tpu.memory_space<vmem>>, vector<2x128xf32>
    tpu.vector_store %arg5[%c0_12, %c0_13], %25 {strides = array<i32>} : memref<2x128xf32, #tpu.memory_space<vmem>>, vector<2x128xf32>,
    return
  }
  func.func @transform_0(%arg0: i32) -> (i32, i32) {
    %c0_i32 = arith.constant 0 : i32
    %c0_i32_0 = arith.constant 0 : i32
    %c0_i32_1 = arith.constant 0 : i32
    return %c0_i32, %c0_i32_0 : i32, i32
  }
  func.func @transform_1(%arg0: i32) -> (i32, i32) {
    %c0_i32 = arith.constant 0 : i32
    %c0_i32_0 = arith.constant 0 : i32
    %c0_i32_1 = arith.constant 0 : i32
    return %c0_i32, %c0_i32_0 : i32, i32
  }
  func.func @transform_2(%arg0: i32) -> (i32, i32) {
    %c0_i32 = arith.constant 0 : i32
    %c0_i32_0 = arith.constant 0 : i32
    %c0_i32_1 = arith.constant 0 : i32
    return %c0_i32, %c0_i32_0 : i32, i32
  }
  func.func @transform_3(%arg0: i32) -> (i32, i32) {
    %c0_i32 = arith.constant 0 : i32
    %c0_i32_0 = arith.constant 0 : i32
    %c0_i32_1 = arith.constant 0 : i32
    return %c0_i32, %c0_i32_0 : i32, i32
  }
  func.func @transform_4(%arg0: i32) -> (i32, i32) {
    %c0_i32 = arith.constant 0 : i32
    %c0_i32_0 = arith.constant 0 : i32
    %c0_i32_1 = arith.constant 0 : i32
    return %c0_i32, %c0_i32_0 : i32, i32
  }
}

</mosaic_0001>

<llo_original>
// kernel: clip_visual_forward.4
$region0: #{clip_visual_forward.4}
  #allocation0 [shape = 'u32[]', space=smem, size = 0x4, offset = 0x4, fixed_abs, tag = 'smem constant byte address 0x4 - core index']
  #allocation1 [shape = 'u32[144,128]{1,0:T(1,128)}', space=vmem, size = 0x12000, scoped, tag = 'internal scratch']
  %s0 = inlined_call_operand.vmem [shape: f32[2,32,192], index: 0, kind: input, shape index: {}]
  %s1 = inlined_call_operand.vmem [shape: bf16[192,128], index: 1, kind: input, shape index: {}]
  %s2 = inlined_call_operand.vmem [shape: f32[32,128], index: 2, kind: input, shape index: {}]
  %s3 = inlined_call_operand.vmem [shape: f32[1,128], index: 3, kind: input, shape index: {}]
  %s4 = inlined_call_operand.vmem [shape: f32[1,128], index: 4, kind: input, shape index: {}]
  %s5 = inlined_call_operand.vmem [shape: f32[2,32,128], index: 5, kind: output, shape index: {}]
  %s6 = sld [smem:[#allocation0]]
  $region53: #{clip_visual_forward.4} parent=0
    _
  %s8 = ssub.s32 1, %s6
  %s9 = scalar_select 0, %s8, %s6
  loop: start=0, step=1, limit=4
  $region2: #{clip_visual_forward.4} parent=0 // loop_pre_header
    _
  $region3: #{clip_visual_forward.4} parent=0 // loop_header
    %s11 = sphi 0, %s15
    %p12 = scmp.ge.s32.totalorder %s11, 4
    %s21 = sphi 0, %s23
    %s24 = sphi 0, %s21
    %s25 = sphi 0, %s24
    %s41 = sphi 0, %s25
    %s45 = sphi 0, %s45
    %s47 = sphi 0, %s45
    %s48 = sphi 0, %s47
    %s62 = sphi 0, %s48
    %s66 = sphi 0, %s66
    %s68 = sphi 0, %s66
    %s69 = sphi 0, %s68
    %s83 = sphi 0, %s69
    %s87 = sphi 0, %s87
    %s89 = sphi 0, %s87
    %s90 = sphi 0, %s89
    %s104 = sphi 0, %s90
    %s108 = sphi 0, %s108
    %s110 = sphi 0, %s108
    %s111 = sphi 0, %s110
    %s125 = sphi 0, %s111
    %s131 = sphi 0, %s133
    %s134 = sphi 0, %s131
    %s135 = sphi 0, %s134
    %s151 = sphi 0, %s135
  $region4: #{clip_visual_forward.4} parent=0 // loop_header_branch
    %14 = sbr.rel (%p12) target = $region8
  $region5: #{clip_visual_forward.4} parent=0 // loop_body
    %s16 = ssub.s32 %s11, 1
    %s17 = ssub.s32 %s11, 2
    %s18 = sadd.s32 %s11, 1
    %s19 = ssub.s32 %s11, %s18
    %p20 = scmp.eq.s32.totalorder %s19, 0
    %s22 = sadd.s32 %s21, 1
    %s23 = scalar_select %p20, %s21, %s22
    %p26 = pneg %p20
    %p27 = scmp.eq.s32.totalorder %s11, 1
    %p28 = por %p26, %p27
    %p29 = scmp.ne.s32.totalorder %s21, %s24
    %p30 = scmp.eq.s32.totalorder %s11, 0
    %p31 = por %p29, %p30
    %p32 = scmp.ne.s32.totalorder %s21, %s24
    %p33 = scmp.eq.s32.totalorder %s16, 1
    %p34 = por %p32, %p33
    %p35 = scmp.ne.s32.totalorder %s24, %s25
    %p36 = scmp.eq.s32.totalorder %s16, 0
    %p37 = por %p35, %p36
    %p38 = scmp.ne.s32.totalorder %s24, %s25
    %p39 = scmp.eq.s32.totalorder %s17, 1
    %p40 = por %p38, %p39
    %p42 = scmp.ne.s32.totalorder %s25, %s41
    %p43 = scmp.eq.s32.totalorder %s17, 0
    %p44 = por %p42, %p43
    %s46 = sadd.s32 %s45, 1
    %p49 = scmp.eq.s32.totalorder %s11, 1
    %p50 = scmp.ne.s32.totalorder %s45, %s47
    %p51 = scmp.eq.s32.totalorder %s11, 0
    %p52 = por %p50, %p51
    %p53 = scmp.ne.s32.totalorder %s45, %s47
    %p54 = scmp.eq.s32.totalorder %s16, 1
    %p55 = por %p53, %p54
    %p56 = scmp.ne.s32.totalorder %s47, %s48
    %p57 = scmp.eq.s32.totalorder %s16, 0
    %p58 = por %p56, %p57
    %p59 = scmp.ne.s32.totalorder %s47, %s48
    %p60 = scmp.eq.s32.totalorder %s17, 1
    %p61 = por %p59, %p60
    %p63 = scmp.ne.s32.totalorder %s48, %s62
    %p64 = scmp.eq.s32.totalorder %s17, 0
    %p65 = por %p63, %p64
    %s67 = sadd.s32 %s66, 1
    %p70 = scmp.eq.s32.totalorder %s11, 1
    %p71 = scmp.ne.s32.totalorder %s66, %s68
    %p72 = scmp.eq.s32.totalorder %s11, 0
    %p73 = por %p71, %p72
    %p74 = scmp.ne.s32.totalorder %s66, %s68
    %p75 = scmp.eq.s32.totalorder %s16, 1
    %p76 = por %p74, %p75
    %p77 = scmp.ne.s32.totalorder %s68, %s69
    %p78 = scmp.eq.s32.totalorder %s16, 0
    %p79 = por %p77, %p78
    %p80 = scmp.ne.s32.totalorder %s68, %s69
    %p81 = scmp.eq.s32.totalorder %s17, 1
    %p82 = por %p80, %p81
    %p84 = scmp.ne.s32.totalorder %s69, %s83
    %p85 = scmp.eq.s32.totalorder %s17, 0
    %p86 = por %p84, %p85
    %s88 = sadd.s32 %s87, 1
    %p91 = scmp.eq.s32.totalorder %s11, 1
    %p92 = scmp.ne.s32.totalorder %s87, %s89
    %p93 = scmp.eq.s32.totalorder %s11, 0
    %p94 = por %p92, %p93
    %p95 = scmp.ne.s32.totalorder %s87, %s89
    %p96 = scmp.eq.s32.totalorder %s16, 1
    %p97 = por %p95, %p96
    %p98 = scmp.ne.s32.totalorder %s89, %s90
    %p99 = scmp.eq.s32.totalorder %s16, 0
    %p100 = por %p98, %p99
    %p101 = scmp.ne.s32.totalorder %s89, %s90
    %p102 = scmp.eq.s32.totalorder %s17, 1
    %p103 = por %p101, %p102
    %p105 = scmp.ne.s32.totalorder %s90, %s104
    %p106 = scmp.eq.s32.totalorder %s17, 0
    %p107 = por %p105, %p106
    %s109 = sadd.s32 %s108, 1
    %p112 = scmp.eq.s32.totalorder %s11, 1
    %p113 = scmp.ne.s32.totalorder %s108, %s110
    %p114 = scmp.eq.s32.totalorder %s11, 0
    %p115 = por %p113, %p114
    %p116 = scmp.ne.s32.totalorder %s108, %s110
    %p117 = scmp.eq.s32.totalorder %s16, 1
    %p118 = por %p116, %p117
    %p119 = scmp.ne.s32.totalorder %s110, %s111
    %p120 = scmp.eq.s32.totalorder %s16, 0
    %p121 = por %p119, %p120
    %p122 = scmp.ne.s32.totalorder %s110, %s111
    %p123 = scmp.eq.s32.totalorder %s17, 1
    %p124 = por %p122, %p123
    %p126 = scmp.ne.s32.totalorder %s111, %s125
    %p127 = scmp.eq.s32.totalorder %s17, 0
    %p128 = por %p126, %p127
    %s129 = ssub.s32 %s11, %s18
    %p130 = scmp.eq.s32.totalorder %s129, 0
    %s132 = sadd.s32 %s131, 1
    %s133 = scalar_select %p130, %s131, %s132
    %p136 = pneg %p130
    %p137 = scmp.eq.s32.totalorder %s11, 1
    %p138 = por %p136, %p137
    %p139 = scmp.ne.s32.totalorder %s131, %s134
    %p140 = scmp.eq.s32.totalorder %s11, 0
    %p141 = por %p139, %p140
    %p142 = scmp.ne.s32.totalorder %s131, %s134
    %p143 = scmp.eq.s32.totalorder %s16, 1
    %p144 = por %p142, %p143
    %p145 = scmp.ne.s32.totalorder %s134, %s135
    %p146 = scmp.eq.s32.totalorder %s16, 0
    %p147 = por %p145, %p146
    %p148 = scmp.ne.s32.totalorder %s134, %s135
    %p149 = scmp.eq.s32.totalorder %s17, 1
    %p150 = por %p148, %p149
    %p152 = scmp.ne.s32.totalorder %s135, %s151
    %p153 = scmp.eq.s32.totalorder %s17, 0
    %p154 = por %p152, %p153
    %p155 = scmp.le.s32.totalorder 1, %s11
    %p156 = scmp.lt.s32.totalorder %s11, 3
    %p157 = pnand %p155, %p156
    %p158 = pneg %p157
    // Predicated region
    $region9: #{clip_visual_forward.4} parent=5 // pred_check
      _
    $region10: #{clip_visual_forward.4} parent=5 // pred_check_branch
      %160 = sbr.rel (%p157) target = $region12
    $region11: #{clip_visual_forward.4} parent=5 // pred_region
      %s161 = ssub.s32 %s11, 1
      // Predicated region
      $region13: #{clip_visual_forward.4} parent=11 // pred_check
        %p162 = pneg %p58
      $region14: #{clip_visual_forward.4} parent=11 // pred_check_branch
        %164 = sbr.rel (%p162) target = $region16
      $region15: #{clip_visual_forward.4} parent=11 // pred_region
        _
      $region16: #{clip_visual_forward.4} parent=11 // pred_fallthru
        _
      // Predicated region
      $region17: #{clip_visual_forward.4} parent=11 // pred_check
        %p165 = pneg %p79
      $region18: #{clip_visual_forward.4} parent=11 // pred_check_branch
        %167 = sbr.rel (%p165) target = $region20
      $region19: #{clip_visual_forward.4} parent=11 // pred_region
        _
      $region20: #{clip_visual_forward.4} parent=11 // pred_fallthru
        _
      // Predicated region
      $region21: #{clip_visual_forward.4} parent=11 // pred_check
        %p168 = pneg %p100
      $region22: #{clip_visual_forward.4} parent=11 // pred_check_branch
        %170 = sbr.rel (%p168) target = $region24
      $region23: #{clip_visual_forward.4} parent=11 // pred_region
        _
      $region24: #{clip_visual_forward.4} parent=11 // pred_fallthru
        _
      // Predicated region
      $region25: #{clip_visual_forward.4} parent=11 // pred_check
        %p171 = pneg %p121
      $region26: #{clip_visual_forward.4} parent=11 // pred_check_branch
        %173 = sbr.rel (%p171) target = $region28
      $region27: #{clip_visual_forward.4} parent=11 // pred_region
        _
      $region28: #{clip_visual_forward.4} parent=11 // pred_fallthru
        _
    $region12: #{clip_visual_forward.4} parent=5 // pred_fallthru
      _
    %p174 = scmp.lt.s32.totalorder %s11, 2
    // Predicated region
    $region29: #{clip_visual_forward.4} parent=5 // pred_check
      %p175 = pneg %p174
    $region30: #{clip_visual_forward.4} parent=5 // pred_check_branch
      %177 = sbr.rel (%p175) target = $region32
    $region31: #{clip_visual_forward.4} parent=5 // pred_region
      // Predicated region
      $region33: #{clip_visual_forward.4} parent=31 // pred_check
        %p178 = pneg %p31
      $region34: #{clip_visual_forward.4} parent=31 // pred_check_branch
        %180 = sbr.rel (%p178) target = $region36
      $region35: #{clip_visual_forward.4} parent=31 // pred_region
        %p181 = scmp.lt.s32.totalorder %s11, 1
        %s182 = scalar_select %p181, %s11, 1
        %s183 = smul.addr %s182, 8
        %s184 = smul.addr %s183, 8
        %s185 = scalar_lea.vmem %s0, %s184
      $region36: #{clip_visual_forward.4} parent=31 // pred_fallthru
        _
    $region32: #{clip_visual_forward.4} parent=5 // pred_fallthru
      _
    %p186 = scmp.le.s32.totalorder 1, %s11
    %p187 = scmp.lt.s32.totalorder %s11, 3
    %p188 = pnand %p186, %p187
    %p189 = pneg %p188
    // Predicated region
    $region37: #{clip_visual_forward.4} parent=5 // pred_check
      _
    $region38: #{clip_visual_forward.4} parent=5 // pred_check_branch
      %191 = sbr.rel (%p188) target = $region40
    $region39: #{clip_visual_forward.4} parent=5 // pred_region
      %s192 = ssub.s32 %s11, 1
      %p193 = scmp.lt.s32.totalorder %s16, 1
      %s194 = scalar_select %p193, %s16, 1
      %s195 = smul.addr %s194, 8
      %s196 = smul.addr %s195, 8
      %s197 = scalar_lea.vmem %s0, %s196
      %p198 = pneg %p37
      %p199 = pneg %p34
      %p200 = pneg %p58
      %p201 = pneg %p55
      %p202 = pneg %p79
      %p203 = pneg %p76
      %p204 = pneg %p100
      %p205 = pneg %p97
      %p206 = pneg %p121
      %p207 = pneg %p118
      %p208 = pneg %p147
      %p209 = pneg %p144
      %p210 = scmp.lt.s32.totalorder %s16, 1
      %s211 = scalar_select %p210, %s16, 1
      %s212 = smul.addr %s211, 4
      %s213 = smul.addr %s212, 8
      %s214 = scalar_lea.vmem %s5, %s213
      %p215 = scmp.lt.s32.totalorder %s16, 1
      %s216 = scalar_select %p215, %s16, 1
      %s217 = smul.addr %s216, 8
      %s218 = smul.addr %s217, 8
      %s219 = scalar_lea.vmem %s0, %s218
      %p220 = scmp.lt.s32.totalorder %s16, 1
      %s221 = scalar_select %p220, %s16, 1
      %s222 = smul.addr %s221, 4
      %s223 = smul.addr %s222, 8
      %s224 = scalar_lea.vmem %s5, %s223
      %v226 = vld [vmem:[%s219] sm:$0xff]
      %v227 = vld [vmem:[%s219 + $0x8] sm:$0xff]
      %v228 = vld [vmem:[%s219 + $0x10] sm:$0xff]
      %v229 = vld [vmem:[%s219 + $0x18] sm:$0xff]
      %v230 = vld [vmem:[%s219 + $0x20] sm:$0xff]
      %v231 = vld [vmem:[%s219 + $0x28] sm:$0xff]
      %v232 = vld [vmem:[%s219 + $0x30] sm:$0xff]
      %v233 = vld [vmem:[%s219 + $0x38] sm:$0xff]
      %v234 = vpack.c.bf16 %v228, %v226
      %v235 = vpack.c.bf16 %v229, %v227
      %v236 = vpack.c.bf16 %v232, %v230
      %v237 = vpack.c.bf16 %v233, %v231
      %v238 = vld [vmem:[%s1] sm:$0xf]
      %v239 = vld [vmem:[%s1 + $0x4] sm:$0xf]
      %v240 = vld [vmem:[%s1 + $0x8] sm:$0xf]
      %v241 = vld [vmem:[%s1 + $0xc] sm:$0xf]
      %v242 = vld [vmem:[%s1 + $0x10] sm:$0xf]
      %v243 = vld [vmem:[%s1 + $0x14] sm:$0xf]
      %v244 = vld [vmem:[%s1 + $0x18] sm:$0xf]
      %v245 = vld [vmem:[%s1 + $0x1c] sm:$0xf]
      %v246 = vld [vmem:[%s1 + $0x20] sm:$0xf]
      %v247 = vld [vmem:[%s1 + $0x24] sm:$0xf]
      %v248 = vld [vmem:[%s1 + $0x28] sm:$0xf]
      %v249 = vld [vmem:[%s1 + $0x2c] sm:$0xf]
      %v250 = vld [vmem:[%s1 + $0x30] sm:$0xf]
      %v251 = vld [vmem:[%s1 + $0x34] sm:$0xf]
      %v252 = vld [vmem:[%s1 + $0x38] sm:$0xf]
      %v253 = vld [vmem:[%s1 + $0x3c] sm:$0xf]
      %v254 = vld [vmem:[%s1 + $0x40] sm:$0xf]
      %v255 = vld [vmem:[%s1 + $0x44] sm:$0xf]
      %v256 = vld [vmem:[%s1 + $0x48] sm:$0xf]
      %v257 = vld [vmem:[%s1 + $0x4c] sm:$0xf]
      %v258 = vld [vmem:[%s1 + $0x50] sm:$0xf]
      %v259 = vld [vmem:[%s1 + $0x54] sm:$0xf]
      %v260 = vld [vmem:[%s1 + $0x58] sm:$0xf]
      %v261 = vld [vmem:[%s1 + $0x5c] sm:$0xf]
      %v262 = vld [vmem:[%s2] sm:$0xff]
      %v263 = vld [vmem:[%s2 + $0x8] sm:$0xff]
      %v264 = vld [vmem:[%s2 + $0x10] sm:$0xff]
      %v265 = vld [vmem:[%s2 + $0x18] sm:$0xff]
      %v290 = vunpack.c.l.b16 %v238
      %v291 = vunpack.c.l.b16 %v239
      %v292 = vunpack.c.l.b16 %v240
      %v293 = vunpack.c.l.b16 %v241
      %v294 = vunpack.c.l.b16 %v242
      %v295 = vunpack.c.l.b16 %v243
      %v296 = vunpack.c.l.b16 %v244
      %v297 = vunpack.c.l.b16 %v245
      %v298 = vunpack.c.l.b16 %v246
      %v299 = vunpack.c.l.b16 %v247
      %v300 = vunpack.c.l.b16 %v248
      %v301 = vunpack.c.l.b16 %v249
      %v302 = vunpack.c.l.b16 %v250
      %v303 = vunpack.c.l.b16 %v251
      %v304 = vunpack.c.l.b16 %v252
      %v305 = vunpack.c.l.b16 %v253
      %v306 = vunpack.c.l.b16 %v254
      %v307 = vunpack.c.l.b16 %v255
      %v308 = vunpack.c.l.b16 %v256
      %v309 = vunpack.c.l.b16 %v257
      %v310 = vunpack.c.l.b16 %v258
      %v311 = vunpack.c.l.b16 %v259
      %v312 = vunpack.c.l.b16 %v260
      %v313 = vunpack.c.l.b16 %v261
      %v314 = vpack.c.b16 %v291, %v290
      %v315 = vpack.c.b16 %v293, %v292
      %v316 = vpack.c.b16 %v295, %v294
      %v317 = vpack.c.b16 %v297, %v296
      %v318 = vpack.c.b16 %v299, %v298
      %v319 = vpack.c.b16 %v301, %v300
      %v320 = vpack.c.b16 %v303, %v302
      %v321 = vpack.c.b16 %v305, %v304
      %v322 = vpack.c.b16 %v307, %v306
      %v323 = vpack.c.b16 %v309, %v308
      %v324 = vpack.c.b16 %v311, %v310
      %v325 = vpack.c.b16 %v313, %v312
      %vm338 = vcmask 523264
      %v340 = vsel %vm338, %v235, 0
      %v343 = vsel %vm338, %v237, 0
      %345 = vmatprep.subr.bf16.mxu0 0
      %346 = vmatpush1.bf16.msra.mxu0 %v314
      %347 = vmatprep.subr.bf16.mxu0 0
      %348 = vmatpush1.bf16.msra.mxu0 %v315
      %349 = vmatprep.subr.bf16.mxu0 0
      %350 = vmatpush1.bf16.msra.mxu0 %v316
      %351 = vmatprep.subr.bf16.mxu0 0
      %352 = vmatpush1.bf16.msra.mxu0 %v317
      %353 = vmatprep.subr.bf16.mxu0 0
      %354 = vmatpush1.bf16.msra.mxu0 %v318
      %355 = vmatprep.subr.bf16.mxu0 0
      %356 = vmatpush1.bf16.msra.mxu0 %v319
      %357 = vmatprep.subr.bf16.mxu0 0
      %358 = vmatpush1.bf16.msra.mxu0 %v320
      %359 = vmatprep.subr.bf16.mxu0 0
      %360 = vmatpush1.bf16.msra.mxu0 %v321
      %361 = vmatprep.subr.bf16.mxu0 0
      %362 = vmatpush1.bf16.msra.mxu0 %v322
      %363 = vmatprep.subr.bf16.mxu0 0
      %364 = vmatpush1.bf16.msra.mxu0 %v323
      %365 = vmatprep.subr.bf16.mxu0 0
      %366 = vmatpush1.bf16.msra.mxu0 %v324
      %367 = vmatprep.subr.bf16.mxu0 0
      %368 = vmatpush1.bf16.msra.mxu0 %v325
      %369 = vmatprep.subr.bf16.mxu0 0
      %370 = vmatpush1.bf16.msra.mxu0 0
      %371 = vmatprep.subr.bf16.mxu0 0
      %372 = vmatpush1.bf16.msra.mxu0 0
      %373 = vmatprep.subr.bf16.mxu0 0
      %374 = vmatpush1.bf16.msra.mxu0 0
      %375 = vmatprep.subr.bf16.mxu0 0
      %376 = vmatpush1.bf16.msra.mxu0 0
      %377 = vmatprep.mubr.bf16.mxu0 %v340
      %378 = vmatmul.mubr.bf16.gmra.mrb[0].mxu0 %v234
      %v379 = vpop.f32.mrb[0].mxu0
      %v380 = vadd.f32 %v262, %v379
      %v381 = vpop.f32.mrb[0].mxu0
      %v382 = vpop.f32.mrb[0].mxu0
      %v383 = vadd.f32 %v263, %v382
      %v384 = vpop.f32.mrb[0].mxu0
      %385 = vmatprep.mubr.bf16.mxu0 %v343
      %386 = vmatmul.mubr.bf16.gmra.mrb[0].mxu0 %v236
      %v387 = vpop.f32.mrb[0].mxu0
      %v388 = vadd.f32 %v264, %v387
      %v389 = vpop.f32.mrb[0].mxu0
      %v390 = vpop.f32.mrb[0].mxu0
      %v391 = vadd.f32 %v265, %v390
      %v392 = vpop.f32.mrb[0].mxu0
      %393 = vdwg.mxu0
      %v394 = vld [vmem:[%s3] sm:$0x1]
      %v395 = vld [vmem:[%s4] sm:$0x1]
      %396 = vadd.xlane.f32.xlu0 %v380
      %v397 = vpop.xlane.xlu0 %396
      %398 = vadd.xlane.f32.xlu0 %v383
      %v399 = vpop.xlane.xlu0 %398
      %400 = vadd.xlane.f32.xlu0 %v388
      %v401 = vpop.xlane.xlu0 %400
      %402 = vadd.xlane.f32.xlu0 %v391
      %v403 = vpop.xlane.xlu0 %402
      %v404 = vrcp.pop 128.0
      %v405 = vmul.f32 %v397, %v404
      %v406 = vmul.f32 %v399, %v404
      %v407 = vmul.f32 %v401, %v404
      %v408 = vmul.f32 %v403, %v404
      %v409 = vsub.f32 %v380, %v405
      %v410 = vsub.f32 %v383, %v406
      %v411 = vsub.f32 %v388, %v407
      %v412 = vsub.f32 %v391, %v408
      %v413 = vmul.f32 %v409, %v409
      %v414 = vmul.f32 %v410, %v410
      %v415 = vmul.f32 %v411, %v411
      %v416 = vmul.f32 %v412, %v412
      %417 = vadd.xlane.f32.xlu0 %v413
      %v418 = vpop.xlane.xlu0 %417
      %419 = vadd.xlane.f32.xlu0 %v414
      %v420 = vpop.xlane.xlu0 %419
      %421 = vadd.xlane.f32.xlu0 %v415
      %v422 = vpop.xlane.xlu0 %421
      %423 = vadd.xlane.f32.xlu0 %v416
      %v424 = vpop.xlane.xlu0 %423
      %v425 = vmul.f32 %v418, %v404
      %v426 = vmul.f32 %v420, %v404
      %v427 = vmul.f32 %v422, %v404
      %v428 = vmul.f32 %v424, %v404
      %v429 = vadd.f32 %v425, 1e-05
      %v430 = vadd.f32 %v426, 1e-05
      %v431 = vadd.f32 %v427, 1e-05
      %v432 = vadd.f32 %v428, 1e-05
      %v433 = vrsqrt.pop %v429
      %v434 = vrsqrt.pop %v430
      %v435 = vrsqrt.pop %v431
      %v436 = vrsqrt.pop %v432
      %v437 = vmul.f32 %v409, %v433
      %v438 = vmul.f32 %v410, %v434
      %v439 = vmul.f32 %v411, %v435
      %v440 = vmul.f32 %v412, %v436
      %v442 = vlaneseq
      %v443 = vshrl.u32 %v442, 7
      %v444 = vsub.s32 0, %v443
      %v445 = vrot.slane %v394, %v444
      %v447 = vmul.f32 %v437, %v445
      %v448 = vmul.f32 %v438, %v445
      %v449 = vmul.f32 %v439, %v445
      %v450 = vmul.f32 %v440, %v445
      %v452 = vlaneseq
      %v453 = vshrl.u32 %v452, 7
      %v454 = vsub.s32 0, %v453
      %v455 = vrot.slane %v395, %v454
      %v457 = vadd.f32 %v447, %v455
      %v458 = vadd.f32 %v448, %v455
      %v459 = vadd.f32 %v449, %v455
      %v460 = vadd.f32 %v450, %v455
      %461 = vst [vmem:[%s224] sm:$0xff] %v457
      %462 = vst [vmem:[%s224 + $0x8] sm:$0xff] %v458
      %463 = vst [vmem:[%s224 + $0x10] sm:$0xff] %v459
      %464 = vst [vmem:[%s224 + $0x18] sm:$0xff] %v460
      %p465 = scmp.lt.s32.totalorder %s16, 1
      %s466 = scalar_select %p465, %s16, 1
      %s467 = smul.addr %s466, 4
      %s468 = smul.addr %s467, 8
      %s469 = scalar_lea.vmem %s5, %s468
      // Predicated region
      $region41: #{clip_visual_forward.4} parent=39 // pred_check
        %p470 = pneg %p144
      $region42: #{clip_visual_forward.4} parent=39 // pred_check_branch
        %472 = sbr.rel (%p470) target = $region44
      $region43: #{clip_visual_forward.4} parent=39 // pred_region
        _
      $region44: #{clip_visual_forward.4} parent=39 // pred_fallthru
        _
    $region40: #{clip_visual_forward.4} parent=5 // pred_fallthru
      _
    %p473 = scmp.le.s32.totalorder 2, %s11
    // Predicated region
    $region45: #{clip_visual_forward.4} parent=5 // pred_check
      %p474 = pneg %p473
    $region46: #{clip_visual_forward.4} parent=5 // pred_check_branch
      %476 = sbr.rel (%p474) target = $region48
    $region47: #{clip_visual_forward.4} parent=5 // pred_region
      %s477 = ssub.s32 %s11, 2
      // Predicated region
      $region49: #{clip_visual_forward.4} parent=47 // pred_check
        %p478 = pneg %p150
      $region50: #{clip_visual_forward.4} parent=47 // pred_check_branch
        %480 = sbr.rel (%p478) target = $region52
      $region51: #{clip_visual_forward.4} parent=47 // pred_region
        %p481 = scmp.lt.s32.totalorder %s17, 1
        %s482 = scalar_select %p481, %s17, 1
        %s483 = smul.addr %s482, 4
        %s484 = smul.addr %s483, 8
        %s485 = scalar_lea.vmem %s5, %s484
      $region52: #{clip_visual_forward.4} parent=47 // pred_fallthru
        _
    $region48: #{clip_visual_forward.4} parent=5 // pred_fallthru
      _
  $region6: #{clip_visual_forward.4} parent=0 // loop_footer
    %s15 = sadd.s32 1, %s11
  $region7: #{clip_visual_forward.4} parent=0 // loop_footer_branch
    %10 = sbr.rel target = $region3
  $region8: #{clip_visual_forward.4} parent=0 // loop_exit
    _

// kernel: clip_visual_forward.7
$region0: #{clip_visual_forward.7}
  #allocation0 [shape = 'u32[]', space=smem, size = 0x4, offset = 0x4, fixed_abs, tag = 'smem constant byte address 0x4 - core index']
  #allocation1 [shape = 'u32[144,128]{1,0:T(1,128)}', space=vmem, size = 0x12000, scoped, tag = 'internal scratch']
  %s0 = inlined_call_operand.vmem [shape: f32[2,128], index: 0, kind: input, shape index: {}]
  %s1 = inlined_call_operand.vmem [shape: f32[1,128], index: 1, kind: input, shape index: {}]
  %s2 = inlined_call_operand.vmem [shape: f32[1,128], index: 2, kind: input, shape index: {}]
  %s3 = inlined_call_operand.vmem [shape: bf16[128,128], index: 3, kind: input, shape index: {}]
  %s4 = inlined_call_operand.hbm [shape: f32[2,128], index: 4, kind: output, shape index: {}]
  %s5 = sld [smem:[#allocation0]]
  $region26: #{clip_visual_forward.7} parent=0
    _
  %s7 = ssub.s32 1, %s5
  %s8 = scalar_select 0, %s7, %s5
  $region1: #{clip_visual_forward.7} parent=0
    #allocation2 [shape = 'u8[1024]{0}', space=vmem, size = 0x400, scoped, tag = 'output window, operand 0, single buffered']
    #allocation3 [shape = 's32[1]{0}', space=sflag, size = 0x4, scoped, tag = 'scoped memory for clip_visual_forward.7']
    %9 = vsyncpa [#allocation3], 0
    // Predicated region
    $region2: #{clip_visual_forward.7} parent=1 // pred_check
      _
    $region3: #{clip_visual_forward.7} parent=1 // pred_check_branch
      %11 = sbr.rel (0) target = $region5
    $region4: #{clip_visual_forward.7} parent=1 // pred_region
      _
    $region5: #{clip_visual_forward.7} parent=1 // pred_fallthru
      _
    // Predicated region
    $region6: #{clip_visual_forward.7} parent=1 // pred_check
      _
    $region7: #{clip_visual_forward.7} parent=1 // pred_check_branch
      %13 = sbr.rel (0) target = $region9
    $region8: #{clip_visual_forward.7} parent=1 // pred_region
      _
    $region9: #{clip_visual_forward.7} parent=1 // pred_fallthru
      _
    // Predicated region
    $region10: #{clip_visual_forward.7} parent=1 // pred_check
      _
    $region11: #{clip_visual_forward.7} parent=1 // pred_check_branch
      %15 = sbr.rel (0) target = $region13
    $region12: #{clip_visual_forward.7} parent=1 // pred_region
      _
    $region13: #{clip_visual_forward.7} parent=1 // pred_fallthru
      _
    // Predicated region
    $region14: #{clip_visual_forward.7} parent=1 // pred_check
      _
    $region15: #{clip_visual_forward.7} parent=1 // pred_check_branch
      %17 = sbr.rel (0) target = $region17
    $region16: #{clip_visual_forward.7} parent=1 // pred_region
      _
    $region17: #{clip_visual_forward.7} parent=1 // pred_fallthru
      _
    %v19 = vld [vmem:[%s0] sm:$0x3]
    %v20 = vld [vmem:[%s1] sm:$0x1]
    %v21 = vld [vmem:[%s2] sm:$0x1]
    %vm22 = vcmask 1041408
    %v23 = vsel %vm22, %v19, 0.0
    %24 = vadd.xlane.f32.xlu0 %v23
    %v25 = vpop.xlane.xlu0 %24
    %v26 = vrcp.pop 128.0
    %v27 = vmul.f32 %v25, %v26
    %v28 = vsub.f32 %v19, %v27
    %v29 = vmul.f32 %v28, %v28
    %v30 = vsel %vm22, %v29, 0.0
    %31 = vadd.xlane.f32.xlu0 %v30
    %v32 = vpop.xlane.xlu0 %31
    %v33 = vmul.f32 %v32, %v26
    %v34 = vadd.f32 %v33, 1e-05
    %v35 = vrsqrt.pop %v34
    %v36 = vmul.f32 %v28, %v35
    %v38 = vlaneseq
    %v39 = vshrl.u32 %v38, 7
    %v40 = vsub.s32 0, %v39
    %v41 = vrot.slane %v20, %v40
    %v43 = vmul.f32 %v36, %v41
    %v45 = vlaneseq
    %v46 = vshrl.u32 %v45, 7
    %v47 = vsub.s32 0, %v46
    %v48 = vrot.slane %v21, %v47
    %v50 = vadd.f32 %v43, %v48
    %v51 = vpack.c.bf16 %v50, %v50
    %v52 = vld [vmem:[%s3] sm:$0xf]
    %v53 = vld [vmem:[%s3 + $0x4] sm:$0xf]
    %v54 = vld [vmem:[%s3 + $0x8] sm:$0xf]
    %v55 = vld [vmem:[%s3 + $0xc] sm:$0xf]
    %v56 = vld [vmem:[%s3 + $0x10] sm:$0xf]
    %v57 = vld [vmem:[%s3 + $0x14] sm:$0xf]
    %v58 = vld [vmem:[%s3 + $0x18] sm:$0xf]
    %v59 = vld [vmem:[%s3 + $0x1c] sm:$0xf]
    %v60 = vld [vmem:[%s3 + $0x20] sm:$0xf]
    %v61 = vld [vmem:[%s3 + $0x24] sm:$0xf]
    %v62 = vld [vmem:[%s3 + $0x28] sm:$0xf]
    %v63 = vld [vmem:[%s3 + $0x2c] sm:$0xf]
    %v64 = vld [vmem:[%s3 + $0x30] sm:$0xf]
    %v65 = vld [vmem:[%s3 + $0x34] sm:$0xf]
    %v66 = vld [vmem:[%s3 + $0x38] sm:$0xf]
    %v67 = vld [vmem:[%s3 + $0x3c] sm:$0xf]
    %v84 = vunpack.c.l.b16 %v52
    %v85 = vunpack.c.l.b16 %v53
    %v86 = vunpack.c.l.b16 %v54
    %v87 = vunpack.c.l.b16 %v55
    %v88 = vunpack.c.l.b16 %v56
    %v89 = vunpack.c.l.b16 %v57
    %v90 = vunpack.c.l.b16 %v58
    %v91 = vunpack.c.l.b16 %v59
    %v92 = vunpack.c.l.b16 %v60
    %v93 = vunpack.c.l.b16 %v61
    %v94 = vunpack.c.l.b16 %v62
    %v95 = vunpack.c.l.b16 %v63
    %v96 = vunpack.c.l.b16 %v64
    %v97 = vunpack.c.l.b16 %v65
    %v98 = vunpack.c.l.b16 %v66
    %v99 = vunpack.c.l.b16 %v67
    %v100 = vpack.c.b16 %v85, %v84
    %v101 = vpack.c.b16 %v87, %v86
    %v102 = vpack.c.b16 %v89, %v88
    %v103 = vpack.c.b16 %v91, %v90
    %v104 = vpack.c.b16 %v93, %v92
    %v105 = vpack.c.b16 %v95, %v94
    %v106 = vpack.c.b16 %v97, %v96
    %v107 = vpack.c.b16 %v99, %v98
    %116 = vmatprep.subr.bf16.mxu0 0
    %117 = vmatpush1.bf16.msra.mxu0 %v100
    %118 = vmatprep.subr.bf16.mxu0 0
    %119 = vmatpush1.bf16.msra.mxu0 %v101
    %120 = vmatprep.subr.bf16.mxu0 0
    %121 = vmatpush1.bf16.msra.mxu0 %v102
    %122 = vmatprep.subr.bf16.mxu0 0
    %123 = vmatpush1.bf16.msra.mxu0 %v103
    %124 = vmatprep.subr.bf16.mxu0 0
    %125 = vmatpush1.bf16.msra.mxu0 %v104
    %126 = vmatprep.subr.bf16.mxu0 0
    %127 = vmatpush1.bf16.msra.mxu0 %v105
    %128 = vmatprep.subr.bf16.mxu0 0
    %129 = vmatpush1.bf16.msra.mxu0 %v106
    %130 = vmatprep.subr.bf16.mxu0 0
    %131 = vmatpush1.bf16.msra.mxu0 %v107
    %132 = vmatprep.subr.bf16.mxu0 0
    %133 = vmatpush1.bf16.msra.mxu0 0
    %134 = vmatprep.subr.bf16.mxu0 0
    %135 = vmatpush1.bf16.msra.mxu0 0
    %136 = vmatprep.subr.bf16.mxu0 0
    %137 = vmatpush1.bf16.msra.mxu0 0
    %138 = vmatprep.subr.bf16.mxu0 0
    %139 = vmatpush1.bf16.msra.mxu0 0
    %140 = vmatprep.subr.bf16.mxu0 0
    %141 = vmatpush1.bf16.msra.mxu0 0
    %142 = vmatprep.subr.bf16.mxu0 0
    %143 = vmatpush1.bf16.msra.mxu0 0
    %144 = vmatprep.subr.bf16.mxu0 0
    %145 = vmatpush1.bf16.msra.mxu0 0
    %146 = vmatprep.subr.bf16.mxu0 0
    %147 = vmatpush1.bf16.msra.mxu0 0
    %148 = vmatprep.mubr.bf16.mxu0 0
    %149 = vmatmul.mubr.bf16.gmra.mrb[0].mxu0 %v51
    %v150 = vpop.f32.mrb[0].mxu0
    %v151 = vadd.f32 0.0, %v150
    %v152 = vpop.f32.mrb[0].mxu0
    %v153 = vpop.f32.mrb[0].mxu0
    %v154 = vpop.f32.mrb[0].mxu0
    %155 = vdwg.mxu0
    %156 = vst [vmem:[#allocation2] sm:$0x3] %v151
    // Predicated region
    $region18: #{clip_visual_forward.7} parent=1 // pred_check
      _
    $region19: #{clip_visual_forward.7} parent=1 // pred_check_branch
      %158 = sbr.rel (0) target = $region21
    $region20: #{clip_visual_forward.7} parent=1 // pred_region
      %s160 = ssub.s32 32, 32
      %161 = vsyncadd [#allocation3], %s160
      %s163 = sshll.u32 [#allocation2], 4
      %s164 = int_to_ptr.vmem [resolvable:$true] %s163
      %166 = dma.vmem_to_hbm [thread:$0]  %s164, 32, %s4, [#allocation3]
    $region21: #{clip_visual_forward.7} parent=1 // pred_fallthru
      _
    // Predicated region
    $region22: #{clip_visual_forward.7} parent=1 // pred_check
      _
    $region23: #{clip_visual_forward.7} parent=1 // pred_check_branch
      %168 = sbr.rel (0) target = $region25
    $region24: #{clip_visual_forward.7} parent=1 // pred_region
      %169 = dma.done [#allocation3], 32
    $region25: #{clip_visual_forward.7} parent=1 // pred_fallthru
      _
    %170 = vsyncpa [#allocation3], 1

// kernel: clip_visual_forward.5
$region0: #{clip_visual_forward.5}
  #allocation0 [shape = 'u32[]', space=smem, size = 0x4, offset = 0x4, fixed_abs, tag = 'smem constant byte address 0x4 - core index']
  #allocation1 [shape = 'u32[144,128]{1,0:T(1,128)}', space=vmem, size = 0x12000, scoped, tag = 'internal scratch']
  #allocation2 [shape = 'f32[32,128]{1,0:T(8,128)}', space=vmem, size = 0x4000, scoped, tag = 'scratch operand']
  %s0 = inlined_call_operand.vmem [shape: f32[2,32,128], index: 0, kind: input, shape index: {}, may-alias: {0,13}]
  %s1 = inlined_call_operand.vmem [shape: f32[1,128], index: 1, kind: input, shape index: {}, may-alias: {1,7}]
  %s2 = inlined_call_operand.vmem [shape: f32[1,128], index: 2, kind: input, shape index: {}, may-alias: {2,6,8,12}]
  %s3 = inlined_call_operand.vmem [shape: bf16[128,384], index: 3, kind: input, shape index: {}]
  %s4 = inlined_call_operand.vmem [shape: f32[1,384], index: 4, kind: input, shape index: {}]
  %s5 = inlined_call_operand.vmem [shape: bf16[128,128], index: 5, kind: input, shape index: {}]
  %s6 = inlined_call_operand.vmem [shape: f32[1,128], index: 6, kind: input, shape index: {}, may-alias: {2,6,8,12}]
  %s7 = inlined_call_operand.vmem [shape: f32[1,128], index: 7, kind: input, shape index: {}, may-alias: {1,7}]
  %s8 = inlined_call_operand.vmem [shape: f32[1,128], index: 8, kind: input, shape index: {}, may-alias: {2,6,8,12}]
  %s9 = inlined_call_operand.vmem [shape: bf16[128,512], index: 9, kind: input, shape index: {}]
  %s10 = inlined_call_operand.vmem [shape: f32[1,512], index: 10, kind: input, shape index: {}]
  %s11 = inlined_call_operand.vmem [shape: bf16[512,128], index: 11, kind: input, shape index: {}]
  %s12 = inlined_call_operand.vmem [shape: f32[1,128], index: 12, kind: input, shape index: {}, may-alias: {2,6,8,12}]
  %s13 = inlined_call_operand.vmem [shape: f32[2,32,128], index: 13, kind: output, shape index: {}, may-alias: {0,13}]
  %s14 = sld [smem:[#allocation0]]
  $region85: #{clip_visual_forward.5} parent=0
    _
  %s16 = ssub.s32 1, %s14
  %s17 = scalar_select 0, %s16, %s14
  loop: start=0, step=1, limit=4
  $region2: #{clip_visual_forward.5} parent=0 // loop_pre_header
    _
  $region3: #{clip_visual_forward.5} parent=0 // loop_header
    %s19 = sphi 0, %s23
    %p20 = scmp.ge.s32.totalorder %s19, 4
    %s29 = sphi 0, %s31
    %s32 = sphi 0, %s29
    %s33 = sphi 0, %s32
    %s49 = sphi 0, %s33
    %s53 = sphi 0, %s53
    %s55 = sphi 0, %s53
    %s56 = sphi 0, %s55
    %s70 = sphi 0, %s56
    %s74 = sphi 0, %s74
    %s76 = sphi 0, %s74
    %s77 = sphi 0, %s76
    %s91 = sphi 0, %s77
    %s95 = sphi 0, %s95
    %s97 = sphi 0, %s95
    %s98 = sphi 0, %s97
    %s112 = sphi 0, %s98
    %s116 = sphi 0, %s116
    %s118 = sphi 0, %s116
    %s119 = sphi 0, %s118
    %s133 = sphi 0, %s119
    %s137 = sphi 0, %s137
    %s139 = sphi 0, %s137
    %s140 = sphi 0, %s139
    %s154 = sphi 0, %s140
    %s158 = sphi 0, %s158
    %s160 = sphi 0, %s158
    %s161 = sphi 0, %s160
    %s175 = sphi 0, %s161
    %s179 = sphi 0, %s179
    %s181 = sphi 0, %s179
    %s182 = sphi 0, %s181
    %s196 = sphi 0, %s182
    %s200 = sphi 0, %s200
    %s202 = sphi 0, %s200
    %s203 = sphi 0, %s202
    %s217 = sphi 0, %s203
    %s221 = sphi 0, %s221
    %s223 = sphi 0, %s221
    %s224 = sphi 0, %s223
    %s238 = sphi 0, %s224
    %s242 = sphi 0, %s242
    %s244 = sphi 0, %s242
    %s245 = sphi 0, %s244
    %s259 = sphi 0, %s245
    %s263 = sphi 0, %s263
    %s265 = sphi 0, %s263
    %s266 = sphi 0, %s265
    %s280 = sphi 0, %s266
    %s284 = sphi 0, %s284
    %s286 = sphi 0, %s284
    %s287 = sphi 0, %s286
    %s301 = sphi 0, %s287
    %s307 = sphi 0, %s309
    %s310 = sphi 0, %s307
    %s311 = sphi 0, %s310
    %s327 = sphi 0, %s311
  $region4: #{clip_visual_forward.5} parent=0 // loop_header_branch
    %22 = sbr.rel (%p20) target = $region8
  $region5: #{clip_visual_forward.5} parent=0 // loop_body
    %s24 = ssub.s32 %s19, 1
    %s25 = ssub.s32 %s19, 2
    %s26 = sadd.s32 %s19, 1
    %s27 = ssub.s32 %s19, %s26
    %p28 = scmp.eq.s32.totalorder %s27, 0
    %s30 = sadd.s32 %s29, 1
    %s31 = scalar_select %p28, %s29, %s30
    %p34 = pneg %p28
    %p35 = scmp.eq.s32.totalorder %s19, 1
    %p36 = por %p34, %p35
    %p37 = scmp.ne.s32.totalorder %s29, %s32
    %p38 = scmp.eq.s32.totalorder %s19, 0
    %p39 = por %p37, %p38
    %p40 = scmp.ne.s32.totalorder %s29, %s32
    %p41 = scmp.eq.s32.totalorder %s24, 1
    %p42 = por %p40, %p41
    %p43 = scmp.ne.s32.totalorder %s32, %s33
    %p44 = scmp.eq.s32.totalorder %s24, 0
    %p45 = por %p43, %p44
    %p46 = scmp.ne.s32.totalorder %s32, %s33
    %p47 = scmp.eq.s32.totalorder %s25, 1
    %p48 = por %p46, %p47
    %p50 = scmp.ne.s32.totalorder %s33, %s49
    %p51 = scmp.eq.s32.totalorder %s25, 0
    %p52 = por %p50, %p51
    %s54 = sadd.s32 %s53, 1
    %p57 = scmp.eq.s32.totalorder %s19, 1
    %p58 = scmp.ne.s32.totalorder %s53, %s55
    %p59 = scmp.eq.s32.totalorder %s19, 0
    %p60 = por %p58, %p59
    %p61 = scmp.ne.s32.totalorder %s53, %s55
    %p62 = scmp.eq.s32.totalorder %s24, 1
    %p63 = por %p61, %p62
    %p64 = scmp.ne.s32.totalorder %s55, %s56
    %p65 = scmp.eq.s32.totalorder %s24, 0
    %p66 = por %p64, %p65
    %p67 = scmp.ne.s32.totalorder %s55, %s56
    %p68 = scmp.eq.s32.totalorder %s25, 1
    %p69 = por %p67, %p68
    %p71 = scmp.ne.s32.totalorder %s56, %s70
    %p72 = scmp.eq.s32.totalorder %s25, 0
    %p73 = por %p71, %p72
    %s75 = sadd.s32 %s74, 1
    %p78 = scmp.eq.s32.totalorder %s19, 1
    %p79 = scmp.ne.s32.totalorder %s74, %s76
    %p80 = scmp.eq.s32.totalorder %s19, 0
    %p81 = por %p79, %p80
    %p82 = scmp.ne.s32.totalorder %s74, %s76
    %p83 = scmp.eq.s32.totalorder %s24, 1
    %p84 = por %p82, %p83
    %p85 = scmp.ne.s32.totalorder %s76, %s77
    %p86 = scmp.eq.s32.totalorder %s24, 0
    %p87 = por %p85, %p86
    %p88 = scmp.ne.s32.totalorder %s76, %s77
    %p89 = scmp.eq.s32.totalorder %s25, 1
    %p90 = por %p88, %p89
    %p92 = scmp.ne.s32.totalorder %s77, %s91
    %p93 = scmp.eq.s32.totalorder %s25, 0
    %p94 = por %p92, %p93
    %s96 = sadd.s32 %s95, 1
    %p99 = scmp.eq.s32.totalorder %s19, 1
    %p100 = scmp.ne.s32.totalorder %s95, %s97
    %p101 = scmp.eq.s32.totalorder %s19, 0
    %p102 = por %p100, %p101
    %p103 = scmp.ne.s32.totalorder %s95, %s97
    %p104 = scmp.eq.s32.totalorder %s24, 1
    %p105 = por %p103, %p104
    %p106 = scmp.ne.s32.totalorder %s97, %s98
    %p107 = scmp.eq.s32.totalorder %s24, 0
    %p108 = por %p106, %p107
    %p109 = scmp.ne.s32.totalorder %s97, %s98
    %p110 = scmp.eq.s32.totalorder %s25, 1
    %p111 = por %p109, %p110
    %p113 = scmp.ne.s32.totalorder %s98, %s112
    %p114 = scmp.eq.s32.totalorder %s25, 0
    %p115 = por %p113, %p114
    %s117 = sadd.s32 %s116, 1
    %p120 = scmp.eq.s32.totalorder %s19, 1
    %p121 = scmp.ne.s32.totalorder %s116, %s118
    %p122 = scmp.eq.s32.totalorder %s19, 0
    %p123 = por %p121, %p122
    %p124 = scmp.ne.s32.totalorder %s116, %s118
    %p125 = scmp.eq.s32.totalorder %s24, 1
    %p126 = por %p124, %p125
    %p127 = scmp.ne.s32.totalorder %s118, %s119
    %p128 = scmp.eq.s32.totalorder %s24, 0
    %p129 = por %p127, %p128
    %p130 = scmp.ne.s32.totalorder %s118, %s119
    %p131 = scmp.eq.s32.totalorder %s25, 1
    %p132 = por %p130, %p131
    %p134 = scmp.ne.s32.totalorder %s119, %s133
    %p135 = scmp.eq.s32.totalorder %s25, 0
    %p136 = por %p134, %p135
    %s138 = sadd.s32 %s137, 1
    %p141 = scmp.eq.s32.totalorder %s19, 1
    %p142 = scmp.ne.s32.totalorder %s137, %s139
    %p143 = scmp.eq.s32.totalorder %s19, 0
    %p144 = por %p142, %p143
    %p145 = scmp.ne.s32.totalorder %s137, %s139
    %p146 = scmp.eq.s32.totalorder %s24, 1
    %p147 = por %p145, %p146
    %p148 = scmp.ne.s32.totalorder %s139, %s140
    %p149 = scmp.eq.s32.totalorder %s24, 0
    %p150 = por %p148, %p149
    %p151 = scmp.ne.s32.totalorder %s139, %s140
    %p152 = scmp.eq.s32.totalorder %s25, 1
    %p153 = por %p151, %p152
    %p155 = scmp.ne.s32.totalorder %s140, %s154
    %p156 = scmp.eq.s32.totalorder %s25, 0
    %p157 = por %p155, %p156
    %s159 = sadd.s32 %s158, 1
    %p162 = scmp.eq.s32.totalorder %s19, 1
    %p163 = scmp.ne.s32.totalorder %s158, %s160
    %p164 = scmp.eq.s32.totalorder %s19, 0
    %p165 = por %p163, %p164
    %p166 = scmp.ne.s32.totalorder %s158, %s160
    %p167 = scmp.eq.s32.totalorder %s24, 1
    %p168 = por %p166, %p167
    %p169 = scmp.ne.s32.totalorder %s160, %s161
    %p170 = scmp.eq.s32.totalorder %s24, 0
    %p171 = por %p169, %p170
    %p172 = scmp.ne.s32.totalorder %s160, %s161
    %p173 = scmp.eq.s32.totalorder %s25, 1
    %p174 = por %p172, %p173
    %p176 = scmp.ne.s32.totalorder %s161, %s175
    %p177 = scmp.eq.s32.totalorder %s25, 0
    %p178 = por %p176, %p177
    %s180 = sadd.s32 %s179, 1
    %p183 = scmp.eq.s32.totalorder %s19, 1
    %p184 = scmp.ne.s32.totalorder %s179, %s181
    %p185 = scmp.eq.s32.totalorder %s19, 0
    %p186 = por %p184, %p185
    %p187 = scmp.ne.s32.totalorder %s179, %s181
    %p188 = scmp.eq.s32.totalorder %s24, 1
    %p189 = por %p187, %p188
    %p190 = scmp.ne.s32.totalorder %s181, %s182
    %p191 = scmp.eq.s32.totalorder %s24, 0
    %p192 = por %p190, %p191
    %p193 = scmp.ne.s32.totalorder %s181, %s182
    %p194 = scmp.eq.s32.totalorder %s25, 1
    %p195 = por %p193, %p194
    %p197 = scmp.ne.s32.totalorder %s182, %s196
    %p198 = scmp.eq.s32.totalorder %s25, 0
    %p199 = por %p197, %p198
    %s201 = sadd.s32 %s200, 1
    %p204 = scmp.eq.s32.totalorder %s19, 1
    %p205 = scmp.ne.s32.totalorder %s200, %s202
    %p206 = scmp.eq.s32.totalorder %s19, 0
    %p207 = por %p205, %p206
    %p208 = scmp.ne.s32.totalorder %s200, %s202
    %p209 = scmp.eq.s32.totalorder %s24, 1
    %p210 = por %p208, %p209
    %p211 = scmp.ne.s32.totalorder %s202, %s203
    %p212 = scmp.eq.s32.totalorder %s24, 0
    %p213 = por %p211, %p212
    %p214 = scmp.ne.s32.totalorder %s202, %s203
    %p215 = scmp.eq.s32.totalorder %s25, 1
    %p216 = por %p214, %p215
    %p218 = scmp.ne.s32.totalorder %s203, %s217
    %p219 = scmp.eq.s32.totalorder %s25, 0
    %p220 = por %p218, %p219
    %s222 = sadd.s32 %s221, 1
    %p225 = scmp.eq.s32.totalorder %s19, 1
    %p226 = scmp.ne.s32.totalorder %s221, %s223
    %p227 = scmp.eq.s32.totalorder %s19, 0
    %p228 = por %p226, %p227
    %p229 = scmp.ne.s32.totalorder %s221, %s223
    %p230 = scmp.eq.s32.totalorder %s24, 1
    %p231 = por %p229, %p230
    %p232 = scmp.ne.s32.totalorder %s223, %s224
    %p233 = scmp.eq.s32.totalorder %s24, 0
    %p234 = por %p232, %p233
    %p235 = scmp.ne.s32.totalorder %s223, %s224
    %p236 = scmp.eq.s32.totalorder %s25, 1
    %p237 = por %p235, %p236
    %p239 = scmp.ne.s32.totalorder %s224, %s238
    %p240 = scmp.eq.s32.totalorder %s25, 0
    %p241 = por %p239, %p240
    %s243 = sadd.s32 %s242, 1
    %p246 = scmp.eq.s32.totalorder %s19, 1
    %p247 = scmp.ne.s32.totalorder %s242, %s244
    %p248 = scmp.eq.s32.totalorder %s19, 0
    %p249 = por %p247, %p248
    %p250 = scmp.ne.s32.totalorder %s242, %s244
    %p251 = scmp.eq.s32.totalorder %s24, 1
    %p252 = por %p250, %p251
    %p253 = scmp.ne.s32.totalorder %s244, %s245
    %p254 = scmp.eq.s32.totalorder %s24, 0
    %p255 = por %p253, %p254
    %p256 = scmp.ne.s32.totalorder %s244, %s245
    %p257 = scmp.eq.s32.totalorder %s25, 1
    %p258 = por %p256, %p257
    %p260 = scmp.ne.s32.totalorder %s245, %s259
    %p261 = scmp.eq.s32.totalorder %s25, 0
    %p262 = por %p260, %p261
    %s264 = sadd.s32 %s263, 1
    %p267 = scmp.eq.s32.totalorder %s19, 1
    %p268 = scmp.ne.s32.totalorder %s263, %s265
    %p269 = scmp.eq.s32.totalorder %s19, 0
    %p270 = por %p268, %p269
    %p271 = scmp.ne.s32.totalorder %s263, %s265
    %p272 = scmp.eq.s32.totalorder %s24, 1
    %p273 = por %p271, %p272
    %p274 = scmp.ne.s32.totalorder %s265, %s266
    %p275 = scmp.eq.s32.totalorder %s24, 0
    %p276 = por %p274, %p275
    %p277 = scmp.ne.s32.totalorder %s265, %s266
    %p278 = scmp.eq.s32.totalorder %s25, 1
    %p279 = por %p277, %p278
    %p281 = scmp.ne.s32.totalorder %s266, %s280
    %p282 = scmp.eq.s32.totalorder %s25, 0
    %p283 = por %p281, %p282
    %s285 = sadd.s32 %s284, 1
    %p288 = scmp.eq.s32.totalorder %s19, 1
    %p289 = scmp.ne.s32.totalorder %s284, %s286
    %p290 = scmp.eq.s32.totalorder %s19, 0
    %p291 = por %p289, %p290
    %p292 = scmp.ne.s32.totalorder %s284, %s286
    %p293 = scmp.eq.s32.totalorder %s24, 1
    %p294 = por %p292, %p293
    %p295 = scmp.ne.s32.totalorder %s286, %s287
    %p296 = scmp.eq.s32.totalorder %s24, 0
    %p297 = por %p295, %p296
    %p298 = scmp.ne.s32.totalorder %s286, %s287
    %p299 = scmp.eq.s32.totalorder %s25, 1
    %p300 = por %p298, %p299
    %p302 = scmp.ne.s32.totalorder %s287, %s301
    %p303 = scmp.eq.s32.totalorder %s25, 0
    %p304 = por %p302, %p303
    %s305 = ssub.s32 %s19, %s26
    %p306 = scmp.eq.s32.totalorder %s305, 0
    %s308 = sadd.s32 %s307, 1
    %s309 = scalar_select %p306, %s307, %s308
    %p312 = pneg %p306
    %p313 = scmp.eq.s32.totalorder %s19, 1
    %p314 = por %p312, %p313
    %p315 = scmp.ne.s32.totalorder %s307, %s310
    %p316 = scmp.eq.s32.totalorder %s19, 0
    %p317 = por %p315, %p316
    %p318 = scmp.ne.s32.totalorder %s307, %s310
    %p319 = scmp.eq.s32.totalorder %s24, 1
    %p320 = por %p318, %p319
    %p321 = scmp.ne.s32.totalorder %s310, %s311
    %p322 = scmp.eq.s32.totalorder %s24, 0
    %p323 = por %p321, %p322
    %p324 = scmp.ne.s32.totalorder %s310, %s311
    %p325 = scmp.eq.s32.totalorder %s25, 1
    %p326 = por %p324, %p325
    %p328 = scmp.ne.s32.totalorder %s311, %s327
    %p329 = scmp.eq.s32.totalorder %s25, 0
    %p330 = por %p328, %p329
    %p331 = scmp.le.s32.totalorder 1, %s19
    %p332 = scmp.lt.s32.totalorder %s19, 3
    %p333 = pnand %p331, %p332
    %p334 = pneg %p333
    // Predicated region
    $region9: #{clip_visual_forward.5} parent=5 // pred_check
      _
    $region10: #{clip_visual_forward.5} parent=5 // pred_check_branch
      %336 = sbr.rel (%p333) target = $region12
    $region11: #{clip_visual_forward.5} parent=5 // pred_region
      %s337 = ssub.s32 %s19, 1
      // Predicated region
      $region13: #{clip_visual_forward.5} parent=11 // pred_check
        %p338 = pneg %p66
      $region14: #{clip_visual_forward.5} parent=11 // pred_check_branch
        %340 = sbr.rel (%p338) target = $region16
      $region15: #{clip_visual_forward.5} parent=11 // pred_region
        _
      $region16: #{clip_visual_forward.5} parent=11 // pred_fallthru
        _
      // Predicated region
      $region17: #{clip_visual_forward.5} parent=11 // pred_check
        %p341 = pneg %p87
      $region18: #{clip_visual_forward.5} parent=11 // pred_check_branch
        %343 = sbr.rel (%p341) target = $region20
      $region19: #{clip_visual_forward.5} parent=11 // pred_region
        _
      $region20: #{clip_visual_forward.5} parent=11 // pred_fallthru
        _
      // Predicated region
      $region21: #{clip_visual_forward.5} parent=11 // pred_check
        %p344 = pneg %p108
      $region22: #{clip_visual_forward.5} parent=11 // pred_check_branch
        %346 = sbr.rel (%p344) target = $region24
      $region23: #{clip_visual_forward.5} parent=11 // pred_region
        _
      $region24: #{clip_visual_forward.5} parent=11 // pred_fallthru
        _
      // Predicated region
      $region25: #{clip_visual_forward.5} parent=11 // pred_check
        %p347 = pneg %p129
      $region26: #{clip_visual_forward.5} parent=11 // pred_check_branch
        %349 = sbr.rel (%p347) target = $region28
      $region27: #{clip_visual_forward.5} parent=11 // pred_region
        _
      $region28: #{clip_visual_forward.5} parent=11 // pred_fallthru
        _
      // Predicated region
      $region29: #{clip_visual_forward.5} parent=11 // pred_check
        %p350 = pneg %p150
      $region30: #{clip_visual_forward.5} parent=11 // pred_check_branch
        %352 = sbr.rel (%p350) target = $region32
      $region31: #{clip_visual_forward.5} parent=11 // pred_region
        _
      $region32: #{clip_visual_forward.5} parent=11 // pred_fallthru
        _
      // Predicated region
      $region33: #{clip_visual_forward.5} parent=11 // pred_check
        %p353 = pneg %p171
      $region34: #{clip_visual_forward.5} parent=11 // pred_check_branch
        %355 = sbr.rel (%p353) target = $region36
      $region35: #{clip_visual_forward.5} parent=11 // pred_region
        _
      $region36: #{clip_visual_forward.5} parent=11 // pred_fallthru
        _
      // Predicated region
      $region37: #{clip_visual_forward.5} parent=11 // pred_check
        %p356 = pneg %p192
      $region38: #{clip_visual_forward.5} parent=11 // pred_check_branch
        %358 = sbr.rel (%p356) target = $region40
      $region39: #{clip_visual_forward.5} parent=11 // pred_region
        _
      $region40: #{clip_visual_forward.5} parent=11 // pred_fallthru
        _
      // Predicated region
      $region41: #{clip_visual_forward.5} parent=11 // pred_check
        %p359 = pneg %p213
      $region42: #{clip_visual_forward.5} parent=11 // pred_check_branch
        %361 = sbr.rel (%p359) target = $region44
      $region43: #{clip_visual_forward.5} parent=11 // pred_region
        _
      $region44: #{clip_visual_forward.5} parent=11 // pred_fallthru
        _
      // Predicated region
      $region45: #{clip_visual_forward.5} parent=11 // pred_check
        %p362 = pneg %p234
      $region46: #{clip_visual_forward.5} parent=11 // pred_check_branch
        %364 = sbr.rel (%p362) target = $region48
      $region47: #{clip_visual_forward.5} parent=11 // pred_region
        _
      $region48: #{clip_visual_forward.5} parent=11 // pred_fallthru
        _
      // Predicated region
      $region49: #{clip_visual_forward.5} parent=11 // pred_check
        %p365 = pneg %p255
      $region50: #{clip_visual_forward.5} parent=11 // pred_check_branch
        %367 = sbr.rel (%p365) target = $region52
      $region51: #{clip_visual_forward.5} parent=11 // pred_region
        _
      $region52: #{clip_visual_forward.5} parent=11 // pred_fallthru
        _
      // Predicated region
      $region53: #{clip_visual_forward.5} parent=11 // pred_check
        %p368 = pneg %p276
      $region54: #{clip_visual_forward.5} parent=11 // pred_check_branch
        %370 = sbr.rel (%p368) target = $region56
      $region55: #{clip_visual_forward.5} parent=11 // pred_region
        _
      $region56: #{clip_visual_forward.5} parent=11 // pred_fallthru
        _
      // Predicated region
      $region57: #{clip_visual_forward.5} parent=11 // pred_check
        %p371 = pneg %p297
      $region58: #{clip_visual_forward.5} parent=11 // pred_check_branch
        %373 = sbr.rel (%p371) target = $region60
      $region59: #{clip_visual_forward.5} parent=11 // pred_region
        _
      $region60: #{clip_visual_forward.5} parent=11 // pred_fallthru
        _
    $region12: #{clip_visual_forward.5} parent=5 // pred_fallthru
      _
    %p374 = scmp.lt.s32.totalorder %s19, 2
    // Predicated region
    $region61: #{clip_visual_forward.5} parent=5 // pred_check
      %p375 = pneg %p374
    $region62: #{clip_visual_forward.5} parent=5 // pred_check_branch
      %377 = sbr.rel (%p375) target = $region64
    $region63: #{clip_visual_forward.5} parent=5 // pred_region
      // Predicated region
      $region65: #{clip_visual_forward.5} parent=63 // pred_check
        %p378 = pneg %p39
      $region66: #{clip_visual_forward.5} parent=63 // pred_check_branch
        %380 = sbr.rel (%p378) target = $region68
      $region67: #{clip_visual_forward.5} parent=63 // pred_region
        %p381 = scmp.lt.s32.totalorder %s19, 1
        %s382 = scalar_select %p381, %s19, 1
        %s383 = smul.addr %s382, 4
        %s384 = smul.addr %s383, 8
        %s385 = scalar_lea.vmem %s0, %s384
      $region68: #{clip_visual_forward.5} parent=63 // pred_fallthru
        _
    $region64: #{clip_visual_forward.5} parent=5 // pred_fallthru
      _
    %p386 = scmp.le.s32.totalorder 1, %s19
    %p387 = scmp.lt.s32.totalorder %s19, 3
    %p388 = pnand %p386, %p387
    %p389 = pneg %p388
    // Predicated region
    $region69: #{clip_visual_forward.5} parent=5 // pred_check
      _
    $region70: #{clip_visual_forward.5} parent=5 // pred_check_branch
      %391 = sbr.rel (%p388) target = $region72
    $region71: #{clip_visual_forward.5} parent=5 // pred_region
      %s392 = ssub.s32 %s19, 1
      %p393 = scmp.lt.s32.totalorder %s24, 1
      %s394 = scalar_select %p393, %s24, 1
      %s395 = smul.addr %s394, 4
      %s396 = smul.addr %s395, 8
      %s397 = scalar_lea.vmem %s0, %s396
      %p398 = pneg %p45
      %p399 = pneg %p42
      %p400 = pneg %p66
      %p401 = pneg %p63
      %p402 = pneg %p87
      %p403 = pneg %p84
      %p404 = pneg %p108
      %p405 = pneg %p105
      %p406 = pneg %p129
      %p407 = pneg %p126
      %p408 = pneg %p150
      %p409 = pneg %p147
      %p410 = pneg %p171
      %p411 = pneg %p168
      %p412 = pneg %p192
      %p413 = pneg %p189
      %p414 = pneg %p213
      %p415 = pneg %p210
      %p416 = pneg %p234
      %p417 = pneg %p231
      %p418 = pneg %p255
      %p419 = pneg %p252
      %p420 = pneg %p276
      %p421 = pneg %p273
      %p422 = pneg %p297
      %p423 = pneg %p294
      %p424 = pneg %p323
      %p425 = pneg %p320
      %p426 = scmp.lt.s32.totalorder %s24, 1
      %s427 = scalar_select %p426, %s24, 1
      %s428 = smul.addr %s427, 4
      %s429 = smul.addr %s428, 8
      %s430 = scalar_lea.vmem %s13, %s429
      %p431 = scmp.lt.s32.totalorder %s24, 1
      %s432 = scalar_select %p431, %s24, 1
      %s433 = smul.addr %s432, 4
      %s434 = smul.addr %s433, 8
      %s435 = scalar_lea.vmem %s0, %s434
      %p436 = scmp.lt.s32.totalorder %s24, 1
      %s437 = scalar_select %p436, %s24, 1
      %s438 = smul.addr %s437, 4
      %s439 = smul.addr %s438, 8
      %s440 = scalar_lea.vmem %s13, %s439
      %v442 = vld [vmem:[%s435] sm:$0xff]
      %v443 = vld [vmem:[%s435 + $0x8] sm:$0xff]
      %v444 = vld [vmem:[%s435 + $0x10] sm:$0xff]
      %v445 = vld [vmem:[%s435 + $0x18] sm:$0xff]
      %v446 = vld [vmem:[%s1] sm:$0x1]
      %v447 = vld [vmem:[%s2] sm:$0x1]
      %448 = vadd.xlane.f32.xlu0 %v442
      %v449 = vpop.xlane.xlu0 %448
      %450 = vadd.xlane.f32.xlu0 %v443
      %v451 = vpop.xlane.xlu0 %450
      %452 = vadd.xlane.f32.xlu0 %v444
      %v453 = vpop.xlane.xlu0 %452
      %454 = vadd.xlane.f32.xlu0 %v445
      %v455 = vpop.xlane.xlu0 %454
      %v456 = vrcp.pop 128.0
      %v457 = vmul.f32 %v449, %v456
      %v458 = vmul.f32 %v451, %v456
      %v459 = vmul.f32 %v453, %v456
      %v460 = vmul.f32 %v455, %v456
      %v461 = vsub.f32 %v442, %v457
      %v462 = vsub.f32 %v443, %v458
      %v463 = vsub.f32 %v444, %v459
      %v464 = vsub.f32 %v445, %v460
      %v465 = vmul.f32 %v461, %v461
      %v466 = vmul.f32 %v462, %v462
      %v467 = vmul.f32 %v463, %v463
      %v468 = vmul.f32 %v464, %v464
      %469 = vadd.xlane.f32.xlu0 %v465
      %v470 = vpop.xlane.xlu0 %469
      %471 = vadd.xlane.f32.xlu0 %v466
      %v472 = vpop.xlane.xlu0 %471
      %473 = vadd.xlane.f32.xlu0 %v467
      %v474 = vpop.xlane.xlu0 %473
      %475 = vadd.xlane.f32.xlu0 %v468
      %v476 = vpop.xlane.xlu0 %475
      %v477 = vmul.f32 %v470, %v456
      %v478 = vmul.f32 %v472, %v456
      %v479 = vmul.f32 %v474, %v456
      %v480 = vmul.f32 %v476, %v456
      %v481 = vadd.f32 %v477, 1e-05
      %v482 = vadd.f32 %v478, 1e-05
      %v483 = vadd.f32 %v479, 1e-05
      %v484 = vadd.f32 %v480, 1e-05
      %v485 = vrsqrt.pop %v481
      %v486 = vrsqrt.pop %v482
      %v487 = vrsqrt.pop %v483
      %v488 = vrsqrt.pop %v484
      %v489 = vmul.f32 %v461, %v485
      %v490 = vmul.f32 %v462, %v486
      %v491 = vmul.f32 %v463, %v487
      %v492 = vmul.f32 %v464, %v488
      %v494 = vlaneseq
      %v495 = vshrl.u32 %v494, 7
      %v496 = vsub.s32 0, %v495
      %v497 = vrot.slane %v446, %v496
      %v499 = vmul.f32 %v489, %v497
      %v500 = vmul.f32 %v490, %v497
      %v501 = vmul.f32 %v491, %v497
      %v502 = vmul.f32 %v492, %v497
      %v504 = vlaneseq
      %v505 = vshrl.u32 %v504, 7
      %v506 = vsub.s32 0, %v505
      %v507 = vrot.slane %v447, %v506
      %v509 = vadd.f32 %v499, %v507
      %v510 = vadd.f32 %v500, %v507
      %v511 = vadd.f32 %v501, %v507
      %v512 = vadd.f32 %v502, %v507
      %v513 = vpack.c.bf16 %v510, %v509
      %v514 = vpack.c.bf16 %v512, %v511
      %v515 = vld [vmem:[%s3] sm:$0xff]
      %v516 = vld [vmem:[%s3 + $0x8] sm:$0xf]
      %v517 = vld [vmem:[%s3 + $0xc] sm:$0xff]
      %v518 = vld [vmem:[%s3 + $0x14] sm:$0xf]
      %v519 = vld [vmem:[%s3 + $0x18] sm:$0xff]
      %v520 = vld [vmem:[%s3 + $0x20] sm:$0xf]
      %v521 = vld [vmem:[%s3 + $0x24] sm:$0xff]
      %v522 = vld [vmem:[%s3 + $0x2c] sm:$0xf]
      %v523 = vld [vmem:[%s3 + $0x30] sm:$0xff]
      %v524 = vld [vmem:[%s3 + $0x38] sm:$0xf]
      %v525 = vld [vmem:[%s3 + $0x3c] sm:$0xff]
      %v526 = vld [vmem:[%s3 + $0x44] sm:$0xf]
      %v527 = vld [vmem:[%s3 + $0x48] sm:$0xff]
      %v528 = vld [vmem:[%s3 + $0x50] sm:$0xf]
      %v529 = vld [vmem:[%s3 + $0x54] sm:$0xff]
      %v530 = vld [vmem:[%s3 + $0x5c] sm:$0xf]
      %v531 = vld [vmem:[%s3 + $0x60] sm:$0xff]
      %v532 = vld [vmem:[%s3 + $0x68] sm:$0xf]
      %v533 = vld [vmem:[%s3 + $0x6c] sm:$0xff]
      %v534 = vld [vmem:[%s3 + $0x74] sm:$0xf]
      %v535 = vld [vmem:[%s3 + $0x78] sm:$0xff]
      %v536 = vld [vmem:[%s3 + $0x80] sm:$0xf]
      %v537 = vld [vmem:[%s3 + $0x84] sm:$0xff]
      %v538 = vld [vmem:[%s3 + $0x8c] sm:$0xf]
      %v539 = vld [vmem:[%s3 + $0x90] sm:$0xff]
      %v540 = vld [vmem:[%s3 + $0x98] sm:$0xf]
      %v541 = vld [vmem:[%s3 + $0x9c] sm:$0xff]
      %v542 = vld [vmem:[%s3 + $0xa4] sm:$0xf]
      %v543 = vld [vmem:[%s3 + $0xa8] sm:$0xff]
      %v544 = vld [vmem:[%s3 + $0xb0] sm:$0xf]
      %v545 = vld [vmem:[%s3 + $0xb4] sm:$0xff]
      %v546 = vld [vmem:[%s3 + $0xbc] sm:$0xf]
      %v547 = vld [vmem:[%s4] sm:$0x7]
      %v549 = vlaneseq
      %v550 = vshrl.u32 %v549, 7
      %v551 = vsub.s32 0, %v550
      %v552 = vrot.slane %v547, %v551
      %v553 = vlaneseq
      %v554 = vshrl.u32 %v553, 7
      %v555 = vsub.s32 1, %v554
      %v556 = vrot.slane %v547, %v555
      %v557 = vlaneseq
      %v558 = vshrl.u32 %v557, 7
      %v559 = vsub.s32 2, %v558
      %v560 = vrot.slane %v547, %v559
      %v596 = vunpack.c.l.b16 %v515
      %v597 = vunpack.c.h.b16 %v515
      %v598 = vunpack.c.l.b16 %v516
      %v599 = vunpack.c.l.b16 %v517
      %v600 = vunpack.c.h.b16 %v517
      %v601 = vunpack.c.l.b16 %v518
      %v602 = vunpack.c.l.b16 %v519
      %v603 = vunpack.c.h.b16 %v519
      %v604 = vunpack.c.l.b16 %v520
      %v605 = vunpack.c.l.b16 %v521
      %v606 = vunpack.c.h.b16 %v521
      %v607 = vunpack.c.l.b16 %v522
      %v608 = vunpack.c.l.b16 %v523
      %v609 = vunpack.c.h.b16 %v523
      %v610 = vunpack.c.l.b16 %v524
      %v611 = vunpack.c.l.b16 %v525
      %v612 = vunpack.c.h.b16 %v525
      %v613 = vunpack.c.l.b16 %v526
      %v614 = vunpack.c.l.b16 %v527
      %v615 = vunpack.c.h.b16 %v527
      %v616 = vunpack.c.l.b16 %v528
      %v617 = vunpack.c.l.b16 %v529
      %v618 = vunpack.c.h.b16 %v529
      %v619 = vunpack.c.l.b16 %v530
      %v620 = vunpack.c.l.b16 %v531
      %v621 = vunpack.c.h.b16 %v531
      %v622 = vunpack.c.l.b16 %v532
      %v623 = vunpack.c.l.b16 %v533
      %v624 = vunpack.c.h.b16 %v533
      %v625 = vunpack.c.l.b16 %v534
      %v626 = vunpack.c.l.b16 %v535
      %v627 = vunpack.c.h.b16 %v535
      %v628 = vunpack.c.l.b16 %v536
      %v629 = vunpack.c.l.b16 %v537
      %v630 = vunpack.c.h.b16 %v537
      %v631 = vunpack.c.l.b16 %v538
      %v632 = vunpack.c.l.b16 %v539
      %v633 = vunpack.c.h.b16 %v539
      %v634 = vunpack.c.l.b16 %v540
      %v635 = vunpack.c.l.b16 %v541
      %v636 = vunpack.c.h.b16 %v541
      %v637 = vunpack.c.l.b16 %v542
      %v638 = vunpack.c.l.b16 %v543
      %v639 = vunpack.c.h.b16 %v543
      %v640 = vunpack.c.l.b16 %v544
      %v641 = vunpack.c.l.b16 %v545
      %v642 = vunpack.c.h.b16 %v545
      %v643 = vunpack.c.l.b16 %v546
      %v644 = vpack.c.b16 %v599, %v596
      %v645 = vpack.c.b16 %v600, %v597
      %v646 = vpack.c.b16 %v601, %v598
      %v647 = vpack.c.b16 %v605, %v602
      %v648 = vpack.c.b16 %v606, %v603
      %v649 = vpack.c.b16 %v607, %v604
      %v650 = vpack.c.b16 %v611, %v608
      %v651 = vpack.c.b16 %v612, %v609
      %v652 = vpack.c.b16 %v613, %v610
      %v653 = vpack.c.b16 %v617, %v614
      %v654 = vpack.c.b16 %v618, %v615
      %v655 = vpack.c.b16 %v619, %v616
      %v656 = vpack.c.b16 %v623, %v620
      %v657 = vpack.c.b16 %v624, %v621
      %v658 = vpack.c.b16 %v625, %v622
      %v659 = vpack.c.b16 %v629, %v626
      %v660 = vpack.c.b16 %v630, %v627
      %v661 = vpack.c.b16 %v631, %v628
      %v662 = vpack.c.b16 %v635, %v632
      %v663 = vpack.c.b16 %v636, %v633
      %v664 = vpack.c.b16 %v637, %v634
      %v665 = vpack.c.b16 %v641, %v638
      %v666 = vpack.c.b16 %v642, %v639
      %v667 = vpack.c.b16 %v643, %v640
      %692 = vmatprep.subr.bf16.mxu0 %v645
      %693 = vmatpush1.bf16.msra.mxu0 %v644
      %694 = vmatprep.subr.bf16.mxu0 %v648
      %695 = vmatpush1.bf16.msra.mxu0 %v647
      %696 = vmatprep.subr.bf16.mxu0 %v651
      %697 = vmatpush1.bf16.msra.mxu0 %v650
      %698 = vmatprep.subr.bf16.mxu0 %v654
      %699 = vmatpush1.bf16.msra.mxu0 %v653
      %700 = vmatprep.subr.bf16.mxu0 %v657
      %701 = vmatpush1.bf16.msra.mxu0 %v656
      %702 = vmatprep.subr.bf16.mxu0 %v660
      %703 = vmatpush1.bf16.msra.mxu0 %v659
      %704 = vmatprep.subr.bf16.mxu0 %v663
      %705 = vmatpush1.bf16.msra.mxu0 %v662
      %706 = vmatprep.subr.bf16.mxu0 %v666
      %707 = vmatpush1.bf16.msra.mxu0 %v665
      %708 = vmatprep.subr.bf16.mxu0 0
      %709 = vmatpush1.bf16.msra.mxu0 0
      %710 = vmatprep.subr.bf16.mxu0 0
      %711 = vmatpush1.bf16.msra.mxu0 0
      %712 = vmatprep.subr.bf16.mxu0 0
      %713 = vmatpush1.bf16.msra.mxu0 0
      %714 = vmatprep.subr.bf16.mxu0 0
      %715 = vmatpush1.bf16.msra.mxu0 0
      %716 = vmatprep.subr.bf16.mxu0 0
      %717 = vmatpush1.bf16.msra.mxu0 0
      %718 = vmatprep.subr.bf16.mxu0 0
      %719 = vmatpush1.bf16.msra.mxu0 0
      %720 = vmatprep.subr.bf16.mxu0 0
      %721 = vmatpush1.bf16.msra.mxu0 0
      %722 = vmatprep.subr.bf16.mxu0 0
      %723 = vmatpush1.bf16.msra.mxu0 0
      %724 = vmatprep.mubr.bf16.mxu0 0
      %725 = vmatmul.mubr.bf16.gmra.mrb[0].mxu0 %v513
      %v726 = vpop.f32.mrb[0].mxu0
      %v727 = vadd.f32 %v552, %v726
      %v728 = vpop.f32.mrb[0].mxu0
      %v729 = vadd.f32 %v556, %v728
      %v730 = vpop.f32.mrb[0].mxu0
      %v731 = vadd.f32 %v552, %v730
      %v732 = vpop.f32.mrb[0].mxu0
      %v733 = vadd.f32 %v556, %v732
      %734 = vmatprep.mubr.bf16.mxu0 0
      %735 = vmatmul.mubr.bf16.gmra.mrb[0].mxu0 %v514
      %v736 = vpop.f32.mrb[0].mxu0
      %v737 = vadd.f32 %v552, %v736
      %v738 = vpop.f32.mrb[0].mxu0
      %v739 = vadd.f32 %v556, %v738
      %v740 = vpop.f32.mrb[0].mxu0
      %v741 = vadd.f32 %v552, %v740
      %v742 = vpop.f32.mrb[0].mxu0
      %v743 = vadd.f32 %v556, %v742
      %744 = vdwg.mxu0
      %745 = vmatprep.subr.bf16.mxu0 0
      %746 = vmatpush1.bf16.msra.mxu0 %v646
      %747 = vmatprep.subr.bf16.mxu0 0
      %748 = vmatpush1.bf16.msra.mxu0 %v649
      %749 = vmatprep.subr.bf16.mxu0 0
      %750 = vmatpush1.bf16.msra.mxu0 %v652
      %751 = vmatprep.subr.bf16.mxu0 0
      %752 = vmatpush1.bf16.msra.mxu0 %v655
      %753 = vmatprep.subr.bf16.mxu0 0
      %754 = vmatpush1.bf16.msra.mxu0 %v658
      %755 = vmatprep.subr.bf16.mxu0 0
      %756 = vmatpush1.bf16.msra.mxu0 %v661
      %757 = vmatprep.subr.bf16.mxu0 0
      %758 = vmatpush1.bf16.msra.mxu0 %v664
      %759 = vmatprep.subr.bf16.mxu0 0
      %760 = vmatpush1.bf16.msra.mxu0 %v667
      %761 = vmatprep.subr.bf16.mxu0 0
      %762 = vmatpush1.bf16.msra.mxu0 0
      %763 = vmatprep.subr.bf16.mxu0 0
      %764 = vmatpush1.bf16.msra.mxu0 0
      %765 = vmatprep.subr.bf16.mxu0 0
      %766 = vmatpush1.bf16.msra.mxu0 0
      %767 = vmatprep.subr.bf16.mxu0 0
      %768 = vmatpush1.bf16.msra.mxu0 0
      %769 = vmatprep.subr.bf16.mxu0 0
      %770 = vmatpush1.bf16.msra.mxu0 0
      %771 = vmatprep.subr.bf16.mxu0 0
      %772 = vmatpush1.bf16.msra.mxu0 0
      %773 = vmatprep.subr.bf16.mxu0 0
      %774 = vmatpush1.bf16.msra.mxu0 0
      %775 = vmatprep.subr.bf16.mxu0 0
      %776 = vmatpush1.bf16.msra.mxu0 0
      %777 = vmatprep.mubr.bf16.mxu0 0
      %778 = vmatmul.mubr.bf16.gmra.mrb[0].mxu0 %v513
      %v779 = vpop.f32.mrb[0].mxu0
      %v780 = vadd.f32 %v560, %v779
      %v781 = vpop.f32.mrb[0].mxu0
      %v782 = vpop.f32.mrb[0].mxu0
      %v783 = vadd.f32 %v560, %v782
      %v784 = vpop.f32.mrb[0].mxu0
      %785 = vmatprep.mubr.bf16.mxu0 0
      %786 = vmatmul.mubr.bf16.gmra.mrb[0].mxu0 %v514
      %v787 = vpop.f32.mrb[0].mxu0
      %v788 = vadd.f32 %v560, %v787
      %v789 = vpop.f32.mrb[0].mxu0
      %v790 = vpop.f32.mrb[0].mxu0
      %v791 = vadd.f32 %v560, %v790
      %v792 = vpop.f32.mrb[0].mxu0
      %793 = vdwg.mxu0
      %v794 = vmul.f32 %v727, 0.17677669
      %v795 = vmul.f32 %v731, 0.17677669
      %v796 = vmul.f32 %v737, 0.17677669
      %v797 = vmul.f32 %v741, 0.17677669
      %v798 = vpack.c.bf16 %v795, %v794
      %v799 = vpack.c.bf16 %v797, %v796
      %802 = vrot.lane.b32.xlu0 %v798, 96
      %v803 = vpop.permute.xlu0 %802
      %804 = vrot.lane.b32.xlu0 %v799, 96
      %v805 = vpop.permute.xlu0 %804
      %806 = vrot.lane.b32.xlu0 %v798, 64
      %v807 = vpop.permute.xlu0 %806
      %808 = vrot.lane.b32.xlu0 %v799, 64
      %v809 = vpop.permute.xlu0 %808
      %810 = vrot.lane.b32.xlu0 %v798, 32
      %v811 = vpop.permute.xlu0 %810
      %812 = vrot.lane.b32.xlu0 %v799, 32
      %v813 = vpop.permute.xlu0 %812
      %v814 = vpack.c.bf16 %v733, %v729
      %v815 = vpack.c.bf16 %v743, %v739
      %818 = vrot.lane.b32.xlu0 %v814, 96
      %v819 = vpop.permute.xlu0 %818
      %820 = vrot.lane.b32.xlu0 %v815, 96
      %v821 = vpop.permute.xlu0 %820
      %822 = vrot.lane.b32.xlu0 %v814, 64
      %v823 = vpop.permute.xlu0 %822
      %824 = vrot.lane.b32.xlu0 %v815, 64
      %v825 = vpop.permute.xlu0 %824
      %826 = vrot.lane.b32.xlu0 %v814, 32
      %v827 = vpop.permute.xlu0 %826
      %828 = vrot.lane.b32.xlu0 %v815, 32
      %v829 = vpop.permute.xlu0 %828
      %v830 = vpack.c.bf16 %v783, %v780
      %v831 = vpack.c.bf16 %v791, %v788
      %834 = vrot.lane.b32.xlu0 %v830, 96
      %v835 = vpop.permute.xlu0 %834
      %836 = vrot.lane.b32.xlu0 %v831, 96
      %v837 = vpop.permute.xlu0 %836
      %840 = vrot.lane.b32.xlu0 %v830, 64
      %v841 = vpop.permute.xlu0 %840
      %842 = vrot.lane.b32.xlu0 %v831, 64
      %v843 = vpop.permute.xlu0 %842
      %846 = vrot.lane.b32.xlu0 %v830, 32
      %v847 = vpop.permute.xlu0 %846
      %848 = vrot.lane.b32.xlu0 %v831, 32
      %v849 = vpop.permute.xlu0 %848
      %vm852 = vcmask 261120
      %v854 = vsel %vm852, %v798, 0
      %v857 = vsel %vm852, %v799, 0
      %v860 = vsel %vm852, %v814, 0
      %v863 = vsel %vm852, %v815, 0
      %865 = vmatprep.subr.bf16.mxu0 0
      %866 = vmatpush1.bf16.xpose.msra.mxu0 %v860
      %867 = vmatprep.subr.bf16.mxu0 0
      %868 = vmatpush1.bf16.xpose.msra.mxu0 %v863
      %869 = vmatprep.subr.bf16.mxu0 0
      %870 = vmatpush1.bf16.xpose.msra.mxu0 0
      %871 = vmatprep.subr.bf16.mxu0 0
      %872 = vmatpush1.bf16.xpose.msra.mxu0 0
      %873 = vmatprep.subr.bf16.mxu0 0
      %874 = vmatpush1.bf16.xpose.msra.mxu0 0
      %875 = vmatprep.subr.bf16.mxu0 0
      %876 = vmatpush1.bf16.xpose.msra.mxu0 0
      %877 = vmatprep.subr.bf16.mxu0 0
      %878 = vmatpush1.bf16.xpose.msra.mxu0 0
      %879 = vmatprep.subr.bf16.mxu0 0
      %880 = vmatpush1.bf16.xpose.msra.mxu0 0
      %881 = vmatprep.subr.bf16.mxu0 0
      %882 = vmatpush1.bf16.xpose.msra.mxu0 0
      %883 = vmatprep.subr.bf16.mxu0 0
      %884 = vmatpush1.bf16.xpose.msra.mxu0 0
      %885 = vmatprep.subr.bf16.mxu0 0
      %886 = vmatpush1.bf16.xpose.msra.mxu0 0
      %887 = vmatprep.subr.bf16.mxu0 0
      %888 = vmatpush1.bf16.xpose.msra.mxu0 0
      %889 = vmatprep.subr.bf16.mxu0 0
      %890 = vmatpush1.bf16.xpose.msra.mxu0 0
      %891 = vmatprep.subr.bf16.mxu0 0
      %892 = vmatpush1.bf16.xpose.msra.mxu0 0
      %893 = vmatprep.subr.bf16.mxu0 0
      %894 = vmatpush1.bf16.xpose.msra.mxu0 0
      %895 = vmatprep.subr.bf16.mxu0 0
      %896 = vmatpush1.bf16.xpose.msra.mxu0 0
      %897 = vmatprep.mubr.bf16.mxu0 0
      %898 = vmatmul.mubr.bf16.gmra.mrb[0].mxu0 %v854
      %v899 = vpop.f32.mrb[0].mxu0
      %v900 = vadd.f32 0.0, %v899
      %v901 = vpop.f32.mrb[0].mxu0
      %v902 = vpop.f32.mrb[0].mxu0
      %v903 = vadd.f32 0.0, %v902
      %v904 = vpop.f32.mrb[0].mxu0
      %905 = vmatprep.mubr.bf16.mxu0 0
      %906 = vmatmul.mubr.bf16.gmra.mrb[0].mxu0 %v857
      %v907 = vpop.f32.mrb[0].mxu0
      %v908 = vadd.f32 0.0, %v907
      %v909 = vpop.f32.mrb[0].mxu0
      %v910 = vpop.f32.mrb[0].mxu0
      %v911 = vadd.f32 0.0, %v910
      %v912 = vpop.f32.mrb[0].mxu0
      %913 = vdwg.mxu0
      %v915 = vsel %vm852, %v803, 0
      %v918 = vsel %vm852, %v805, 0
      %v921 = vsel %vm852, %v819, 0
      %v924 = vsel %vm852, %v821, 0
      %926 = vmatprep.subr.bf16.mxu0 0
      %927 = vmatpush1.bf16.xpose.msra.mxu0 %v921
      %928 = vmatprep.subr.bf16.mxu0 0
      %929 = vmatpush1.bf16.xpose.msra.mxu0 %v924
      %930 = vmatprep.subr.bf16.mxu0 0
      %931 = vmatpush1.bf16.xpose.msra.mxu0 0
      %932 = vmatprep.subr.bf16.mxu0 0
      %933 = vmatpush1.bf16.xpose.msra.mxu0 0
      %934 = vmatprep.subr.bf16.mxu0 0
      %935 = vmatpush1.bf16.xpose.msra.mxu0 0
      %936 = vmatprep.subr.bf16.mxu0 0
      %937 = vmatpush1.bf16.xpose.msra.mxu0 0
      %938 = vmatprep.subr.bf16.mxu0 0
      %939 = vmatpush1.bf16.xpose.msra.mxu0 0
      %940 = vmatprep.subr.bf16.mxu0 0
      %941 = vmatpush1.bf16.xpose.msra.mxu0 0
      %942 = vmatprep.subr.bf16.mxu0 0
      %943 = vmatpush1.bf16.xpose.msra.mxu0 0
      %944 = vmatprep.subr.bf16.mxu0 0
      %945 = vmatpush1.bf16.xpose.msra.mxu0 0
      %946 = vmatprep.subr.bf16.mxu0 0
      %947 = vmatpush1.bf16.xpose.msra.mxu0 0
      %948 = vmatprep.subr.bf16.mxu0 0
      %949 = vmatpush1.bf16.xpose.msra.mxu0 0
      %950 = vmatprep.subr.bf16.mxu0 0
      %951 = vmatpush1.bf16.xpose.msra.mxu0 0
      %952 = vmatprep.subr.bf16.mxu0 0
      %953 = vmatpush1.bf16.xpose.msra.mxu0 0
      %954 = vmatprep.subr.bf16.mxu0 0
      %955 = vmatpush1.bf16.xpose.msra.mxu0 0
      %956 = vmatprep.subr.bf16.mxu0 0
      %957 = vmatpush1.bf16.xpose.msra.mxu0 0
      %958 = vmatprep.mubr.bf16.mxu0 0
      %959 = vmatmul.mubr.bf16.gmra.mrb[0].mxu0 %v915
      %v960 = vpop.f32.mrb[0].mxu0
      %v961 = vadd.f32 0.0, %v960
      %v962 = vpop.f32.mrb[0].mxu0
      %v963 = vpop.f32.mrb[0].mxu0
      %v964 = vadd.f32 0.0, %v963
      %v965 = vpop.f32.mrb[0].mxu0
      %966 = vmatprep.mubr.bf16.mxu0 0
      %967 = vmatmul.mubr.bf16.gmra.mrb[0].mxu0 %v918
      %v968 = vpop.f32.mrb[0].mxu0
      %v969 = vadd.f32 0.0, %v968
      %v970 = vpop.f32.mrb[0].mxu0
      %v971 = vpop.f32.mrb[0].mxu0
      %v972 = vadd.f32 0.0, %v971
      %v973 = vpop.f32.mrb[0].mxu0
      %974 = vdwg.mxu0
      %v976 = vsel %vm852, %v807, 0
      %v979 = vsel %vm852, %v809, 0
      %v982 = vsel %vm852, %v823, 0
      %v985 = vsel %vm852, %v825, 0
      %987 = vmatprep.subr.bf16.mxu0 0
      %988 = vmatpush1.bf16.xpose.msra.mxu0 %v982
      %989 = vmatprep.subr.bf16.mxu0 0
      %990 = vmatpush1.bf16.xpose.msra.mxu0 %v985
      %991 = vmatprep.subr.bf16.mxu0 0
      %992 = vmatpush1.bf16.xpose.msra.mxu0 0
      %993 = vmatprep.subr.bf16.mxu0 0
      %994 = vmatpush1.bf16.xpose.msra.mxu0 0
      %995 = vmatprep.subr.bf16.mxu0 0
      %996 = vmatpush1.bf16.xpose.msra.mxu0 0
      %997 = vmatprep.subr.bf16.mxu0 0
      %998 = vmatpush1.bf16.xpose.msra.mxu0 0
      %999 = vmatprep.subr.bf16.mxu0 0
      %1000 = vmatpush1.bf16.xpose.msra.mxu0 0
      %1001 = vmatprep.subr.bf16.mxu0 0
      %1002 = vmatpush1.bf16.xpose.msra.mxu0 0
      %1003 = vmatprep.subr.bf16.mxu0 0
      %1004 = vmatpush1.bf16.xpose.msra.mxu0 0
      %1005 = vmatprep.subr.bf16.mxu0 0
      %1006 = vmatpush1.bf16.xpose.msra.mxu0 0
      %1007 = vmatprep.subr.bf16.mxu0 0
      %1008 = vmatpush1.bf16.xpose.msra.mxu0 0
      %1009 = vmatprep.subr.bf16.mxu0 0
      %1010 = vmatpush1.bf16.xpose.msra.mxu0 0
      %1011 = vmatprep.subr.bf16.mxu0 0
      %1012 = vmatpush1.bf16.xpose.msra.mxu0 0
      %1013 = vmatprep.subr.bf16.mxu0 0
      %1014 = vmatpush1.bf16.xpose.msra.mxu0 0
      %1015 = vmatprep.subr.bf16.mxu0 0
      %1016 = vmatpush1.bf16.xpose.msra.mxu0 0
      %1017 = vmatprep.subr.bf16.mxu0 0
      %1018 = vmatpush1.bf16.xpose.msra.mxu0 0
      %1019 = vmatprep.mubr.bf16.mxu0 0
      %1020 = vmatmul.mubr.bf16.gmra.mrb[0].mxu0 %v976
      %v1021 = vpop.f32.mrb[0].mxu0
      %v1022 = vadd.f32 0.0, %v1021
      %v1023 = vpop.f32.mrb[0].mxu0
      %v1024 = vpop.f32.mrb[0].mxu0
      %v1025 = vadd.f32 0.0, %v1024
      %v1026 = vpop.f32.mrb[0].mxu0
      %1027 = vmatprep.mubr.bf16.mxu0 0
      %1028 = vmatmul.mubr.bf16.gmra.mrb[0].mxu0 %v979
      %v1029 = vpop.f32.mrb[0].mxu0
      %v1030 = vadd.f32 0.0, %v1029
      %v1031 = vpop.f32.mrb[0].mxu0
      %v1032 = vpop.f32.mrb[0].mxu0
      %v1033 = vadd.f32 0.0, %v1032
      %v1034 = vpop.f32.mrb[0].mxu0
      %1035 = vdwg.mxu0
      %v1037 = vsel %vm852, %v811, 0
      %v1040 = vsel %vm852, %v813, 0
      %v1043 = vsel %vm852, %v827, 0
      %v1046 = vsel %vm852, %v829, 0
      %1048 = vmatprep.subr.bf16.mxu0 0
      %1049 = vmatpush1.bf16.xpose.msra.mxu0 %v1043
      %1050 = vmatprep.subr.bf16.mxu0 0
      %1051 = vmatpush1.bf16.xpose.msra.mxu0 %v1046
      %1052 = vmatprep.subr.bf16.mxu0 0
      %1053 = vmatpush1.bf16.xpose.msra.mxu0 0
      %1054 = vmatprep.subr.bf16.mxu0 0
      %1055 = vmatpush1.bf16.xpose.msra.mxu0 0
      %1056 = vmatprep.subr.bf16.mxu0 0
      %1057 = vmatpush1.bf16.xpose.msra.mxu0 0
      %1058 = vmatprep.subr.bf16.mxu0 0
      %1059 = vmatpush1.bf16.xpose.msra.mxu0 0
      %1060 = vmatprep.subr.bf16.mxu0 0
      %1061 = vmatpush1.bf16.xpose.msra.mxu0 0
      %1062 = vmatprep.subr.bf16.mxu0 0
      %1063 = vmatpush1.bf16.xpose.msra.mxu0 0
      %1064 = vmatprep.subr.bf16.mxu0 0
      %1065 = vmatpush1.bf16.xpose.msra.mxu0 0
      %1066 = vmatprep.subr.bf16.mxu0 0
      %1067 = vmatpush1.bf16.xpose.msra.mxu0 0
      %1068 = vmatprep.subr.bf16.mxu0 0
      %1069 = vmatpush1.bf16.xpose.msra.mxu0 0
      %1070 = vmatprep.subr.bf16.mxu0 0
      %1071 = vmatpush1.bf16.xpose.msra.mxu0 0
      %1072 = vmatprep.subr.bf16.mxu0 0
      %1073 = vmatpush1.bf16.xpose.msra.mxu0 0
      %1074 = vmatprep.subr.bf16.mxu0 0
      %1075 = vmatpush1.bf16.xpose.msra.mxu0 0
      %1076 = vmatprep.subr.bf16.mxu0 0
      %1077 = vmatpush1.bf16.xpose.msra.mxu0 0
      %1078 = vmatprep.subr.bf16.mxu0 0
      %1079 = vmatpush1.bf16.xpose.msra.mxu0 0
      %1080 = vmatprep.mubr.bf16.mxu0 0
      %1081 = vmatmul.mubr.bf16.gmra.mrb[0].mxu0 %v1037
      %v1082 = vpop.f32.mrb[0].mxu0
      %v1083 = vadd.f32 0.0, %v1082
      %v1084 = vpop.f32.mrb[0].mxu0
      %v1085 = vpop.f32.mrb[0].mxu0
      %v1086 = vadd.f32 0.0, %v1085
      %v1087 = vpop.f32.mrb[0].mxu0
      %1088 = vmatprep.mubr.bf16.mxu0 0
      %1089 = vmatmul.mubr.bf16.gmra.mrb[0].mxu0 %v1040
      %v1090 = vpop.f32.mrb[0].mxu0
      %v1091 = vadd.f32 0.0, %v1090
      %v1092 = vpop.f32.mrb[0].mxu0
      %v1093 = vpop.f32.mrb[0].mxu0
      %v1094 = vadd.f32 0.0, %v1093
      %v1095 = vpop.f32.mrb[0].mxu0
      %1096 = vdwg.mxu0
      %v1097 = vlaneseq
      %v1098 = vand.u32 %v1097, 127
      %vm1099 = vcmp.lt.s32.totalorder %v1098, 17
      %v1100 = vsel %vm1099, %v900, -1e+30
      %v1101 = vsel %vm1099, %v903, -1e+30
      %v1102 = vsel %vm1099, %v908, -1e+30
      %v1103 = vsel %vm1099, %v911, -1e+30
      %v1104 = vsel %vm1099, %v961, -1e+30
      %v1105 = vsel %vm1099, %v964, -1e+30
      %v1106 = vsel %vm1099, %v969, -1e+30
      %v1107 = vsel %vm1099, %v972, -1e+30
      %v1108 = vsel %vm1099, %v1022, -1e+30
      %v1109 = vsel %vm1099, %v1025, -1e+30
      %v1110 = vsel %vm1099, %v1030, -1e+30
      %v1111 = vsel %vm1099, %v1033, -1e+30
      %v1112 = vsel %vm1099, %v1083, -1e+30
      %v1113 = vsel %vm1099, %v1086, -1e+30
      %v1114 = vsel %vm1099, %v1091, -1e+30
      %v1115 = vsel %vm1099, %v1094, -1e+30
      %v1116 = vsel %vm852, %v1100, -inf
      %1117 = vmax.xlane.f32.xlu0 %v1116
      %v1118 = vpop.xlane.xlu0 %1117
      %v1119 = vsel %vm852, %v1101, -inf
      %1120 = vmax.xlane.f32.xlu0 %v1119
      %v1121 = vpop.xlane.xlu0 %1120
      %v1122 = vsel %vm852, %v1102, -inf
      %1123 = vmax.xlane.f32.xlu0 %v1122
      %v1124 = vpop.xlane.xlu0 %1123
      %v1125 = vsel %vm852, %v1103, -inf
      %1126 = vmax.xlane.f32.xlu0 %v1125
      %v1127 = vpop.xlane.xlu0 %1126
      %v1128 = vsel %vm852, %v1104, -inf
      %1129 = vmax.xlane.f32.xlu0 %v1128
      %v1130 = vpop.xlane.xlu0 %1129
      %v1131 = vsel %vm852, %v1105, -inf
      %1132 = vmax.xlane.f32.xlu0 %v1131
      %v1133 = vpop.xlane.xlu0 %1132
      %v1134 = vsel %vm852, %v1106, -inf
      %1135 = vmax.xlane.f32.xlu0 %v1134
      %v1136 = vpop.xlane.xlu0 %1135
      %v1137 = vsel %vm852, %v1107, -inf
      %1138 = vmax.xlane.f32.xlu0 %v1137
      %v1139 = vpop.xlane.xlu0 %1138
      %v1140 = vsel %vm852, %v1108, -inf
      %1141 = vmax.xlane.f32.xlu0 %v1140
      %v1142 = vpop.xlane.xlu0 %1141
      %v1143 = vsel %vm852, %v1109, -inf
      %1144 = vmax.xlane.f32.xlu0 %v1143
      %v1145 = vpop.xlane.xlu0 %1144
      %v1146 = vsel %vm852, %v1110, -inf
      %1147 = vmax.xlane.f32.xlu0 %v1146
      %v1148 = vpop.xlane.xlu0 %1147
      %v1149 = vsel %vm852, %v1111, -inf
      %1150 = vmax.xlane.f32.xlu0 %v1149
      %v1151 = vpop.xlane.xlu0 %1150
      %v1152 = vsel %vm852, %v1112, -inf
      %1153 = vmax.xlane.f32.xlu0 %v1152
      %v1154 = vpop.xlane.xlu0 %1153
      %v1155 = vsel %vm852, %v1113, -inf
      %1156 = vmax.xlane.f32.xlu0 %v1155
      %v1157 = vpop.xlane.xlu0 %1156
      %v1158 = vsel %vm852, %v1114, -inf
      %1159 = vmax.xlane.f32.xlu0 %v1158
      %v1160 = vpop.xlane.xlu0 %1159
      %v1161 = vsel %vm852, %v1115, -inf
      %1162 = vmax.xlane.f32.xlu0 %v1161
      %v1163 = vpop.xlane.xlu0 %1162
      %v1164 = vsub.f32 %v1100, %v1118
      %v1165 = vsub.f32 %v1101, %v1121
      %v1166 = vsub.f32 %v1102, %v1124
      %v1167 = vsub.f32 %v1103, %v1127
      %v1168 = vsub.f32 %v1104, %v1130
      %v1169 = vsub.f32 %v1105, %v1133
      %v1170 = vsub.f32 %v1106, %v1136
      %v1171 = vsub.f32 %v1107, %v1139
      %v1172 = vsub.f32 %v1108, %v1142
      %v1173 = vsub.f32 %v1109, %v1145
      %v1174 = vsub.f32 %v1110, %v1148
      %v1175 = vsub.f32 %v1111, %v1151
      %v1176 = vsub.f32 %v1112, %v1154
      %v1177 = vsub.f32 %v1113, %v1157
      %v1178 = vsub.f32 %v1114, %v1160
      %v1179 = vsub.f32 %v1115, %v1163
      %v1180 = vmul.f32 %v1164, 1.442695
      %v1181 = vpow.pop %v1180
      %v1182 = vmul.f32 %v1165, 1.442695
      %v1183 = vpow.pop %v1182
      %v1184 = vmul.f32 %v1166, 1.442695
      %v1185 = vpow.pop %v1184
      %v1186 = vmul.f32 %v1167, 1.442695
      %v1187 = vpow.pop %v1186
      %v1188 = vmul.f32 %v1168, 1.442695
      %v1189 = vpow.pop %v1188
      %v1190 = vmul.f32 %v1169, 1.442695
      %v1191 = vpow.pop %v1190
      %v1192 = vmul.f32 %v1170, 1.442695
      %v1193 = vpow.pop %v1192
      %v1194 = vmul.f32 %v1171, 1.442695
      %v1195 = vpow.pop %v1194
      %v1196 = vmul.f32 %v1172, 1.442695
      %v1197 = vpow.pop %v1196
      %v1198 = vmul.f32 %v1173, 1.442695
      %v1199 = vpow.pop %v1198
      %v1200 = vmul.f32 %v1174, 1.442695
      %v1201 = vpow.pop %v1200
      %v1202 = vmul.f32 %v1175, 1.442695
      %v1203 = vpow.pop %v1202
      %v1204 = vmul.f32 %v1176, 1.442695
      %v1205 = vpow.pop %v1204
      %v1206 = vmul.f32 %v1177, 1.442695
      %v1207 = vpow.pop %v1206
      %v1208 = vmul.f32 %v1178, 1.442695
      %v1209 = vpow.pop %v1208
      %v1210 = vmul.f32 %v1179, 1.442695
      %v1211 = vpow.pop %v1210
      %v1212 = vsel %vm852, %v1181, 0.0
      %1213 = vadd.xlane.f32.xlu0 %v1212
      %v1214 = vpop.xlane.xlu0 %1213
      %v1215 = vsel %vm852, %v1183, 0.0
      %1216 = vadd.xlane.f32.xlu0 %v1215
      %v1217 = vpop.xlane.xlu0 %1216
      %v1218 = vsel %vm852, %v1185, 0.0
      %1219 = vadd.xlane.f32.xlu0 %v1218
      %v1220 = vpop.xlane.xlu0 %1219
      %v1221 = vsel %vm852, %v1187, 0.0
      %1222 = vadd.xlane.f32.xlu0 %v1221
      %v1223 = vpop.xlane.xlu0 %1222
      %v1224 = vsel %vm852, %v1189, 0.0
      %1225 = vadd.xlane.f32.xlu0 %v1224
      %v1226 = vpop.xlane.xlu0 %1225
      %v1227 = vsel %vm852, %v1191, 0.0
      %1228 = vadd.xlane.f32.xlu0 %v1227
      %v1229 = vpop.xlane.xlu0 %1228
      %v1230 = vsel %vm852, %v1193, 0.0
      %1231 = vadd.xlane.f32.xlu0 %v1230
      %v1232 = vpop.xlane.xlu0 %1231
      %v1233 = vsel %vm852, %v1195, 0.0
      %1234 = vadd.xlane.f32.xlu0 %v1233
      %v1235 = vpop.xlane.xlu0 %1234
      %v1236 = vsel %vm852, %v1197, 0.0
      %1237 = vadd.xlane.f32.xlu0 %v1236
      %v1238 = vpop.xlane.xlu0 %1237
      %v1239 = vsel %vm852, %v1199, 0.0
      %1240 = vadd.xlane.f32.xlu0 %v1239
      %v1241 = vpop.xlane.xlu0 %1240
      %v1242 = vsel %vm852, %v1201, 0.0
      %1243 = vadd.xlane.f32.xlu0 %v1242
      %v1244 = vpop.xlane.xlu0 %1243
      %v1245 = vsel %vm852, %v1203, 0.0
      %1246 = vadd.xlane.f32.xlu0 %v1245
      %v1247 = vpop.xlane.xlu0 %1246
      %v1248 = vsel %vm852, %v1205, 0.0
      %1249 = vadd.xlane.f32.xlu0 %v1248
      %v1250 = vpop.xlane.xlu0 %1249
      %v1251 = vsel %vm852, %v1207, 0.0
      %1252 = vadd.xlane.f32.xlu0 %v1251
      %v1253 = vpop.xlane.xlu0 %1252
      %v1254 = vsel %vm852, %v1209, 0.0
      %1255 = vadd.xlane.f32.xlu0 %v1254
      %v1256 = vpop.xlane.xlu0 %1255
      %v1257 = vsel %vm852, %v1211, 0.0
      %1258 = vadd.xlane.f32.xlu0 %v1257
      %v1259 = vpop.xlane.xlu0 %1258
      %v1260 = vrcp.pop %v1214
      %v1261 = vrcp.pop %v1217
      %v1262 = vrcp.pop %v1220
      %v1263 = vrcp.pop %v1223
      %v1264 = vrcp.pop %v1226
      %v1265 = vrcp.pop %v1229
      %v1266 = vrcp.pop %v1232
      %v1267 = vrcp.pop %v1235
      %v1268 = vrcp.pop %v1238
      %v1269 = vrcp.pop %v1241
      %v1270 = vrcp.pop %v1244
      %v1271 = vrcp.pop %v1247
      %v1272 = vrcp.pop %v1250
      %v1273 = vrcp.pop %v1253
      %v1274 = vrcp.pop %v1256
      %v1275 = vrcp.pop %v1259
      %v1276 = vpack.c.bf16 %v1183, %v1181
      %v1277 = vpack.c.bf16 %v1187, %v1185
      %v1278 = vpack.c.bf16 %v1191, %v1189
      %v1279 = vpack.c.bf16 %v1195, %v1193
      %v1280 = vpack.c.bf16 %v1199, %v1197
      %v1281 = vpack.c.bf16 %v1203, %v1201
      %v1282 = vpack.c.bf16 %v1207, %v1205
      %v1283 = vpack.c.bf16 %v1211, %v1209
      %v1285 = vsel %vm852, %v1276, 0
      %v1288 = vsel %vm852, %v1277, 0
      %1290 = vmatprep.subr.bf16.mxu0 0
      %1291 = vmatpush1.bf16.msra.mxu0 %v830
      %1292 = vmatprep.subr.bf16.mxu0 0
      %1293 = vmatpush1.bf16.msra.mxu0 %v831
      %1294 = vmatprep.subr.bf16.mxu0 0
      %1295 = vmatpush1.bf16.msra.mxu0 0
      %1296 = vmatprep.subr.bf16.mxu0 0
      %1297 = vmatpush1.bf16.msra.mxu0 0
      %1298 = vmatprep.subr.bf16.mxu0 0
      %1299 = vmatpush1.bf16.msra.mxu0 0
      %1300 = vmatprep.subr.bf16.mxu0 0
      %1301 = vmatpush1.bf16.msra.mxu0 0
      %1302 = vmatprep.subr.bf16.mxu0 0
      %1303 = vmatpush1.bf16.msra.mxu0 0
      %1304 = vmatprep.subr.bf16.mxu0 0
      %1305 = vmatpush1.bf16.msra.mxu0 0
      %1306 = vmatprep.subr.bf16.mxu0 0
      %1307 = vmatpush1.bf16.msra.mxu0 0
      %1308 = vmatprep.subr.bf16.mxu0 0
      %1309 = vmatpush1.bf16.msra.mxu0 0
      %1310 = vmatprep.subr.bf16.mxu0 0
      %1311 = vmatpush1.bf16.msra.mxu0 0
      %1312 = vmatprep.subr.bf16.mxu0 0
      %1313 = vmatpush1.bf16.msra.mxu0 0
      %1314 = vmatprep.subr.bf16.mxu0 0
      %1315 = vmatpush1.bf16.msra.mxu0 0
      %1316 = vmatprep.subr.bf16.mxu0 0
      %1317 = vmatpush1.bf16.msra.mxu0 0
      %1318 = vmatprep.subr.bf16.mxu0 0
      %1319 = vmatpush1.bf16.msra.mxu0 0
      %1320 = vmatprep.subr.bf16.mxu0 0
      %1321 = vmatpush1.bf16.msra.mxu0 0
      %1322 = vmatprep.mubr.bf16.mxu0 0
      %1323 = vmatmul.mubr.bf16.gmra.mrb[0].mxu0 %v1285
      %v1324 = vpop.f32.mrb[0].mxu0
      %v1325 = vadd.f32 0.0, %v1324
      %v1326 = vpop.f32.mrb[0].mxu0
      %v1327 = vpop.f32.mrb[0].mxu0
      %v1328 = vadd.f32 0.0, %v1327
      %v1329 = vpop.f32.mrb[0].mxu0
      %1330 = vmatprep.mubr.bf16.mxu0 0
      %1331 = vmatmul.mubr.bf16.gmra.mrb[0].mxu0 %v1288
      %v1332 = vpop.f32.mrb[0].mxu0
      %v1333 = vadd.f32 0.0, %v1332
      %v1334 = vpop.f32.mrb[0].mxu0
      %v1335 = vpop.f32.mrb[0].mxu0
      %v1336 = vadd.f32 0.0, %v1335
      %v1337 = vpop.f32.mrb[0].mxu0
      %1338 = vdwg.mxu0
      %v1340 = vsel %vm852, %v1278, 0
      %v1343 = vsel %vm852, %v1279, 0
      %1345 = vmatprep.subr.bf16.mxu0 0
      %1346 = vmatpush1.bf16.msra.mxu0 %v835
      %1347 = vmatprep.subr.bf16.mxu0 0
      %1348 = vmatpush1.bf16.msra.mxu0 %v837
      %1349 = vmatprep.subr.bf16.mxu0 0
      %1350 = vmatpush1.bf16.msra.mxu0 0
      %1351 = vmatprep.subr.bf16.mxu0 0
      %1352 = vmatpush1.bf16.msra.mxu0 0
      %1353 = vmatprep.subr.bf16.mxu0 0
      %1354 = vmatpush1.bf16.msra.mxu0 0
      %1355 = vmatprep.subr.bf16.mxu0 0
      %1356 = vmatpush1.bf16.msra.mxu0 0
      %1357 = vmatprep.subr.bf16.mxu0 0
      %1358 = vmatpush1.bf16.msra.mxu0 0
      %1359 = vmatprep.subr.bf16.mxu0 0
      %1360 = vmatpush1.bf16.msra.mxu0 0
      %1361 = vmatprep.subr.bf16.mxu0 0
      %1362 = vmatpush1.bf16.msra.mxu0 0
      %1363 = vmatprep.subr.bf16.mxu0 0
      %1364 = vmatpush1.bf16.msra.mxu0 0
      %1365 = vmatprep.subr.bf16.mxu0 0
      %1366 = vmatpush1.bf16.msra.mxu0 0
      %1367 = vmatprep.subr.bf16.mxu0 0
      %1368 = vmatpush1.bf16.msra.mxu0 0
      %1369 = vmatprep.subr.bf16.mxu0 0
      %1370 = vmatpush1.bf16.msra.mxu0 0
      %1371 = vmatprep.subr.bf16.mxu0 0
      %1372 = vmatpush1.bf16.msra.mxu0 0
      %1373 = vmatprep.subr.bf16.mxu0 0
      %1374 = vmatpush1.bf16.msra.mxu0 0
      %1375 = vmatprep.subr.bf16.mxu0 0
      %1376 = vmatpush1.bf16.msra.mxu0 0
      %1377 = vmatprep.mubr.bf16.mxu0 0
      %1378 = vmatmul.mubr.bf16.gmra.mrb[0].mxu0 %v1340
      %v1379 = vpop.f32.mrb[0].mxu0
      %v1380 = vadd.f32 0.0, %v1379
      %v1381 = vpop.f32.mrb[0].mxu0
      %v1382 = vpop.f32.mrb[0].mxu0
      %v1383 = vadd.f32 0.0, %v1382
      %v1384 = vpop.f32.mrb[0].mxu0
      %1385 = vmatprep.mubr.bf16.mxu0 0
      %1386 = vmatmul.mubr.bf16.gmra.mrb[0].mxu0 %v1343
      %v1387 = vpop.f32.mrb[0].mxu0
      %v1388 = vadd.f32 0.0, %v1387
      %v1389 = vpop.f32.mrb[0].mxu0
      %v1390 = vpop.f32.mrb[0].mxu0
      %v1391 = vadd.f32 0.0, %v1390
      %v1392 = vpop.f32.mrb[0].mxu0
      %1393 = vdwg.mxu0
      %v1395 = vsel %vm852, %v1280, 0
      %v1398 = vsel %vm852, %v1281, 0
      %1400 = vmatprep.subr.bf16.mxu0 0
      %1401 = vmatpush1.bf16.msra.mxu0 %v841
      %1402 = vmatprep.subr.bf16.mxu0 0
      %1403 = vmatpush1.bf16.msra.mxu0 %v843
      %1404 = vmatprep.subr.bf16.mxu0 0
      %1405 = vmatpush1.bf16.msra.mxu0 0
      %1406 = vmatprep.subr.bf16.mxu0 0
      %1407 = vmatpush1.bf16.msra.mxu0 0
      %1408 = vmatprep.subr.bf16.mxu0 0
      %1409 = vmatpush1.bf16.msra.mxu0 0
      %1410 = vmatprep.subr.bf16.mxu0 0
      %1411 = vmatpush1.bf16.msra.mxu0 0
      %1412 = vmatprep.subr.bf16.mxu0 0
      %1413 = vmatpush1.bf16.msra.mxu0 0
      %1414 = vmatprep.subr.bf16.mxu0 0
      %1415 = vmatpush1.bf16.msra.mxu0 0
      %1416 = vmatprep.subr.bf16.mxu0 0
      %1417 = vmatpush1.bf16.msra.mxu0 0
      %1418 = vmatprep.subr.bf16.mxu0 0
      %1419 = vmatpush1.bf16.msra.mxu0 0
      %1420 = vmatprep.subr.bf16.mxu0 0
      %1421 = vmatpush1.bf16.msra.mxu0 0
      %1422 = vmatprep.subr.bf16.mxu0 0
      %1423 = vmatpush1.bf16.msra.mxu0 0
      %1424 = vmatprep.subr.bf16.mxu0 0
      %1425 = vmatpush1.bf16.msra.mxu0 0
      %1426 = vmatprep.subr.bf16.mxu0 0
      %1427 = vmatpush1.bf16.msra.mxu0 0
      %1428 = vmatprep.subr.bf16.mxu0 0
      %1429 = vmatpush1.bf16.msra.mxu0 0
      %1430 = vmatprep.subr.bf16.mxu0 0
      %1431 = vmatpush1.bf16.msra.mxu0 0
      %1432 = vmatprep.mubr.bf16.mxu0 0
      %1433 = vmatmul.mubr.bf16.gmra.mrb[0].mxu0 %v1395
      %v1434 = vpop.f32.mrb[0].mxu0
      %v1435 = vadd.f32 0.0, %v1434
      %v1436 = vpop.f32.mrb[0].mxu0
      %v1437 = vpop.f32.mrb[0].mxu0
      %v1438 = vadd.f32 0.0, %v1437
      %v1439 = vpop.f32.mrb[0].mxu0
      %1440 = vmatprep.mubr.bf16.mxu0 0
      %1441 = vmatmul.mubr.bf16.gmra.mrb[0].mxu0 %v1398
      %v1442 = vpop.f32.mrb[0].mxu0
      %v1443 = vadd.f32 0.0, %v1442
      %v1444 = vpop.f32.mrb[0].mxu0
      %v1445 = vpop.f32.mrb[0].mxu0
      %v1446 = vadd.f32 0.0, %v1445
      %v1447 = vpop.f32.mrb[0].mxu0
      %1448 = vdwg.mxu0
      %v1450 = vsel %vm852, %v1282, 0
      %v1453 = vsel %vm852, %v1283, 0
      %1455 = vmatprep.subr.bf16.mxu0 0
      %1456 = vmatpush1.bf16.msra.mxu0 %v847
      %1457 = vmatprep.subr.bf16.mxu0 0
      %1458 = vmatpush1.bf16.msra.mxu0 %v849
      %1459 = vmatprep.subr.bf16.mxu0 0
      %1460 = vmatpush1.bf16.msra.mxu0 0
      %1461 = vmatprep.subr.bf16.mxu0 0
      %1462 = vmatpush1.bf16.msra.mxu0 0
      %1463 = vmatprep.subr.bf16.mxu0 0
      %1464 = vmatpush1.bf16.msra.mxu0 0
      %1465 = vmatprep.subr.bf16.mxu0 0
      %1466 = vmatpush1.bf16.msra.mxu0 0
      %1467 = vmatprep.subr.bf16.mxu0 0
      %1468 = vmatpush1.bf16.msra.mxu0 0
      %1469 = vmatprep.subr.bf16.mxu0 0
      %1470 = vmatpush1.bf16.msra.mxu0 0
      %1471 = vmatprep.subr.bf16.mxu0 0
      %1472 = vmatpush1.bf16.msra.mxu0 0
      %1473 = vmatprep.subr.bf16.mxu0 0
      %1474 = vmatpush1.bf16.msra.mxu0 0
      %1475 = vmatprep.subr.bf16.mxu0 0
      %1476 = vmatpush1.bf16.msra.mxu0 0
      %1477 = vmatprep.subr.bf16.mxu0 0
      %1478 = vmatpush1.bf16.msra.mxu0 0
      %1479 = vmatprep.subr.bf16.mxu0 0
      %1480 = vmatpush1.bf16.msra.mxu0 0
      %1481 = vmatprep.subr.bf16.mxu0 0
      %1482 = vmatpush1.bf16.msra.mxu0 0
      %1483 = vmatprep.subr.bf16.mxu0 0
      %1484 = vmatpush1.bf16.msra.mxu0 0
      %1485 = vmatprep.subr.bf16.mxu0 0
      %1486 = vmatpush1.bf16.msra.mxu0 0
      %1487 = vmatprep.mubr.bf16.mxu0 0
      %1488 = vmatmul.mubr.bf16.gmra.mrb[0].mxu0 %v1450
      %v1489 = vpop.f32.mrb[0].mxu0
      %v1490 = vadd.f32 0.0, %v1489
      %v1491 = vpop.f32.mrb[0].mxu0
      %v1492 = vpop.f32.mrb[0].mxu0
      %v1493 = vadd.f32 0.0, %v1492
      %v1494 = vpop.f32.mrb[0].mxu0
      %1495 = vmatprep.mubr.bf16.mxu0 0
      %1496 = vmatmul.mubr.bf16.gmra.mrb[0].mxu0 %v1453
      %v1497 = vpop.f32.mrb[0].mxu0
      %v1498 = vadd.f32 0.0, %v1497
      %v1499 = vpop.f32.mrb[0].mxu0
      %v1500 = vpop.f32.mrb[0].mxu0
      %v1501 = vadd.f32 0.0, %v1500
      %v1502 = vpop.f32.mrb[0].mxu0
      %1503 = vdwg.mxu0
      %v1504 = vmul.f32 %v1325, %v1260
      %v1505 = vmul.f32 %v1328, %v1261
      %v1506 = vmul.f32 %v1333, %v1262
      %v1507 = vmul.f32 %v1336, %v1263
      %v1508 = vmul.f32 %v1380, %v1264
      %v1509 = vmul.f32 %v1383, %v1265
      %v1510 = vmul.f32 %v1388, %v1266
      %v1511 = vmul.f32 %v1391, %v1267
      %v1512 = vmul.f32 %v1435, %v1268
      %v1513 = vmul.f32 %v1438, %v1269
      %v1514 = vmul.f32 %v1443, %v1270
      %v1515 = vmul.f32 %v1446, %v1271
      %v1516 = vmul.f32 %v1490, %v1272
      %v1517 = vmul.f32 %v1493, %v1273
      %v1518 = vmul.f32 %v1498, %v1274
      %v1519 = vmul.f32 %v1501, %v1275
      %1520 = vst.msk [vmem:[#allocation2] sm:$0xff] %vm852, %v1504
      %1521 = vst.msk [vmem:[#allocation2 + $0x8] sm:$0xff] %vm852, %v1505
      %1522 = vst.msk [vmem:[#allocation2 + $0x10] sm:$0xff] %vm852, %v1506
      %1523 = vst.msk [vmem:[#allocation2 + $0x18] sm:$0xff] %vm852, %v1507
      %1528 = vrot.lane.b32.xlu0 %v1508, 32
      %v1529 = vpop.permute.xlu0 %1528
      %1530 = vrot.lane.b32.xlu0 %v1509, 32
      %v1531 = vpop.permute.xlu0 %1530
      %1532 = vrot.lane.b32.xlu0 %v1510, 32
      %v1533 = vpop.permute.xlu0 %1532
      %1534 = vrot.lane.b32.xlu0 %v1511, 32
      %v1535 = vpop.permute.xlu0 %1534
      %vm1540 = vcmask 523520
      %1541 = vst.msk [vmem:[#allocation2] sm:$0xff] %vm1540, %v1529
      %1542 = vst.msk [vmem:[#allocation2 + $0x8] sm:$0xff] %vm1540, %v1531
      %1543 = vst.msk [vmem:[#allocation2 + $0x10] sm:$0xff] %vm1540, %v1533
      %1544 = vst.msk [vmem:[#allocation2 + $0x18] sm:$0xff] %vm1540, %v1535
      %1549 = vrot.lane.b32.xlu0 %v1512, 64
      %v1550 = vpop.permute.xlu0 %1549
      %1551 = vrot.lane.b32.xlu0 %v1513, 64
      %v1552 = vpop.permute.xlu0 %1551
      %1553 = vrot.lane.b32.xlu0 %v1514, 64
      %v1554 = vpop.permute.xlu0 %1553
      %1555 = vrot.lane.b32.xlu0 %v1515, 64
      %v1556 = vpop.permute.xlu0 %1555
      %vm1561 = vcmask 785920
      %1562 = vst.msk [vmem:[#allocation2] sm:$0xff] %vm1561, %v1550
      %1563 = vst.msk [vmem:[#allocation2 + $0x8] sm:$0xff] %vm1561, %v1552
      %1564 = vst.msk [vmem:[#allocation2 + $0x10] sm:$0xff] %vm1561, %v1554
      %1565 = vst.msk [vmem:[#allocation2 + $0x18] sm:$0xff] %vm1561, %v1556
      %1570 = vrot.lane.b32.xlu0 %v1516, 96
      %v1571 = vpop.permute.xlu0 %1570
      %1572 = vrot.lane.b32.xlu0 %v1517, 96
      %v1573 = vpop.permute.xlu0 %1572
      %1574 = vrot.lane.b32.xlu0 %v1518, 96
      %v1575 = vpop.permute.xlu0 %1574
      %1576 = vrot.lane.b32.xlu0 %v1519, 96
      %v1577 = vpop.permute.xlu0 %1576
      %vm1582 = vcmask 1048320
      %1583 = vst.msk [vmem:[#allocation2] sm:$0xff] %vm1582, %v1571
      %1584 = vst.msk [vmem:[#allocation2 + $0x8] sm:$0xff] %vm1582, %v1573
      %1585 = vst.msk [vmem:[#allocation2 + $0x10] sm:$0xff] %vm1582, %v1575
      %1586 = vst.msk [vmem:[#allocation2 + $0x18] sm:$0xff] %vm1582, %v1577
      %v1587 = vld [vmem:[#allocation2] sm:$0xff]
      %v1588 = vld [vmem:[#allocation2 + $0x8] sm:$0xff]
      %v1589 = vld [vmem:[#allocation2 + $0x10] sm:$0xff]
      %v1590 = vld [vmem:[#allocation2 + $0x18] sm:$0xff]
      %v1591 = vpack.c.bf16 %v1588, %v1587
      %v1592 = vpack.c.bf16 %v1590, %v1589
      %v1593 = vld [vmem:[%s5] sm:$0xf]
      %v1594 = vld [vmem:[%s5 + $0x4] sm:$0xf]
      %v1595 = vld [vmem:[%s5 + $0x8] sm:$0xf]
      %v1596 = vld [vmem:[%s5 + $0xc] sm:$0xf]
      %v1597 = vld [vmem:[%s5 + $0x10] sm:$0xf]
      %v1598 = vld [vmem:[%s5 + $0x14] sm:$0xf]
      %v1599 = vld [vmem:[%s5 + $0x18] sm:$0xf]
      %v1600 = vld [vmem:[%s5 + $0x1c] sm:$0xf]
      %v1601 = vld [vmem:[%s5 + $0x20] sm:$0xf]
      %v1602 = vld [vmem:[%s5 + $0x24] sm:$0xf]
      %v1603 = vld [vmem:[%s5 + $0x28] sm:$0xf]
      %v1604 = vld [vmem:[%s5 + $0x2c] sm:$0xf]
      %v1605 = vld [vmem:[%s5 + $0x30] sm:$0xf]
      %v1606 = vld [vmem:[%s5 + $0x34] sm:$0xf]
      %v1607 = vld [vmem:[%s5 + $0x38] sm:$0xf]
      %v1608 = vld [vmem:[%s5 + $0x3c] sm:$0xf]
      %v1625 = vunpack.c.l.b16 %v1593
      %v1626 = vunpack.c.l.b16 %v1594
      %v1627 = vunpack.c.l.b16 %v1595
      %v1628 = vunpack.c.l.b16 %v1596
      %v1629 = vunpack.c.l.b16 %v1597
      %v1630 = vunpack.c.l.b16 %v1598
      %v1631 = vunpack.c.l.b16 %v1599
      %v1632 = vunpack.c.l.b16 %v1600
      %v1633 = vunpack.c.l.b16 %v1601
      %v1634 = vunpack.c.l.b16 %v1602
      %v1635 = vunpack.c.l.b16 %v1603
      %v1636 = vunpack.c.l.b16 %v1604
      %v1637 = vunpack.c.l.b16 %v1605
      %v1638 = vunpack.c.l.b16 %v1606
      %v1639 = vunpack.c.l.b16 %v1607
      %v1640 = vunpack.c.l.b16 %v1608
      %v1641 = vpack.c.b16 %v1626, %v1625
      %v1642 = vpack.c.b16 %v1628, %v1627
      %v1643 = vpack.c.b16 %v1630, %v1629
      %v1644 = vpack.c.b16 %v1632, %v1631
      %v1645 = vpack.c.b16 %v1634, %v1633
      %v1646 = vpack.c.b16 %v1636, %v1635
      %v1647 = vpack.c.b16 %v1638, %v1637
      %v1648 = vpack.c.b16 %v1640, %v1639
      %1657 = vmatprep.subr.bf16.mxu0 0
      %1658 = vmatpush1.bf16.msra.mxu0 %v1641
      %1659 = vmatprep.subr.bf16.mxu0 0
      %1660 = vmatpush1.bf16.msra.mxu0 %v1642
      %1661 = vmatprep.subr.bf16.mxu0 0
      %1662 = vmatpush1.bf16.msra.mxu0 %v1643
      %1663 = vmatprep.subr.bf16.mxu0 0
      %1664 = vmatpush1.bf16.msra.mxu0 %v1644
      %1665 = vmatprep.subr.bf16.mxu0 0
      %1666 = vmatpush1.bf16.msra.mxu0 %v1645
      %1667 = vmatprep.subr.bf16.mxu0 0
      %1668 = vmatpush1.bf16.msra.mxu0 %v1646
      %1669 = vmatprep.subr.bf16.mxu0 0
      %1670 = vmatpush1.bf16.msra.mxu0 %v1647
      %1671 = vmatprep.subr.bf16.mxu0 0
      %1672 = vmatpush1.bf16.msra.mxu0 %v1648
      %1673 = vmatprep.subr.bf16.mxu0 0
      %1674 = vmatpush1.bf16.msra.mxu0 0
      %1675 = vmatprep.subr.bf16.mxu0 0
      %1676 = vmatpush1.bf16.msra.mxu0 0
      %1677 = vmatprep.subr.bf16.mxu0 0
      %1678 = vmatpush1.bf16.msra.mxu0 0
      %1679 = vmatprep.subr.bf16.mxu0 0
      %1680 = vmatpush1.bf16.msra.mxu0 0
      %1681 = vmatprep.subr.bf16.mxu0 0
      %1682 = vmatpush1.bf16.msra.mxu0 0
      %1683 = vmatprep.subr.bf16.mxu0 0
      %1684 = vmatpush1.bf16.msra.mxu0 0
      %1685 = vmatprep.subr.bf16.mxu0 0
      %1686 = vmatpush1.bf16.msra.mxu0 0
      %1687 = vmatprep.subr.bf16.mxu0 0
      %1688 = vmatpush1.bf16.msra.mxu0 0
      %1689 = vmatprep.mubr.bf16.mxu0 0
      %1690 = vmatmul.mubr.bf16.gmra.mrb[0].mxu0 %v1591
      %v1691 = vpop.f32.mrb[0].mxu0
      %v1692 = vadd.f32 0.0, %v1691
      %v1693 = vpop.f32.mrb[0].mxu0
      %v1694 = vpop.f32.mrb[0].mxu0
      %v1695 = vadd.f32 0.0, %v1694
      %v1696 = vpop.f32.mrb[0].mxu0
      %1697 = vmatprep.mubr.bf16.mxu0 0
      %1698 = vmatmul.mubr.bf16.gmra.mrb[0].mxu0 %v1592
      %v1699 = vpop.f32.mrb[0].mxu0
      %v1700 = vadd.f32 0.0, %v1699
      %v1701 = vpop.f32.mrb[0].mxu0
      %v1702 = vpop.f32.mrb[0].mxu0
      %v1703 = vadd.f32 0.0, %v1702
      %v1704 = vpop.f32.mrb[0].mxu0
      %1705 = vdwg.mxu0
      %v1706 = vadd.f32 %v442, %v1692
      %v1707 = vadd.f32 %v443, %v1695
      %v1708 = vadd.f32 %v444, %v1700
      %v1709 = vadd.f32 %v445, %v1703
      %v1710 = vld [vmem:[%s6] sm:$0x1]
      %v1712 = vlaneseq
      %v1713 = vshrl.u32 %v1712, 7
      %v1714 = vsub.s32 0, %v1713
      %v1715 = vrot.slane %v1710, %v1714
      %v1717 = vadd.f32 %v1706, %v1715
      %v1718 = vadd.f32 %v1707, %v1715
      %v1719 = vadd.f32 %v1708, %v1715
      %v1720 = vadd.f32 %v1709, %v1715
      %v1721 = vld [vmem:[%s7] sm:$0x1]
      %v1722 = vld [vmem:[%s8] sm:$0x1]
      %1723 = vadd.xlane.f32.xlu0 %v1717
      %v1724 = vpop.xlane.xlu0 %1723
      %1725 = vadd.xlane.f32.xlu0 %v1718
      %v1726 = vpop.xlane.xlu0 %1725
      %1727 = vadd.xlane.f32.xlu0 %v1719
      %v1728 = vpop.xlane.xlu0 %1727
      %1729 = vadd.xlane.f32.xlu0 %v1720
      %v1730 = vpop.xlane.xlu0 %1729
      %v1731 = vmul.f32 %v1724, %v456
      %v1732 = vmul.f32 %v1726, %v456
      %v1733 = vmul.f32 %v1728, %v456
      %v1734 = vmul.f32 %v1730, %v456
      %v1735 = vsub.f32 %v1717, %v1731
      %v1736 = vsub.f32 %v1718, %v1732
      %v1737 = vsub.f32 %v1719, %v1733
      %v1738 = vsub.f32 %v1720, %v1734
      %v1739 = vmul.f32 %v1735, %v1735
      %v1740 = vmul.f32 %v1736, %v1736
      %v1741 = vmul.f32 %v1737, %v1737
      %v1742 = vmul.f32 %v1738, %v1738
      %1743 = vadd.xlane.f32.xlu0 %v1739
      %v1744 = vpop.xlane.xlu0 %1743
      %1745 = vadd.xlane.f32.xlu0 %v1740
      %v1746 = vpop.xlane.xlu0 %1745
      %1747 = vadd.xlane.f32.xlu0 %v1741
      %v1748 = vpop.xlane.xlu0 %1747
      %1749 = vadd.xlane.f32.xlu0 %v1742
      %v1750 = vpop.xlane.xlu0 %1749
      %v1751 = vmul.f32 %v1744, %v456
      %v1752 = vmul.f32 %v1746, %v456
      %v1753 = vmul.f32 %v1748, %v456
      %v1754 = vmul.f32 %v1750, %v456
      %v1755 = vadd.f32 %v1751, 1e-05
      %v1756 = vadd.f32 %v1752, 1e-05
      %v1757 = vadd.f32 %v1753, 1e-05
      %v1758 = vadd.f32 %v1754, 1e-05
      %v1759 = vrsqrt.pop %v1755
      %v1760 = vrsqrt.pop %v1756
      %v1761 = vrsqrt.pop %v1757
      %v1762 = vrsqrt.pop %v1758
      %v1763 = vmul.f32 %v1735, %v1759
      %v1764 = vmul.f32 %v1736, %v1760
      %v1765 = vmul.f32 %v1737, %v1761
      %v1766 = vmul.f32 %v1738, %v1762
      %v1768 = vlaneseq
      %v1769 = vshrl.u32 %v1768, 7
      %v1770 = vsub.s32 0, %v1769
      %v1771 = vrot.slane %v1721, %v1770
      %v1773 = vmul.f32 %v1763, %v1771
      %v1774 = vmul.f32 %v1764, %v1771
      %v1775 = vmul.f32 %v1765, %v1771
      %v1776 = vmul.f32 %v1766, %v1771
      %v1778 = vlaneseq
      %v1779 = vshrl.u32 %v1778, 7
      %v1780 = vsub.s32 0, %v1779
      %v1781 = vrot.slane %v1722, %v1780
      %v1783 = vadd.f32 %v1773, %v1781
      %v1784 = vadd.f32 %v1774, %v1781
      %v1785 = vadd.f32 %v1775, %v1781
      %v1786 = vadd.f32 %v1776, %v1781
      %v1787 = vpack.c.bf16 %v1784, %v1783
      %v1788 = vpack.c.bf16 %v1786, %v1785
      %v1789 = vld [vmem:[%s9] sm:$0xff]
      %v1790 = vld [vmem:[%s9 + $0x8] sm:$0xff]
      %v1791 = vld [vmem:[%s9 + $0x10] sm:$0xff]
      %v1792 = vld [vmem:[%s9 + $0x18] sm:$0xff]
      %v1793 = vld [vmem:[%s9 + $0x20] sm:$0xff]
      %v1794 = vld [vmem:[%s9 + $0x28] sm:$0xff]
      %v1795 = vld [vmem:[%s9 + $0x30] sm:$0xff]
      %v1796 = vld [vmem:[%s9 + $0x38] sm:$0xff]
      %v1797 = vld [vmem:[%s9 + $0x40] sm:$0xff]
      %v1798 = vld [vmem:[%s9 + $0x48] sm:$0xff]
      %v1799 = vld [vmem:[%s9 + $0x50] sm:$0xff]
      %v1800 = vld [vmem:[%s9 + $0x58] sm:$0xff]
      %v1801 = vld [vmem:[%s9 + $0x60] sm:$0xff]
      %v1802 = vld [vmem:[%s9 + $0x68] sm:$0xff]
      %v1803 = vld [vmem:[%s9 + $0x70] sm:$0xff]
      %v1804 = vld [vmem:[%s9 + $0x78] sm:$0xff]
      %v1805 = vld [vmem:[%s9 + $0x80] sm:$0xff]
      %v1806 = vld [vmem:[%s9 + $0x88] sm:$0xff]
      %v1807 = vld [vmem:[%s9 + $0x90] sm:$0xff]
      %v1808 = vld [vmem:[%s9 + $0x98] sm:$0xff]
      %v1809 = vld [vmem:[%s9 + $0xa0] sm:$0xff]
      %v1810 = vld [vmem:[%s9 + $0xa8] sm:$0xff]
      %v1811 = vld [vmem:[%s9 + $0xb0] sm:$0xff]
      %v1812 = vld [vmem:[%s9 + $0xb8] sm:$0xff]
      %v1813 = vld [vmem:[%s9 + $0xc0] sm:$0xff]
      %v1814 = vld [vmem:[%s9 + $0xc8] sm:$0xff]
      %v1815 = vld [vmem:[%s9 + $0xd0] sm:$0xff]
      %v1816 = vld [vmem:[%s9 + $0xd8] sm:$0xff]
      %v1817 = vld [vmem:[%s9 + $0xe0] sm:$0xff]
      %v1818 = vld [vmem:[%s9 + $0xe8] sm:$0xff]
      %v1819 = vld [vmem:[%s9 + $0xf0] sm:$0xff]
      %v1820 = vld [vmem:[%s9 + $0xf8] sm:$0xff]
      %v1821 = vld [vmem:[%s10] sm:$0xf]
      %v1823 = vlaneseq
      %v1824 = vshrl.u32 %v1823, 7
      %v1825 = vsub.s32 0, %v1824
      %v1826 = vrot.slane %v1821, %v1825
      %v1827 = vlaneseq
      %v1828 = vshrl.u32 %v1827, 7
      %v1829 = vsub.s32 1, %v1828
      %v1830 = vrot.slane %v1821, %v1829
      %v1831 = vlaneseq
      %v1832 = vshrl.u32 %v1831, 7
      %v1833 = vsub.s32 2, %v1832
      %v1834 = vrot.slane %v1821, %v1833
      %v1835 = vlaneseq
      %v1836 = vshrl.u32 %v1835, 7
      %v1837 = vsub.s32 3, %v1836
      %v1838 = vrot.slane %v1821, %v1837
      %v1875 = vunpack.c.l.b16 %v1789
      %v1876 = vunpack.c.h.b16 %v1789
      %v1877 = vunpack.c.l.b16 %v1790
      %v1878 = vunpack.c.h.b16 %v1790
      %v1879 = vunpack.c.l.b16 %v1791
      %v1880 = vunpack.c.h.b16 %v1791
      %v1881 = vunpack.c.l.b16 %v1792
      %v1882 = vunpack.c.h.b16 %v1792
      %v1883 = vunpack.c.l.b16 %v1793
      %v1884 = vunpack.c.h.b16 %v1793
      %v1885 = vunpack.c.l.b16 %v1794
      %v1886 = vunpack.c.h.b16 %v1794
      %v1887 = vunpack.c.l.b16 %v1795
      %v1888 = vunpack.c.h.b16 %v1795
      %v1889 = vunpack.c.l.b16 %v1796
      %v1890 = vunpack.c.h.b16 %v1796
      %v1891 = vunpack.c.l.b16 %v1797
      %v1892 = vunpack.c.h.b16 %v1797
      %v1893 = vunpack.c.l.b16 %v1798
      %v1894 = vunpack.c.h.b16 %v1798
      %v1895 = vunpack.c.l.b16 %v1799
      %v1896 = vunpack.c.h.b16 %v1799
      %v1897 = vunpack.c.l.b16 %v1800
      %v1898 = vunpack.c.h.b16 %v1800
      %v1899 = vunpack.c.l.b16 %v1801
      %v1900 = vunpack.c.h.b16 %v1801
      %v1901 = vunpack.c.l.b16 %v1802
      %v1902 = vunpack.c.h.b16 %v1802
      %v1903 = vunpack.c.l.b16 %v1803
      %v1904 = vunpack.c.h.b16 %v1803
      %v1905 = vunpack.c.l.b16 %v1804
      %v1906 = vunpack.c.h.b16 %v1804
      %v1907 = vunpack.c.l.b16 %v1805
      %v1908 = vunpack.c.h.b16 %v1805
      %v1909 = vunpack.c.l.b16 %v1806
      %v1910 = vunpack.c.h.b16 %v1806
      %v1911 = vunpack.c.l.b16 %v1807
      %v1912 = vunpack.c.h.b16 %v1807
      %v1913 = vunpack.c.l.b16 %v1808
      %v1914 = vunpack.c.h.b16 %v1808
      %v1915 = vunpack.c.l.b16 %v1809
      %v1916 = vunpack.c.h.b16 %v1809
      %v1917 = vunpack.c.l.b16 %v1810
      %v1918 = vunpack.c.h.b16 %v1810
      %v1919 = vunpack.c.l.b16 %v1811
      %v1920 = vunpack.c.h.b16 %v1811
      %v1921 = vunpack.c.l.b16 %v1812
      %v1922 = vunpack.c.h.b16 %v1812
      %v1923 = vunpack.c.l.b16 %v1813
      %v1924 = vunpack.c.h.b16 %v1813
      %v1925 = vunpack.c.l.b16 %v1814
      %v1926 = vunpack.c.h.b16 %v1814
      %v1927 = vunpack.c.l.b16 %v1815
      %v1928 = vunpack.c.h.b16 %v1815
      %v1929 = vunpack.c.l.b16 %v1816
      %v1930 = vunpack.c.h.b16 %v1816
      %v1931 = vunpack.c.l.b16 %v1817
      %v1932 = vunpack.c.h.b16 %v1817
      %v1933 = vunpack.c.l.b16 %v1818
      %v1934 = vunpack.c.h.b16 %v1818
      %v1935 = vunpack.c.l.b16 %v1819
      %v1936 = vunpack.c.h.b16 %v1819
      %v1937 = vunpack.c.l.b16 %v1820
      %v1938 = vunpack.c.h.b16 %v1820
      %v1939 = vpack.c.b16 %v1879, %v1875
      %v1940 = vpack.c.b16 %v1880, %v1876
      %v1941 = vpack.c.b16 %v1881, %v1877
      %v1942 = vpack.c.b16 %v1882, %v1878
      %v1943 = vpack.c.b16 %v1887, %v1883
      %v1944 = vpack.c.b16 %v1888, %v1884
      %v1945 = vpack.c.b16 %v1889, %v1885
      %v1946 = vpack.c.b16 %v1890, %v1886
      %v1947 = vpack.c.b16 %v1895, %v1891
      %v1948 = vpack.c.b16 %v1896, %v1892
      %v1949 = vpack.c.b16 %v1897, %v1893
      %v1950 = vpack.c.b16 %v1898, %v1894
      %v1951 = vpack.c.b16 %v1903, %v1899
      %v1952 = vpack.c.b16 %v1904, %v1900
      %v1953 = vpack.c.b16 %v1905, %v1901
      %v1954 = vpack.c.b16 %v1906, %v1902
      %v1955 = vpack.c.b16 %v1911, %v1907
      %v1956 = vpack.c.b16 %v1912, %v1908
      %v1957 = vpack.c.b16 %v1913, %v1909
      %v1958 = vpack.c.b16 %v1914, %v1910
      %v1959 = vpack.c.b16 %v1919, %v1915
      %v1960 = vpack.c.b16 %v1920, %v1916
      %v1961 = vpack.c.b16 %v1921, %v1917
      %v1962 = vpack.c.b16 %v1922, %v1918
      %v1963 = vpack.c.b16 %v1927, %v1923
      %v1964 = vpack.c.b16 %v1928, %v1924
      %v1965 = vpack.c.b16 %v1929, %v1925
      %v1966 = vpack.c.b16 %v1930, %v1926
      %v1967 = vpack.c.b16 %v1935, %v1931
      %v1968 = vpack.c.b16 %v1936, %v1932
      %v1969 = vpack.c.b16 %v1937, %v1933
      %v1970 = vpack.c.b16 %v1938, %v1934
      %2003 = vmatprep.subr.bf16.mxu0 %v1940
      %2004 = vmatpush1.bf16.msra.mxu0 %v1939
      %2005 = vmatprep.subr.bf16.mxu0 %v1944
      %2006 = vmatpush1.bf16.msra.mxu0 %v1943
      %2007 = vmatprep.subr.bf16.mxu0 %v1948
      %2008 = vmatpush1.bf16.msra.mxu0 %v1947
      %2009 = vmatprep.subr.bf16.mxu0 %v1952
      %2010 = vmatpush1.bf16.msra.mxu0 %v1951
      %2011 = vmatprep.subr.bf16.mxu0 %v1956
      %2012 = vmatpush1.bf16.msra.mxu0 %v1955
      %2013 = vmatprep.subr.bf16.mxu0 %v1960
      %2014 = vmatpush1.bf16.msra.mxu0 %v1959
      %2015 = vmatprep.subr.bf16.mxu0 %v1964
      %2016 = vmatpush1.bf16.msra.mxu0 %v1963
      %2017 = vmatprep.subr.bf16.mxu0 %v1968
      %2018 = vmatpush1.bf16.msra.mxu0 %v1967
      %2019 = vmatprep.subr.bf16.mxu0 0
      %2020 = vmatpush1.bf16.msra.mxu0 0
      %2021 = vmatprep.subr.bf16.mxu0 0
      %2022 = vmatpush1.bf16.msra.mxu0 0
      %2023 = vmatprep.subr.bf16.mxu0 0
      %2024 = vmatpush1.bf16.msra.mxu0 0
      %2025 = vmatprep.subr.bf16.mxu0 0
      %2026 = vmatpush1.bf16.msra.mxu0 0
      %2027 = vmatprep.subr.bf16.mxu0 0
      %2028 = vmatpush1.bf16.msra.mxu0 0
      %2029 = vmatprep.subr.bf16.mxu0 0
      %2030 = vmatpush1.bf16.msra.mxu0 0
      %2031 = vmatprep.subr.bf16.mxu0 0
      %2032 = vmatpush1.bf16.msra.mxu0 0
      %2033 = vmatprep.subr.bf16.mxu0 0
      %2034 = vmatpush1.bf16.msra.mxu0 0
      %2035 = vmatprep.mubr.bf16.mxu0 0
      %2036 = vmatmul.mubr.bf16.gmra.mrb[0].mxu0 %v1787
      %v2037 = vpop.f32.mrb[0].mxu0
      %v2038 = vadd.f32 %v1826, %v2037
      %v2039 = vpop.f32.mrb[0].mxu0
      %v2040 = vadd.f32 %v1830, %v2039
      %v2041 = vpop.f32.mrb[0].mxu0
      %v2042 = vadd.f32 %v1826, %v2041
      %v2043 = vpop.f32.mrb[0].mxu0
      %v2044 = vadd.f32 %v1830, %v2043
      %2045 = vmatprep.mubr.bf16.mxu0 0
      %2046 = vmatmul.mubr.bf16.gmra.mrb[0].mxu0 %v1788
      %v2047 = vpop.f32.mrb[0].mxu0
      %v2048 = vadd.f32 %v1826, %v2047
      %v2049 = vpop.f32.mrb[0].mxu0
      %v2050 = vadd.f32 %v1830, %v2049
      %v2051 = vpop.f32.mrb[0].mxu0
      %v2052 = vadd.f32 %v1826, %v2051
      %v2053 = vpop.f32.mrb[0].mxu0
      %v2054 = vadd.f32 %v1830, %v2053
      %2055 = vdwg.mxu0
      %2056 = vmatprep.subr.bf16.mxu0 %v1942
      %2057 = vmatpush1.bf16.msra.mxu0 %v1941
      %2058 = vmatprep.subr.bf16.mxu0 %v1946
      %2059 = vmatpush1.bf16.msra.mxu0 %v1945
      %2060 = vmatprep.subr.bf16.mxu0 %v1950
      %2061 = vmatpush1.bf16.msra.mxu0 %v1949
      %2062 = vmatprep.subr.bf16.mxu0 %v1954
      %2063 = vmatpush1.bf16.msra.mxu0 %v1953
      %2064 = vmatprep.subr.bf16.mxu0 %v1958
      %2065 = vmatpush1.bf16.msra.mxu0 %v1957
      %2066 = vmatprep.subr.bf16.mxu0 %v1962
      %2067 = vmatpush1.bf16.msra.mxu0 %v1961
      %2068 = vmatprep.subr.bf16.mxu0 %v1966
      %2069 = vmatpush1.bf16.msra.mxu0 %v1965
      %2070 = vmatprep.subr.bf16.mxu0 %v1970
      %2071 = vmatpush1.bf16.msra.mxu0 %v1969
      %2072 = vmatprep.subr.bf16.mxu0 0
      %2073 = vmatpush1.bf16.msra.mxu0 0
      %2074 = vmatprep.subr.bf16.mxu0 0
      %2075 = vmatpush1.bf16.msra.mxu0 0
      %2076 = vmatprep.subr.bf16.mxu0 0
      %2077 = vmatpush1.bf16.msra.mxu0 0
      %2078 = vmatprep.subr.bf16.mxu0 0
      %2079 = vmatpush1.bf16.msra.mxu0 0
      %2080 = vmatprep.subr.bf16.mxu0 0
      %2081 = vmatpush1.bf16.msra.mxu0 0
      %2082 = vmatprep.subr.bf16.mxu0 0
      %2083 = vmatpush1.bf16.msra.mxu0 0
      %2084 = vmatprep.subr.bf16.mxu0 0
      %2085 = vmatpush1.bf16.msra.mxu0 0
      %2086 = vmatprep.subr.bf16.mxu0 0
      %2087 = vmatpush1.bf16.msra.mxu0 0
      %2088 = vmatprep.mubr.bf16.mxu0 0
      %2089 = vmatmul.mubr.bf16.gmra.mrb[0].mxu0 %v1787
      %v2090 = vpop.f32.mrb[0].mxu0
      %v2091 = vadd.f32 %v1834, %v2090
      %v2092 = vpop.f32.mrb[0].mxu0
      %v2093 = vadd.f32 %v1838, %v2092
      %v2094 = vpop.f32.mrb[0].mxu0
      %v2095 = vadd.f32 %v1834, %v2094
      %v2096 = vpop.f32.mrb[0].mxu0
      %v2097 = vadd.f32 %v1838, %v2096
      %2098 = vmatprep.mubr.bf16.mxu0 0
      %2099 = vmatmul.mubr.bf16.gmra.mrb[0].mxu0 %v1788
      %v2100 = vpop.f32.mrb[0].mxu0
      %v2101 = vadd.f32 %v1834, %v2100
      %v2102 = vpop.f32.mrb[0].mxu0
      %v2103 = vadd.f32 %v1838, %v2102
      %v2104 = vpop.f32.mrb[0].mxu0
      %v2105 = vadd.f32 %v1834, %v2104
      %v2106 = vpop.f32.mrb[0].mxu0
      %v2107 = vadd.f32 %v1838, %v2106
      %2108 = vdwg.mxu0
      %v2109 = vmul.f32 %v2038, 1.702
      %v2110 = vmul.f32 %v2040, 1.702
      %v2111 = vmul.f32 %v2091, 1.702
      %v2112 = vmul.f32 %v2093, 1.702
      %v2113 = vmul.f32 %v2042, 1.702
      %v2114 = vmul.f32 %v2044, 1.702
      %v2115 = vmul.f32 %v2095, 1.702
      %v2116 = vmul.f32 %v2097, 1.702
      %v2117 = vmul.f32 %v2048, 1.702
      %v2118 = vmul.f32 %v2050, 1.702
      %v2119 = vmul.f32 %v2101, 1.702
      %v2120 = vmul.f32 %v2103, 1.702
      %v2121 = vmul.f32 %v2052, 1.702
      %v2122 = vmul.f32 %v2054, 1.702
      %v2123 = vmul.f32 %v2105, 1.702
      %v2124 = vmul.f32 %v2107, 1.702
      %v2125 = vxor.u32 %v2109, 2147483648
      %v2126 = vxor.u32 %v2110, 2147483648
      %v2127 = vxor.u32 %v2111, 2147483648
      %v2128 = vxor.u32 %v2112, 2147483648
      %v2129 = vxor.u32 %v2113, 2147483648
      %v2130 = vxor.u32 %v2114, 2147483648
      %v2131 = vxor.u32 %v2115, 2147483648
      %v2132 = vxor.u32 %v2116, 2147483648
      %v2133 = vxor.u32 %v2117, 2147483648
      %v2134 = vxor.u32 %v2118, 2147483648
      %v2135 = vxor.u32 %v2119, 2147483648
      %v2136 = vxor.u32 %v2120, 2147483648
      %v2137 = vxor.u32 %v2121, 2147483648
      %v2138 = vxor.u32 %v2122, 2147483648
      %v2139 = vxor.u32 %v2123, 2147483648
      %v2140 = vxor.u32 %v2124, 2147483648
      %v2141 = vmul.f32 %v2125, 1.442695
      %v2142 = vpow.pop %v2141
      %v2143 = vmul.f32 %v2126, 1.442695
      %v2144 = vpow.pop %v2143
      %v2145 = vmul.f32 %v2127, 1.442695
      %v2146 = vpow.pop %v2145
      %v2147 = vmul.f32 %v2128, 1.442695
      %v2148 = vpow.pop %v2147
      %v2149 = vmul.f32 %v2129, 1.442695
      %v2150 = vpow.pop %v2149
      %v2151 = vmul.f32 %v2130, 1.442695
      %v2152 = vpow.pop %v2151
      %v2153 = vmul.f32 %v2131, 1.442695
      %v2154 = vpow.pop %v2153
      %v2155 = vmul.f32 %v2132, 1.442695
      %v2156 = vpow.pop %v2155
      %v2157 = vmul.f32 %v2133, 1.442695
      %v2158 = vpow.pop %v2157
      %v2159 = vmul.f32 %v2134, 1.442695
      %v2160 = vpow.pop %v2159
      %v2161 = vmul.f32 %v2135, 1.442695
      %v2162 = vpow.pop %v2161
      %v2163 = vmul.f32 %v2136, 1.442695
      %v2164 = vpow.pop %v2163
      %v2165 = vmul.f32 %v2137, 1.442695
      %v2166 = vpow.pop %v2165
      %v2167 = vmul.f32 %v2138, 1.442695
      %v2168 = vpow.pop %v2167
      %v2169 = vmul.f32 %v2139, 1.442695
      %v2170 = vpow.pop %v2169
      %v2171 = vmul.f32 %v2140, 1.442695
      %v2172 = vpow.pop %v2171
      %v2173 = vadd.f32 %v2142, 1.0
      %v2174 = vadd.f32 %v2144, 1.0
      %v2175 = vadd.f32 %v2146, 1.0
      %v2176 = vadd.f32 %v2148, 1.0
      %v2177 = vadd.f32 %v2150, 1.0
      %v2178 = vadd.f32 %v2152, 1.0
      %v2179 = vadd.f32 %v2154, 1.0
      %v2180 = vadd.f32 %v2156, 1.0
      %v2181 = vadd.f32 %v2158, 1.0
      %v2182 = vadd.f32 %v2160, 1.0
      %v2183 = vadd.f32 %v2162, 1.0
      %v2184 = vadd.f32 %v2164, 1.0
      %v2185 = vadd.f32 %v2166, 1.0
      %v2186 = vadd.f32 %v2168, 1.0
      %v2187 = vadd.f32 %v2170, 1.0
      %v2188 = vadd.f32 %v2172, 1.0
      %v2189 = vrcp.pop %v2173
      %v2190 = vmul.f32 1.0, %v2189
      %v2191 = vrcp.pop %v2174
      %v2192 = vmul.f32 1.0, %v2191
      %v2193 = vrcp.pop %v2175
      %v2194 = vmul.f32 1.0, %v2193
      %v2195 = vrcp.pop %v2176
      %v2196 = vmul.f32 1.0, %v2195
      %v2197 = vrcp.pop %v2177
      %v2198 = vmul.f32 1.0, %v2197
      %v2199 = vrcp.pop %v2178
      %v2200 = vmul.f32 1.0, %v2199
      %v2201 = vrcp.pop %v2179
      %v2202 = vmul.f32 1.0, %v2201
      %v2203 = vrcp.pop %v2180
      %v2204 = vmul.f32 1.0, %v2203
      %v2205 = vrcp.pop %v2181
      %v2206 = vmul.f32 1.0, %v2205
      %v2207 = vrcp.pop %v2182
      %v2208 = vmul.f32 1.0, %v2207
      %v2209 = vrcp.pop %v2183
      %v2210 = vmul.f32 1.0, %v2209
      %v2211 = vrcp.pop %v2184
      %v2212 = vmul.f32 1.0, %v2211
      %v2213 = vrcp.pop %v2185
      %v2214 = vmul.f32 1.0, %v2213
      %v2215 = vrcp.pop %v2186
      %v2216 = vmul.f32 1.0, %v2215
      %v2217 = vrcp.pop %v2187
      %v2218 = vmul.f32 1.0, %v2217
      %v2219 = vrcp.pop %v2188
      %v2220 = vmul.f32 1.0, %v2219
      %v2221 = vmul.f32 %v2038, %v2190
      %v2222 = vmul.f32 %v2040, %v2192
      %v2223 = vmul.f32 %v2091, %v2194
      %v2224 = vmul.f32 %v2093, %v2196
      %v2225 = vmul.f32 %v2042, %v2198
      %v2226 = vmul.f32 %v2044, %v2200
      %v2227 = vmul.f32 %v2095, %v2202
      %v2228 = vmul.f32 %v2097, %v2204
      %v2229 = vmul.f32 %v2048, %v2206
      %v2230 = vmul.f32 %v2050, %v2208
      %v2231 = vmul.f32 %v2101, %v2210
      %v2232 = vmul.f32 %v2103, %v2212
      %v2233 = vmul.f32 %v2052, %v2214
      %v2234 = vmul.f32 %v2054, %v2216
      %v2235 = vmul.f32 %v2105, %v2218
      %v2236 = vmul.f32 %v2107, %v2220
      %v2237 = vpack.c.bf16 %v2225, %v2221
      %v2238 = vpack.c.bf16 %v2226, %v2222
      %v2239 = vpack.c.bf16 %v2227, %v2223
      %v2240 = vpack.c.bf16 %v2228, %v2224
      %v2241 = vpack.c.bf16 %v2233, %v2229
      %v2242 = vpack.c.bf16 %v2234, %v2230
      %v2243 = vpack.c.bf16 %v2235, %v2231
      %v2244 = vpack.c.bf16 %v2236, %v2232
      %v2245 = vld [vmem:[%s11] sm:$0xf]
      %v2246 = vld [vmem:[%s11 + $0x4] sm:$0xf]
      %v2247 = vld [vmem:[%s11 + $0x8] sm:$0xf]
      %v2248 = vld [vmem:[%s11 + $0xc] sm:$0xf]
      %v2249 = vld [vmem:[%s11 + $0x10] sm:$0xf]
      %v2250 = vld [vmem:[%s11 + $0x14] sm:$0xf]
      %v2251 = vld [vmem:[%s11 + $0x18] sm:$0xf]
      %v2252 = vld [vmem:[%s11 + $0x1c] sm:$0xf]
      %v2253 = vld [vmem:[%s11 + $0x20] sm:$0xf]
      %v2254 = vld [vmem:[%s11 + $0x24] sm:$0xf]
      %v2255 = vld [vmem:[%s11 + $0x28] sm:$0xf]
      %v2256 = vld [vmem:[%s11 + $0x2c] sm:$0xf]
      %v2257 = vld [vmem:[%s11 + $0x30] sm:$0xf]
      %v2258 = vld [vmem:[%s11 + $0x34] sm:$0xf]
      %v2259 = vld [vmem:[%s11 + $0x38] sm:$0xf]
      %v2260 = vld [vmem:[%s11 + $0x3c] sm:$0xf]
      %v2261 = vld [vmem:[%s11 + $0x40] sm:$0xf]
      %v2262 = vld [vmem:[%s11 + $0x44] sm:$0xf]
      %v2263 = vld [vmem:[%s11 + $0x48] sm:$0xf]
      %v2264 = vld [vmem:[%s11 + $0x4c] sm:$0xf]
      %v2265 = vld [vmem:[%s11 + $0x50] sm:$0xf]
      %v2266 = vld [vmem:[%s11 + $0x54] sm:$0xf]
      %v2267 = vld [vmem:[%s11 + $0x58] sm:$0xf]
      %v2268 = vld [vmem:[%s11 + $0x5c] sm:$0xf]
      %v2269 = vld [vmem:[%s11 + $0x60] sm:$0xf]
      %v2270 = vld [vmem:[%s11 + $0x64] sm:$0xf]
      %v2271 = vld [vmem:[%s11 + $0x68] sm:$0xf]
      %v2272 = vld [vmem:[%s11 + $0x6c] sm:$0xf]
      %v2273 = vld [vmem:[%s11 + $0x70] sm:$0xf]
      %v2274 = vld [vmem:[%s11 + $0x74] sm:$0xf]
      %v2275 = vld [vmem:[%s11 + $0x78] sm:$0xf]
      %v2276 = vld [vmem:[%s11 + $0x7c] sm:$0xf]
      %v2277 = vld [vmem:[%s11 + $0x80] sm:$0xf]
      %v2278 = vld [vmem:[%s11 + $0x84] sm:$0xf]
      %v2279 = vld [vmem:[%s11 + $0x88] sm:$0xf]
      %v2280 = vld [vmem:[%s11 + $0x8c] sm:$0xf]
      %v2281 = vld [vmem:[%s11 + $0x90] sm:$0xf]
      %v2282 = vld [vmem:[%s11 + $0x94] sm:$0xf]
      %v2283 = vld [vmem:[%s11 + $0x98] sm:$0xf]
      %v2284 = vld [vmem:[%s11 + $0x9c] sm:$0xf]
      %v2285 = vld [vmem:[%s11 + $0xa0] sm:$0xf]
      %v2286 = vld [vmem:[%s11 + $0xa4] sm:$0xf]
      %v2287 = vld [vmem:[%s11 + $0xa8] sm:$0xf]
      %v2288 = vld [vmem:[%s11 + $0xac] sm:$0xf]
      %v2289 = vld [vmem:[%s11 + $0xb0] sm:$0xf]
      %v2290 = vld [vmem:[%s11 + $0xb4] sm:$0xf]
      %v2291 = vld [vmem:[%s11 + $0xb8] sm:$0xf]
      %v2292 = vld [vmem:[%s11 + $0xbc] sm:$0xf]
      %v2293 = vld [vmem:[%s11 + $0xc0] sm:$0xf]
      %v2294 = vld [vmem:[%s11 + $0xc4] sm:$0xf]
      %v2295 = vld [vmem:[%s11 + $0xc8] sm:$0xf]
      %v2296 = vld [vmem:[%s11 + $0xcc] sm:$0xf]
      %v2297 = vld [vmem:[%s11 + $0xd0] sm:$0xf]
      %v2298 = vld [vmem:[%s11 + $0xd4] sm:$0xf]
      %v2299 = vld [vmem:[%s11 + $0xd8] sm:$0xf]
      %v2300 = vld [vmem:[%s11 + $0xdc] sm:$0xf]
      %v2301 = vld [vmem:[%s11 + $0xe0] sm:$0xf]
      %v2302 = vld [vmem:[%s11 + $0xe4] sm:$0xf]
      %v2303 = vld [vmem:[%s11 + $0xe8] sm:$0xf]
      %v2304 = vld [vmem:[%s11 + $0xec] sm:$0xf]
      %v2305 = vld [vmem:[%s11 + $0xf0] sm:$0xf]
      %v2306 = vld [vmem:[%s11 + $0xf4] sm:$0xf]
      %v2307 = vld [vmem:[%s11 + $0xf8] sm:$0xf]
      %v2308 = vld [vmem:[%s11 + $0xfc] sm:$0xf]
      %v2309 = vld [vmem:[%s12] sm:$0x1]
      %v2311 = vlaneseq
      %v2312 = vshrl.u32 %v2311, 7
      %v2313 = vsub.s32 0, %v2312
      %v2314 = vrot.slane %v2309, %v2313
      %v2380 = vunpack.c.l.b16 %v2245
      %v2381 = vunpack.c.l.b16 %v2246
      %v2382 = vunpack.c.l.b16 %v2247
      %v2383 = vunpack.c.l.b16 %v2248
      %v2384 = vunpack.c.l.b16 %v2249
      %v2385 = vunpack.c.l.b16 %v2250
      %v2386 = vunpack.c.l.b16 %v2251
      %v2387 = vunpack.c.l.b16 %v2252
      %v2388 = vunpack.c.l.b16 %v2253
      %v2389 = vunpack.c.l.b16 %v2254
      %v2390 = vunpack.c.l.b16 %v2255
      %v2391 = vunpack.c.l.b16 %v2256
      %v2392 = vunpack.c.l.b16 %v2257
      %v2393 = vunpack.c.l.b16 %v2258
      %v2394 = vunpack.c.l.b16 %v2259
      %v2395 = vunpack.c.l.b16 %v2260
      %v2396 = vunpack.c.l.b16 %v2261
      %v2397 = vunpack.c.l.b16 %v2262
      %v2398 = vunpack.c.l.b16 %v2263
      %v2399 = vunpack.c.l.b16 %v2264
      %v2400 = vunpack.c.l.b16 %v2265
      %v2401 = vunpack.c.l.b16 %v2266
      %v2402 = vunpack.c.l.b16 %v2267
      %v2403 = vunpack.c.l.b16 %v2268
      %v2404 = vunpack.c.l.b16 %v2269
      %v2405 = vunpack.c.l.b16 %v2270
      %v2406 = vunpack.c.l.b16 %v2271
      %v2407 = vunpack.c.l.b16 %v2272
      %v2408 = vunpack.c.l.b16 %v2273
      %v2409 = vunpack.c.l.b16 %v2274
      %v2410 = vunpack.c.l.b16 %v2275
      %v2411 = vunpack.c.l.b16 %v2276
      %v2412 = vunpack.c.l.b16 %v2277
      %v2413 = vunpack.c.l.b16 %v2278
      %v2414 = vunpack.c.l.b16 %v2279
      %v2415 = vunpack.c.l.b16 %v2280
      %v2416 = vunpack.c.l.b16 %v2281
      %v2417 = vunpack.c.l.b16 %v2282
      %v2418 = vunpack.c.l.b16 %v2283
      %v2419 = vunpack.c.l.b16 %v2284
      %v2420 = vunpack.c.l.b16 %v2285
      %v2421 = vunpack.c.l.b16 %v2286
      %v2422 = vunpack.c.l.b16 %v2287
      %v2423 = vunpack.c.l.b16 %v2288
      %v2424 = vunpack.c.l.b16 %v2289
      %v2425 = vunpack.c.l.b16 %v2290
      %v2426 = vunpack.c.l.b16 %v2291
      %v2427 = vunpack.c.l.b16 %v2292
      %v2428 = vunpack.c.l.b16 %v2293
      %v2429 = vunpack.c.l.b16 %v2294
      %v2430 = vunpack.c.l.b16 %v2295
      %v2431 = vunpack.c.l.b16 %v2296
      %v2432 = vunpack.c.l.b16 %v2297
      %v2433 = vunpack.c.l.b16 %v2298
      %v2434 = vunpack.c.l.b16 %v2299
      %v2435 = vunpack.c.l.b16 %v2300
      %v2436 = vunpack.c.l.b16 %v2301
      %v2437 = vunpack.c.l.b16 %v2302
      %v2438 = vunpack.c.l.b16 %v2303
      %v2439 = vunpack.c.l.b16 %v2304
      %v2440 = vunpack.c.l.b16 %v2305
      %v2441 = vunpack.c.l.b16 %v2306
      %v2442 = vunpack.c.l.b16 %v2307
      %v2443 = vunpack.c.l.b16 %v2308
      %v2444 = vpack.c.b16 %v2381, %v2380
      %v2445 = vpack.c.b16 %v2383, %v2382
      %v2446 = vpack.c.b16 %v2385, %v2384
      %v2447 = vpack.c.b16 %v2387, %v2386
      %v2448 = vpack.c.b16 %v2389, %v2388
      %v2449 = vpack.c.b16 %v2391, %v2390
      %v2450 = vpack.c.b16 %v2393, %v2392
      %v2451 = vpack.c.b16 %v2395, %v2394
      %v2452 = vpack.c.b16 %v2397, %v2396
      %v2453 = vpack.c.b16 %v2399, %v2398
      %v2454 = vpack.c.b16 %v2401, %v2400
      %v2455 = vpack.c.b16 %v2403, %v2402
      %v2456 = vpack.c.b16 %v2405, %v2404
      %v2457 = vpack.c.b16 %v2407, %v2406
      %v2458 = vpack.c.b16 %v2409, %v2408
      %v2459 = vpack.c.b16 %v2411, %v2410
      %v2460 = vpack.c.b16 %v2413, %v2412
      %v2461 = vpack.c.b16 %v2415, %v2414
      %v2462 = vpack.c.b16 %v2417, %v2416
      %v2463 = vpack.c.b16 %v2419, %v2418
      %v2464 = vpack.c.b16 %v2421, %v2420
      %v2465 = vpack.c.b16 %v2423, %v2422
      %v2466 = vpack.c.b16 %v2425, %v2424
      %v2467 = vpack.c.b16 %v2427, %v2426
      %v2468 = vpack.c.b16 %v2429, %v2428
      %v2469 = vpack.c.b16 %v2431, %v2430
      %v2470 = vpack.c.b16 %v2433, %v2432
      %v2471 = vpack.c.b16 %v2435, %v2434
      %v2472 = vpack.c.b16 %v2437, %v2436
      %v2473 = vpack.c.b16 %v2439, %v2438
      %v2474 = vpack.c.b16 %v2441, %v2440
      %v2475 = vpack.c.b16 %v2443, %v2442
      %2508 = vmatprep.subr.bf16.mxu0 0
      %2509 = vmatpush1.bf16.msra.mxu0 %v2444
      %2510 = vmatprep.subr.bf16.mxu0 0
      %2511 = vmatpush1.bf16.msra.mxu0 %v2445
      %2512 = vmatprep.subr.bf16.mxu0 0
      %2513 = vmatpush1.bf16.msra.mxu0 %v2446
      %2514 = vmatprep.subr.bf16.mxu0 0
      %2515 = vmatpush1.bf16.msra.mxu0 %v2447
      %2516 = vmatprep.subr.bf16.mxu0 0
      %2517 = vmatpush1.bf16.msra.mxu0 %v2448
      %2518 = vmatprep.subr.bf16.mxu0 0
      %2519 = vmatpush1.bf16.msra.mxu0 %v2449
      %2520 = vmatprep.subr.bf16.mxu0 0
      %2521 = vmatpush1.bf16.msra.mxu0 %v2450
      %2522 = vmatprep.subr.bf16.mxu0 0
      %2523 = vmatpush1.bf16.msra.mxu0 %v2451
      %2524 = vmatprep.subr.bf16.mxu0 0
      %2525 = vmatpush1.bf16.msra.mxu0 %v2452
      %2526 = vmatprep.subr.bf16.mxu0 0
      %2527 = vmatpush1.bf16.msra.mxu0 %v2453
      %2528 = vmatprep.subr.bf16.mxu0 0
      %2529 = vmatpush1.bf16.msra.mxu0 %v2454
      %2530 = vmatprep.subr.bf16.mxu0 0
      %2531 = vmatpush1.bf16.msra.mxu0 %v2455
      %2532 = vmatprep.subr.bf16.mxu0 0
      %2533 = vmatpush1.bf16.msra.mxu0 %v2456
      %2534 = vmatprep.subr.bf16.mxu0 0
      %2535 = vmatpush1.bf16.msra.mxu0 %v2457
      %2536 = vmatprep.subr.bf16.mxu0 0
      %2537 = vmatpush1.bf16.msra.mxu0 %v2458
      %2538 = vmatprep.subr.bf16.mxu0 0
      %2539 = vmatpush1.bf16.msra.mxu0 %v2459
      %2540 = vmatprep.mubr.bf16.mxu0 %v2238
      %2541 = vmatmul.mubr.bf16.gmra.mrb[0].mxu0 %v2237
      %v2542 = vpop.f32.mrb[0].mxu0
      %v2543 = vadd.f32 %v2314, %v2542
      %v2544 = vpop.f32.mrb[0].mxu0
      %v2545 = vpop.f32.mrb[0].mxu0
      %v2546 = vadd.f32 %v2314, %v2545
      %v2547 = vpop.f32.mrb[0].mxu0
      %2548 = vmatprep.mubr.bf16.mxu0 %v2242
      %2549 = vmatmul.mubr.bf16.gmra.mrb[0].mxu0 %v2241
      %v2550 = vpop.f32.mrb[0].mxu0
      %v2551 = vadd.f32 %v2314, %v2550
      %v2552 = vpop.f32.mrb[0].mxu0
      %v2553 = vpop.f32.mrb[0].mxu0
      %v2554 = vadd.f32 %v2314, %v2553
      %v2555 = vpop.f32.mrb[0].mxu0
      %2556 = vdwg.mxu0
      %2557 = vmatprep.subr.bf16.mxu0 0
      %2558 = vmatpush1.bf16.msra.mxu0 %v2460
      %2559 = vmatprep.subr.bf16.mxu0 0
      %2560 = vmatpush1.bf16.msra.mxu0 %v2461
      %2561 = vmatprep.subr.bf16.mxu0 0
      %2562 = vmatpush1.bf16.msra.mxu0 %v2462
      %2563 = vmatprep.subr.bf16.mxu0 0
      %2564 = vmatpush1.bf16.msra.mxu0 %v2463
      %2565 = vmatprep.subr.bf16.mxu0 0
      %2566 = vmatpush1.bf16.msra.mxu0 %v2464
      %2567 = vmatprep.subr.bf16.mxu0 0
      %2568 = vmatpush1.bf16.msra.mxu0 %v2465
      %2569 = vmatprep.subr.bf16.mxu0 0
      %2570 = vmatpush1.bf16.msra.mxu0 %v2466
      %2571 = vmatprep.subr.bf16.mxu0 0
      %2572 = vmatpush1.bf16.msra.mxu0 %v2467
      %2573 = vmatprep.subr.bf16.mxu0 0
      %2574 = vmatpush1.bf16.msra.mxu0 %v2468
      %2575 = vmatprep.subr.bf16.mxu0 0
      %2576 = vmatpush1.bf16.msra.mxu0 %v2469
      %2577 = vmatprep.subr.bf16.mxu0 0
      %2578 = vmatpush1.bf16.msra.mxu0 %v2470
      %2579 = vmatprep.subr.bf16.mxu0 0
      %2580 = vmatpush1.bf16.msra.mxu0 %v2471
      %2581 = vmatprep.subr.bf16.mxu0 0
      %2582 = vmatpush1.bf16.msra.mxu0 %v2472
      %2583 = vmatprep.subr.bf16.mxu0 0
      %2584 = vmatpush1.bf16.msra.mxu0 %v2473
      %2585 = vmatprep.subr.bf16.mxu0 0
      %2586 = vmatpush1.bf16.msra.mxu0 %v2474
      %2587 = vmatprep.subr.bf16.mxu0 0
      %2588 = vmatpush1.bf16.msra.mxu0 %v2475
      %2589 = vmatprep.mubr.bf16.mxu0 %v2240
      %2590 = vmatmul.mubr.bf16.gmra.mrb[0].mxu0 %v2239
      %v2591 = vpop.f32.mrb[0].mxu0
      %v2592 = vadd.f32 %v2543, %v2591
      %v2593 = vpop.f32.mrb[0].mxu0
      %v2594 = vpop.f32.mrb[0].mxu0
      %v2595 = vadd.f32 %v2546, %v2594
      %v2596 = vpop.f32.mrb[0].mxu0
      %2597 = vmatprep.mubr.bf16.mxu0 %v2244
      %2598 = vmatmul.mubr.bf16.gmra.mrb[0].mxu0 %v2243
      %v2599 = vpop.f32.mrb[0].mxu0
      %v2600 = vadd.f32 %v2551, %v2599
      %v2601 = vpop.f32.mrb[0].mxu0
      %v2602 = vpop.f32.mrb[0].mxu0
      %v2603 = vadd.f32 %v2554, %v2602
      %v2604 = vpop.f32.mrb[0].mxu0
      %2605 = vdwg.mxu0
      %v2606 = vadd.f32 %v1717, %v2592
      %v2607 = vadd.f32 %v1718, %v2595
      %v2608 = vadd.f32 %v1719, %v2600
      %v2609 = vadd.f32 %v1720, %v2603
      %2610 = vst [vmem:[%s440] sm:$0xff] %v2606
      %2611 = vst [vmem:[%s440 + $0x8] sm:$0xff] %v2607
      %2612 = vst [vmem:[%s440 + $0x10] sm:$0xff] %v2608
      %2613 = vst [vmem:[%s440 + $0x18] sm:$0xff] %v2609
      %p2614 = scmp.lt.s32.totalorder %s24, 1
      %s2615 = scalar_select %p2614, %s24, 1
      %s2616 = smul.addr %s2615, 4
      %s2617 = smul.addr %s2616, 8
      %s2618 = scalar_lea.vmem %s13, %s2617
      // Predicated region
      $region73: #{clip_visual_forward.5} parent=71 // pred_check
        %p2619 = pneg %p320
      $region74: #{clip_visual_forward.5} parent=71 // pred_check_branch
        %2621 = sbr.rel (%p2619) target = $region76
      $region75: #{clip_visual_forward.5} parent=71 // pred_region
        _
      $region76: #{clip_visual_forward.5} parent=71 // pred_fallthru
        _
    $region72: #{clip_visual_forward.5} parent=5 // pred_fallthru
      _
    %p2622 = scmp.le.s32.totalorder 2, %s19
    // Predicated region
    $region77: #{clip_visual_forward.5} parent=5 // pred_check
      %p2623 = pneg %p2622
    $region78: #{clip_visual_forward.5} parent=5 // pred_check_branch
      %2625 = sbr.rel (%p2623) target = $region80
    $region79: #{clip_visual_forward.5} parent=5 // pred_region
      %s2626 = ssub.s32 %s19, 2
      // Predicated region
      $region81: #{clip_visual_forward.5} parent=79 // pred_check
        %p2627 = pneg %p326
      $region82: #{clip_visual_forward.5} parent=79 // pred_check_branch
        %2629 = sbr.rel (%p2627) target = $region84
      $region83: #{clip_visual_forward.5} parent=79 // pred_region
        %p2630 = scmp.lt.s32.totalorder %s25, 1
        %s2631 = scalar_select %p2630, %s25, 1
        %s2632 = smul.addr %s2631, 4
        %s2633 = smul.addr %s2632, 8
        %s2634 = scalar_lea.vmem %s13, %s2633
      $region84: #{clip_visual_forward.5} parent=79 // pred_fallthru
        _
    $region80: #{clip_visual_forward.5} parent=5 // pred_fallthru
      _
  $region6: #{clip_visual_forward.5} parent=0 // loop_footer
    %s23 = sadd.s32 1, %s19
  $region7: #{clip_visual_forward.5} parent=0 // loop_footer_branch
    %18 = sbr.rel target = $region3
  $region8: #{clip_visual_forward.5} parent=0 // loop_exit
    _

</llo_original>
